<compile_context>
chip_gen: v5e
topology: v5e:2x2
jax: 0.10.0
libtpu: 0.0.40
codegen_flags: <defaults>
</compile_context>

<pallas_src>
import functools

import jax
import jax.numpy as jnp
from jax import lax
from jax.experimental import pallas as pl
from jax.experimental.pallas import tpu as pltpu

NOISE_DIM = 3
LEAKY_SLOPE = 0.01            # F.leaky_relu default
C2_PAD = 8                    # NOISE_DIM padded to a full sublane group
MATMUL_DTYPE = jnp.bfloat16   # MXU-native operand dtype (f32 accumulation kept)
LANE_CAP = 2048               # per-grid-step output-lane budget (bounds vregs/VMEM)


def _round_up(x, m):
    return (x + m - 1) // m * m


def _inverter_kernel(xpad_ref, w1_ref, b1_ref, w2_ref, b2_ref, o_ref,
                     h1f_ref, h1b_ref, *, wp):
    """Fused conv1(SAME) + leaky_relu + conv2(VALID) + sigmoid for one batch block.

    Layout: channels on sublanes, (batch-fold x padded HxW spatial) on lanes.

      xpad_ref : (1, Cin_pad, L + 2*PAD)  bf16  zero-padded input images
      w1_ref   : (9, C1, Cin_pad)         bf16  conv1 weights, one (O,I) matrix per tap
      b1_ref   : (C1, 1)                  f32
      w2_ref   : (9, C2_PAD, C1)          bf16  conv2 weights per tap (C2 padded -> 8)
      b2_ref   : (C2_PAD, 1)              f32
      o_ref    : (1, C2_PAD, L)           f32   sigmoid(conv2) on the padded grid
      h1f_ref  : (C1, L + PAD)            f32   scratch: conv1 accumulator
      h1b_ref  : (C1, L + PAD)            bf16  scratch: leaky_relu(h1) matmul operand
    """
    c1, lp1 = h1f_ref.shape
    L = o_ref.shape[2]

    x = xpad_ref[0]                                         # (Cin_pad, L + 2*PAD)

    # ---- conv1: 9 lane-shifted accumulating MXU matmuls (im2col-free) -----------
    h1f_ref[...] = jnp.broadcast_to(b1_ref[...], (c1, lp1))  # bias-init accumulator
    for t in range(9):
        off = (t // 3) * wp + (t % 3)                        # spatial shift of tap t
        h1f_ref[...] += jnp.dot(w1_ref[t], x[:, off:off + lp1],
                                preferred_element_type=jnp.float32)
    h1 = h1f_ref[...]
    h1b_ref[...] = jnp.where(h1 > 0, h1, LEAKY_SLOPE * h1).astype(h1b_ref.dtype)

    # ---- conv2: 9 lane-shifted accumulating MXU matmuls --------------------------
    acc = jnp.broadcast_to(b2_ref[...], (C2_PAD, L))         # f32, bias-initialized
    for t in range(9):
        off = (t // 3) * wp + (t % 3)
        acc = acc + jnp.dot(w2_ref[t], h1b_ref[:, off:off + L],
                            preferred_element_type=jnp.float32)

    o_ref[0] = jax.nn.sigmoid(acc).astype(o_ref.dtype)


def _batch_blocking(batch, hpwp):
    """Fold as many images per grid step as the lane budget allows.

    Grid steps are a serial loop on single-TensorCore parts (v5e/v6e), so small
    batches go into ONE step; only batches that overflow LANE_CAP get split, and
    those steps are marked "parallel" so v7x's two TCs can share them.
    Odd / non-dividing batches are handled by ceil-div + zero-image padding."""
    b_blk = max(1, min(batch, LANE_CAP // hpwp))
    n_steps = -(-batch // b_blk)
    return n_steps, b_blk


def inverter_forward(x, w1, b1, w2, b2):
    """x : (B, frames, channels, H, W) float32 (PyTorch-style stacked input)
    w1 : (32, frames*channels, 3, 3) OIHW, b1: (32,)
    w2 : (NOISE_DIM, 32, 3, 3) OIHW (already spectral-normalized), b2: (NOISE_DIM,)
    returns (B, NOISE_DIM, H-2, W-2) float32 (NCHW, matching PyTorch)."""
    B, Fr, C, H, W = x.shape
    Cin = Fr * C
    C1 = w1.shape[0]
    C2 = w2.shape[0]
    Ho, Wo = H - 2, W - 2
    Hp, Wp = H + 2, W + 2
    hpwp = Hp * Wp

    Cin_pad = _round_up(Cin, 8)
    PAD = _round_up(2 * Wp + 2, 128)          # shifted-read halo, lane-aligned, W-dependent

    n_steps, b_blk = _batch_blocking(B, hpwp)
    Bp = n_steps * b_blk

    L = _round_up(b_blk * hpwp, 128)          # lane-dense output width per step
    Lp1 = L + PAD                             # conv1/h1 lanes (one halo)
    Lx = L + 2 * PAD                          # input lanes (two halos)

    # ---- input packing: channels-on-sublanes, (batch-fold x padded HxW) on lanes --
    x = x.reshape(B, Cin, H, W)
    if Bp != B:
        x = jnp.pad(x, ((0, Bp - B), (0, 0), (0, 0), (0, 0)))
    xpad = jnp.pad(x, ((0, 0), (0, Cin_pad - Cin), (1, 1), (1, 1)))   # (Bp,Cin_pad,Hp,Wp)
    xpad = xpad.reshape(n_steps, b_blk, Cin_pad, hpwp).transpose(0, 2, 1, 3)
    xpad = xpad.reshape(n_steps, Cin_pad, b_blk * hpwp)
    xpad = jnp.pad(xpad, ((0, 0), (0, 0), (0, Lx - b_blk * hpwp)))
    xpad = xpad.astype(MATMUL_DTYPE)

    # ---- weight / bias packing (per-tap matrices, padded channels, MXU dtype) -----
    w1_t = jnp.transpose(w1, (2, 3, 0, 1)).reshape(9, C1, Cin)
    w1_t = jnp.pad(w1_t, ((0, 0), (0, 0), (0, Cin_pad - Cin))).astype(MATMUL_DTYPE)
    b1_c = b1.reshape(C1, 1).astype(jnp.float32)

    w2_t = jnp.transpose(w2, (2, 3, 0, 1)).reshape(9, C2, C1)
    w2_t = jnp.pad(w2_t, ((0, 0), (0, C2_PAD - C2), (0, 0))).astype(MATMUL_DTYPE)
    b2_c = jnp.pad(b2, (0, C2_PAD - C2)).reshape(C2_PAD, 1).astype(jnp.float32)

    kernel = functools.partial(_inverter_kernel, wp=Wp)

    op_bytes = jnp.dtype(MATMUL_DTYPE).itemsize
    flops = n_steps * 2 * 9 * (Lp1 * C1 * Cin_pad + L * C2_PAD * C1)
    bytes_accessed = (xpad.size * op_bytes + n_steps * C2_PAD * L * 4
                      + (w1_t.size + w2_t.size) * op_bytes + (C1 + C2_PAD) * 4)

    out = pl.pallas_call(
        kernel,
        out_shape=jax.ShapeDtypeStruct((n_steps, C2_PAD, L), jnp.float32),
        grid=(n_steps,),
        in_specs=[
            pl.BlockSpec((1, Cin_pad, Lx), lambda g: (g, 0, 0)),
            pl.BlockSpec((9, C1, Cin_pad), lambda g: (0, 0, 0)),
            pl.BlockSpec((C1, 1), lambda g: (0, 0)),
            pl.BlockSpec((9, C2_PAD, C1), lambda g: (0, 0, 0)),
            pl.BlockSpec((C2_PAD, 1), lambda g: (0, 0)),
        ],
        out_specs=pl.BlockSpec((1, C2_PAD, L), lambda g: (g, 0, 0)),
        scratch_shapes=[
            pltpu.VMEM((C1, Lp1), jnp.float32),     # conv1 f32 accumulator
            pltpu.VMEM((C1, Lp1), MATMUL_DTYPE),    # leaky_relu(h1) bf16 operand
        ],
        compiler_params=pltpu.CompilerParams(dimension_semantics=("parallel",)),
        cost_estimate=pl.CostEstimate(flops=flops,
                                      transcendentals=n_steps * C2_PAD * L,
                                      bytes_accessed=bytes_accessed),
    )(xpad, w1_t, b1_c, w2_t, b2_c)

    # kernel output lives on the padded HpxWp grid; crop channel pad, the VALID
    # spatial window, and any zero-padded images (XLA glue).
    out = out[:, :, :b_blk * hpwp].reshape(n_steps, C2_PAD, b_blk, Hp, Wp)
    out = out.transpose(0, 2, 1, 3, 4).reshape(Bp, C2_PAD, Hp, Wp)
    return out[:B, :C2, :Ho, :Wo]


def spectral_normalize(w, u, n_iter=1, eps=1e-12):
    """torch.nn.utils.spectral_norm-style normalization of conv weight w (OIHW).
    (One power iteration = PyTorch training-mode forward; parameter prep in plain JAX.)"""
    out_ch = w.shape[0]
    w_mat = w.reshape(out_ch, -1)
    for _ in range(n_iter):
        v = w_mat.T @ u
        v = v / (jnp.linalg.norm(v) + eps)
        u = w_mat @ v
        u = u / (jnp.linalg.norm(u) + eps)
    sigma = u @ (w_mat @ v)
    return w / sigma


def reference_forward(x, w1, b1, w2sn, b2):
    """Pure-JAX f32 reference (lax conv) for validation."""
    B, Fr, C, H, W = x.shape
    xx = x.reshape(B, Fr * C, H, W)
    dn = ("NCHW", "OIHW", "NCHW")
    y = lax.conv_general_dilated(xx, w1, (1, 1), "SAME", dimension_numbers=dn)
    y = y + b1[None, :, None, None]
    y = jnp.where(y > 0, y, LEAKY_SLOPE * y)
    y = lax.conv_general_dilated(y, w2sn, (1, 1), "VALID", dimension_numbers=dn)
    y = y + b2[None, :, None, None]
    return jax.nn.sigmoid(y)


if __name__ == "__main__":
    latent_size = 4
    frames = 2
    channels = latent_size          # frames * channels == latent_size * 2
    B, H, W = 2, 16, 16
    Cin = frames * channels         # 8

    key = jax.random.PRNGKey(0)
    k_x, k_w1, k_b1, k_w2, k_b2, k_u = jax.random.split(key, 6)

    x = jax.random.normal(k_x, (B, frames, channels, H, W), jnp.float32)

    # Deterministic parameter init (shapes from the nn.Conv2d definitions).
    w1 = jax.random.normal(k_w1, (32, Cin, 3, 3), jnp.float32) * 0.1
    b1 = jax.random.normal(k_b1, (32,), jnp.float32) * 0.1
    w2_raw = jax.random.normal(k_w2, (NOISE_DIM, 32, 3, 3), jnp.float32) * 0.1
    b2 = jax.random.normal(k_b2, (NOISE_DIM,), jnp.float32) * 0.1
    u0 = jax.random.normal(k_u, (NOISE_DIM,), jnp.float32)
    u0 = u0 / jnp.linalg.norm(u0)

    # Spectral norm of conv2 weight (parameter setup, plain JAX).
    w2 = spectral_normalize(w2_raw, u0, n_iter=1)

    out = jax.block_until_ready(inverter_forward(x, w1, b1, w2, b2))
    ref = reference_forward(x, w1, b1, w2, b2)

    assert out.shape == (B, NOISE_DIM, H - 2, W - 2), out.shape
    # bf16 MXU operands (f32 accumulation / epilogue) -> loosened tolerance vs f32 ref.
    err = float(jnp.max(jnp.abs(out - ref)))
    assert err < 2e-2, err

    print("KERNEL_OK")
</pallas_src>

<mosaic_0001>
module attributes {stable_mosaic.version = 11 : i64} {
  func.func @_inverter_kernel(%arg0: i32, %arg1: memref<1x8x1024xbf16, #tpu.memory_space<vmem>>, %arg2: memref<9x32x8xbf16, #tpu.memory_space<vmem>>, %arg3: memref<32x1xf32, #tpu.memory_space<vmem>>, %arg4: memref<9x8x32xbf16, #tpu.memory_space<vmem>>, %arg5: memref<8x1xf32, #tpu.memory_space<vmem>>, %arg6: memref<1x8x768xf32, #tpu.memory_space<vmem>>, %arg7: memref<32x896xf32, #tpu.memory_space<vmem>>, %arg8: memref<32x896xbf16, #tpu.memory_space<vmem>>) attributes {dimension_semantics = [#tpu.dimension_semantics<parallel>], iteration_bounds = array<i64: 1>, scalar_prefetch = 0 : i64, scratch_operands = 2 : i64, tpu.core_type = #tpu.core_type<tc>, window_params = [{transform_indices = @transform_0, window_bounds = array<i64: 1, 8, 1024>}, {pipeline_mode = #tpu.pipeline_mode<synchronous>, transform_indices = @transform_1, window_bounds = array<i64: 9, 32, 8>}, {pipeline_mode = #tpu.pipeline_mode<synchronous>, transform_indices = @transform_2, window_bounds = array<i64: 32, 1>}, {pipeline_mode = #tpu.pipeline_mode<synchronous>, transform_indices = @transform_3, window_bounds = array<i64: 9, 8, 32>}, {pipeline_mode = #tpu.pipeline_mode<synchronous>, transform_indices = @transform_4, window_bounds = array<i64: 8, 1>}, {transform_indices = @transform_5, window_bounds = array<i64: 1, 8, 768>}]} {
    %c0 = arith.constant 0 : index
    %c0_0 = arith.constant 0 : index
    %c0_1 = arith.constant 0 : index
    %0 = vector.load %arg1[%c0, %c0_0, %c0_1] : memref<1x8x1024xbf16, #tpu.memory_space<vmem>>, vector<1x8x1024xbf16>
    %1 = vector.shape_cast %0 : vector<1x8x1024xbf16> to vector<8x1024xbf16>
    %c0_2 = arith.constant 0 : index
    %c0_3 = arith.constant 0 : index
    %2 = vector.load %arg3[%c0_2, %c0_3] : memref<32x1xf32, #tpu.memory_space<vmem>>, vector<32x1xf32>
    %3 = vector.shape_cast %2 : vector<32x1xf32> to vector<32x1xf32>
    %4 = vector.broadcast %3 : vector<32x1xf32> to vector<32x896xf32>
    %c0_4 = arith.constant 0 : index
    %c0_5 = arith.constant 0 : index
    %5 = vector.load %arg7[%c0_4, %c0_5] : memref<32x896xf32, #tpu.memory_space<vmem>>, vector<32x896xf32>
    tpu.vector_store %arg7[%c0_4, %c0_5], %4 {strides = array<i32>} : memref<32x896xf32, #tpu.memory_space<vmem>>, vector<32x896xf32>,
    %c0_6 = arith.constant 0 : index
    %c0_7 = arith.constant 0 : index
    %6 = vector.load %arg7[%c0_6, %c0_7] : memref<32x896xf32, #tpu.memory_space<vmem>>, vector<32x896xf32>
    %c0_8 = arith.constant 0 : index
    %c0_9 = arith.constant 0 : index
    %c0_10 = arith.constant 0 : index
    %7 = vector.load %arg2[%c0_8, %c0_9, %c0_10] : memref<9x32x8xbf16, #tpu.memory_space<vmem>>, vector<1x32x8xbf16>
    %8 = vector.shape_cast %7 : vector<1x32x8xbf16> to vector<32x8xbf16>
    %9 = vector.extract_strided_slice %1 {offsets = [0, 0], sizes = [8, 896], strides = [1, 1]} : vector<8x1024xbf16> to vector<8x896xbf16>
    %cst = arith.constant dense<0.000000e+00> : vector<32x896xf32>
    %10 = tpu.matmul %8, %9, %cst {dimension_numbers = #tpu.dot_dimension_numbers<[1], [0], [0], [1], [0, 0, 1, 1], [], []>} : vector<32x8xbf16>, vector<8x896xbf16>, vector<32x896xf32> -> vector<32x896xf32>
    %11 = arith.addf %6, %10 : vector<32x896xf32>
    %c0_11 = arith.constant 0 : index
    %c0_12 = arith.constant 0 : index
    %12 = vector.load %arg7[%c0_11, %c0_12] : memref<32x896xf32, #tpu.memory_space<vmem>>, vector<32x896xf32>
    tpu.vector_store %arg7[%c0_11, %c0_12], %11 {strides = array<i32>} : memref<32x896xf32, #tpu.memory_space<vmem>>, vector<32x896xf32>,
    %c0_13 = arith.constant 0 : index
    %c0_14 = arith.constant 0 : index
    %13 = vector.load %arg7[%c0_13, %c0_14] : memref<32x896xf32, #tpu.memory_space<vmem>>, vector<32x896xf32>
    %c1 = arith.constant 1 : index
    %c0_15 = arith.constant 0 : index
    %c0_16 = arith.constant 0 : index
    %14 = vector.load %arg2[%c1, %c0_15, %c0_16] : memref<9x32x8xbf16, #tpu.memory_space<vmem>>, vector<1x32x8xbf16>
    %15 = vector.shape_cast %14 : vector<1x32x8xbf16> to vector<32x8xbf16>
    %16 = vector.extract_strided_slice %1 {offsets = [0, 1], sizes = [8, 896], strides = [1, 1]} : vector<8x1024xbf16> to vector<8x896xbf16>
    %cst_17 = arith.constant dense<0.000000e+00> : vector<32x896xf32>
    %17 = tpu.matmul %15, %16, %cst_17 {dimension_numbers = #tpu.dot_dimension_numbers<[1], [0], [0], [1], [0, 0, 1, 1], [], []>} : vector<32x8xbf16>, vector<8x896xbf16>, vector<32x896xf32> -> vector<32x896xf32>
    %18 = arith.addf %13, %17 : vector<32x896xf32>
    %c0_18 = arith.constant 0 : index
    %c0_19 = arith.constant 0 : index
    %19 = vector.load %arg7[%c0_18, %c0_19] : memref<32x896xf32, #tpu.memory_space<vmem>>, vector<32x896xf32>
    tpu.vector_store %arg7[%c0_18, %c0_19], %18 {strides = array<i32>} : memref<32x896xf32, #tpu.memory_space<vmem>>, vector<32x896xf32>,
    %c0_20 = arith.constant 0 : index
    %c0_21 = arith.constant 0 : index
    %20 = vector.load %arg7[%c0_20, %c0_21] : memref<32x896xf32, #tpu.memory_space<vmem>>, vector<32x896xf32>
    %c2 = arith.constant 2 : index
    %c0_22 = arith.constant 0 : index
    %c0_23 = arith.constant 0 : index
    %21 = vector.load %arg2[%c2, %c0_22, %c0_23] : memref<9x32x8xbf16, #tpu.memory_space<vmem>>, vector<1x32x8xbf16>
    %22 = vector.shape_cast %21 : vector<1x32x8xbf16> to vector<32x8xbf16>
    %23 = vector.extract_strided_slice %1 {offsets = [0, 2], sizes = [8, 896], strides = [1, 1]} : vector<8x1024xbf16> to vector<8x896xbf16>
    %cst_24 = arith.constant dense<0.000000e+00> : vector<32x896xf32>
    %24 = tpu.matmul %22, %23, %cst_24 {dimension_numbers = #tpu.dot_dimension_numbers<[1], [0], [0], [1], [0, 0, 1, 1], [], []>} : vector<32x8xbf16>, vector<8x896xbf16>, vector<32x896xf32> -> vector<32x896xf32>
    %25 = arith.addf %20, %24 : vector<32x896xf32>
    %c0_25 = arith.constant 0 : index
    %c0_26 = arith.constant 0 : index
    %26 = vector.load %arg7[%c0_25, %c0_26] : memref<32x896xf32, #tpu.memory_space<vmem>>, vector<32x896xf32>
    tpu.vector_store %arg7[%c0_25, %c0_26], %25 {strides = array<i32>} : memref<32x896xf32, #tpu.memory_space<vmem>>, vector<32x896xf32>,
    %c0_27 = arith.constant 0 : index
    %c0_28 = arith.constant 0 : index
    %27 = vector.load %arg7[%c0_27, %c0_28] : memref<32x896xf32, #tpu.memory_space<vmem>>, vector<32x896xf32>
    %c3 = arith.constant 3 : index
    %c0_29 = arith.constant 0 : index
    %c0_30 = arith.constant 0 : index
    %28 = vector.load %arg2[%c3, %c0_29, %c0_30] : memref<9x32x8xbf16, #tpu.memory_space<vmem>>, vector<1x32x8xbf16>
    %29 = vector.shape_cast %28 : vector<1x32x8xbf16> to vector<32x8xbf16>
    %30 = vector.extract_strided_slice %1 {offsets = [0, 18], sizes = [8, 896], strides = [1, 1]} : vector<8x1024xbf16> to vector<8x896xbf16>
    %cst_31 = arith.constant dense<0.000000e+00> : vector<32x896xf32>
    %31 = tpu.matmul %29, %30, %cst_31 {dimension_numbers = #tpu.dot_dimension_numbers<[1], [0], [0], [1], [0, 0, 1, 1], [], []>} : vector<32x8xbf16>, vector<8x896xbf16>, vector<32x896xf32> -> vector<32x896xf32>
    %32 = arith.addf %27, %31 : vector<32x896xf32>
    %c0_32 = arith.constant 0 : index
    %c0_33 = arith.constant 0 : index
    %33 = vector.load %arg7[%c0_32, %c0_33] : memref<32x896xf32, #tpu.memory_space<vmem>>, vector<32x896xf32>
    tpu.vector_store %arg7[%c0_32, %c0_33], %32 {strides = array<i32>} : memref<32x896xf32, #tpu.memory_space<vmem>>, vector<32x896xf32>,
    %c0_34 = arith.constant 0 : index
    %c0_35 = arith.constant 0 : index
    %34 = vector.load %arg7[%c0_34, %c0_35] : memref<32x896xf32, #tpu.memory_space<vmem>>, vector<32x896xf32>
    %c4 = arith.constant 4 : index
    %c0_36 = arith.constant 0 : index
    %c0_37 = arith.constant 0 : index
    %35 = vector.load %arg2[%c4, %c0_36, %c0_37] : memref<9x32x8xbf16, #tpu.memory_space<vmem>>, vector<1x32x8xbf16>
    %36 = vector.shape_cast %35 : vector<1x32x8xbf16> to vector<32x8xbf16>
    %37 = vector.extract_strided_slice %1 {offsets = [0, 19], sizes = [8, 896], strides = [1, 1]} : vector<8x1024xbf16> to vector<8x896xbf16>
    %cst_38 = arith.constant dense<0.000000e+00> : vector<32x896xf32>
    %38 = tpu.matmul %36, %37, %cst_38 {dimension_numbers = #tpu.dot_dimension_numbers<[1], [0], [0], [1], [0, 0, 1, 1], [], []>} : vector<32x8xbf16>, vector<8x896xbf16>, vector<32x896xf32> -> vector<32x896xf32>
    %39 = arith.addf %34, %38 : vector<32x896xf32>
    %c0_39 = arith.constant 0 : index
    %c0_40 = arith.constant 0 : index
    %40 = vector.load %arg7[%c0_39, %c0_40] : memref<32x896xf32, #tpu.memory_space<vmem>>, vector<32x896xf32>
    tpu.vector_store %arg7[%c0_39, %c0_40], %39 {strides = array<i32>} : memref<32x896xf32, #tpu.memory_space<vmem>>, vector<32x896xf32>,
    %c0_41 = arith.constant 0 : index
    %c0_42 = arith.constant 0 : index
    %41 = vector.load %arg7[%c0_41, %c0_42] : memref<32x896xf32, #tpu.memory_space<vmem>>, vector<32x896xf32>
    %c5 = arith.constant 5 : index
    %c0_43 = arith.constant 0 : index
    %c0_44 = arith.constant 0 : index
    %42 = vector.load %arg2[%c5, %c0_43, %c0_44] : memref<9x32x8xbf16, #tpu.memory_space<vmem>>, vector<1x32x8xbf16>
    %43 = vector.shape_cast %42 : vector<1x32x8xbf16> to vector<32x8xbf16>
    %44 = vector.extract_strided_slice %1 {offsets = [0, 20], sizes = [8, 896], strides = [1, 1]} : vector<8x1024xbf16> to vector<8x896xbf16>
    %cst_45 = arith.constant dense<0.000000e+00> : vector<32x896xf32>
    %45 = tpu.matmul %43, %44, %cst_45 {dimension_numbers = #tpu.dot_dimension_numbers<[1], [0], [0], [1], [0, 0, 1, 1], [], []>} : vector<32x8xbf16>, vector<8x896xbf16>, vector<32x896xf32> -> vector<32x896xf32>
    %46 = arith.addf %41, %45 : vector<32x896xf32>
    %c0_46 = arith.constant 0 : index
    %c0_47 = arith.constant 0 : index
    %47 = vector.load %arg7[%c0_46, %c0_47] : memref<32x896xf32, #tpu.memory_space<vmem>>, vector<32x896xf32>
    tpu.vector_store %arg7[%c0_46, %c0_47], %46 {strides = array<i32>} : memref<32x896xf32, #tpu.memory_space<vmem>>, vector<32x896xf32>,
    %c0_48 = arith.constant 0 : index
    %c0_49 = arith.constant 0 : index
    %48 = vector.load %arg7[%c0_48, %c0_49] : memref<32x896xf32, #tpu.memory_space<vmem>>, vector<32x896xf32>
    %c6 = arith.constant 6 : index
    %c0_50 = arith.constant 0 : index
    %c0_51 = arith.constant 0 : index
    %49 = vector.load %arg2[%c6, %c0_50, %c0_51] : memref<9x32x8xbf16, #tpu.memory_space<vmem>>, vector<1x32x8xbf16>
    %50 = vector.shape_cast %49 : vector<1x32x8xbf16> to vector<32x8xbf16>
    %51 = vector.extract_strided_slice %1 {offsets = [0, 36], sizes = [8, 896], strides = [1, 1]} : vector<8x1024xbf16> to vector<8x896xbf16>
    %cst_52 = arith.constant dense<0.000000e+00> : vector<32x896xf32>
    %52 = tpu.matmul %50, %51, %cst_52 {dimension_numbers = #tpu.dot_dimension_numbers<[1], [0], [0], [1], [0, 0, 1, 1], [], []>} : vector<32x8xbf16>, vector<8x896xbf16>, vector<32x896xf32> -> vector<32x896xf32>
    %53 = arith.addf %48, %52 : vector<32x896xf32>
    %c0_53 = arith.constant 0 : index
    %c0_54 = arith.constant 0 : index
    %54 = vector.load %arg7[%c0_53, %c0_54] : memref<32x896xf32, #tpu.memory_space<vmem>>, vector<32x896xf32>
    tpu.vector_store %arg7[%c0_53, %c0_54], %53 {strides = array<i32>} : memref<32x896xf32, #tpu.memory_space<vmem>>, vector<32x896xf32>,
    %c0_55 = arith.constant 0 : index
    %c0_56 = arith.constant 0 : index
    %55 = vector.load %arg7[%c0_55, %c0_56] : memref<32x896xf32, #tpu.memory_space<vmem>>, vector<32x896xf32>
    %c7 = arith.constant 7 : index
    %c0_57 = arith.constant 0 : index
    %c0_58 = arith.constant 0 : index
    %56 = vector.load %arg2[%c7, %c0_57, %c0_58] : memref<9x32x8xbf16, #tpu.memory_space<vmem>>, vector<1x32x8xbf16>
    %57 = vector.shape_cast %56 : vector<1x32x8xbf16> to vector<32x8xbf16>
    %58 = vector.extract_strided_slice %1 {offsets = [0, 37], sizes = [8, 896], strides = [1, 1]} : vector<8x1024xbf16> to vector<8x896xbf16>
    %cst_59 = arith.constant dense<0.000000e+00> : vector<32x896xf32>
    %59 = tpu.matmul %57, %58, %cst_59 {dimension_numbers = #tpu.dot_dimension_numbers<[1], [0], [0], [1], [0, 0, 1, 1], [], []>} : vector<32x8xbf16>, vector<8x896xbf16>, vector<32x896xf32> -> vector<32x896xf32>
    %60 = arith.addf %55, %59 : vector<32x896xf32>
    %c0_60 = arith.constant 0 : index
    %c0_61 = arith.constant 0 : index
    %61 = vector.load %arg7[%c0_60, %c0_61] : memref<32x896xf32, #tpu.memory_space<vmem>>, vector<32x896xf32>
    tpu.vector_store %arg7[%c0_60, %c0_61], %60 {strides = array<i32>} : memref<32x896xf32, #tpu.memory_space<vmem>>, vector<32x896xf32>,
    %c0_62 = arith.constant 0 : index
    %c0_63 = arith.constant 0 : index
    %62 = vector.load %arg7[%c0_62, %c0_63] : memref<32x896xf32, #tpu.memory_space<vmem>>, vector<32x896xf32>
    %c8 = arith.constant 8 : index
    %c0_64 = arith.constant 0 : index
    %c0_65 = arith.constant 0 : index
    %63 = vector.load %arg2[%c8, %c0_64, %c0_65] : memref<9x32x8xbf16, #tpu.memory_space<vmem>>, vector<1x32x8xbf16>
    %64 = vector.shape_cast %63 : vector<1x32x8xbf16> to vector<32x8xbf16>
    %65 = vector.extract_strided_slice %1 {offsets = [0, 38], sizes = [8, 896], strides = [1, 1]} : vector<8x1024xbf16> to vector<8x896xbf16>
    %cst_66 = arith.constant dense<0.000000e+00> : vector<32x896xf32>
    %66 = tpu.matmul %64, %65, %cst_66 {dimension_numbers = #tpu.dot_dimension_numbers<[1], [0], [0], [1], [0, 0, 1, 1], [], []>} : vector<32x8xbf16>, vector<8x896xbf16>, vector<32x896xf32> -> vector<32x896xf32>
    %67 = arith.addf %62, %66 : vector<32x896xf32>
    %c0_67 = arith.constant 0 : index
    %c0_68 = arith.constant 0 : index
    %68 = vector.load %arg7[%c0_67, %c0_68] : memref<32x896xf32, #tpu.memory_space<vmem>>, vector<32x896xf32>
    tpu.vector_store %arg7[%c0_67, %c0_68], %67 {strides = array<i32>} : memref<32x896xf32, #tpu.memory_space<vmem>>, vector<32x896xf32>,
    %c0_69 = arith.constant 0 : index
    %c0_70 = arith.constant 0 : index
    %69 = vector.load %arg7[%c0_69, %c0_70] : memref<32x896xf32, #tpu.memory_space<vmem>>, vector<32x896xf32>
    %cst_71 = arith.constant 0.000000e+00 : f32
    %70 = vector.broadcast %cst_71 : f32 to vector<32x896xf32>
    %71 = arith.cmpf ogt, %69, %70 : vector<32x896xf32>
    %cst_72 = arith.constant 0.00999999977 : f32
    %72 = vector.broadcast %cst_72 : f32 to vector<32x896xf32>
    %73 = arith.mulf %72, %69 : vector<32x896xf32>
    %74 = arith.select %71, %69, %73 : vector<32x896xi1>, vector<32x896xf32>
    %75 = arith.truncf %74 : vector<32x896xf32> to vector<32x896xbf16>
    %c0_73 = arith.constant 0 : index
    %c0_74 = arith.constant 0 : index
    %76 = vector.load %arg8[%c0_73, %c0_74] : memref<32x896xbf16, #tpu.memory_space<vmem>>, vector<32x896xbf16>
    tpu.vector_store %arg8[%c0_73, %c0_74], %75 {strides = array<i32>} : memref<32x896xbf16, #tpu.memory_space<vmem>>, vector<32x896xbf16>,
    %c0_75 = arith.constant 0 : index
    %c0_76 = arith.constant 0 : index
    %77 = vector.load %arg5[%c0_75, %c0_76] : memref<8x1xf32, #tpu.memory_space<vmem>>, vector<8x1xf32>
    %78 = vector.shape_cast %77 : vector<8x1xf32> to vector<8x1xf32>
    %79 = vector.broadcast %78 : vector<8x1xf32> to vector<8x768xf32>
    %c0_77 = arith.constant 0 : index
    %c0_78 = arith.constant 0 : index
    %c0_79 = arith.constant 0 : index
    %80 = vector.load %arg4[%c0_77, %c0_78, %c0_79] : memref<9x8x32xbf16, #tpu.memory_space<vmem>>, vector<1x8x32xbf16>
    %81 = vector.shape_cast %80 : vector<1x8x32xbf16> to vector<8x32xbf16>
    %c0_80 = arith.constant 0 : index
    %c0_81 = arith.constant 0 : index
    %82 = vector.load %arg8[%c0_80, %c0_81] : memref<32x896xbf16, #tpu.memory_space<vmem>>, vector<32x768xbf16>
    %cst_82 = arith.constant dense<0.000000e+00> : vector<8x768xf32>
    %83 = tpu.matmul %81, %82, %cst_82 {dimension_numbers = #tpu.dot_dimension_numbers<[1], [0], [0], [1], [0, 0, 1, 1], [], []>} : vector<8x32xbf16>, vector<32x768xbf16>, vector<8x768xf32> -> vector<8x768xf32>
    %84 = arith.addf %79, %83 : vector<8x768xf32>
    %c1_83 = arith.constant 1 : index
    %c0_84 = arith.constant 0 : index
    %c0_85 = arith.constant 0 : index
    %85 = vector.load %arg4[%c1_83, %c0_84, %c0_85] : memref<9x8x32xbf16, #tpu.memory_space<vmem>>, vector<1x8x32xbf16>
    %86 = vector.shape_cast %85 : vector<1x8x32xbf16> to vector<8x32xbf16>
    %c0_86 = arith.constant 0 : index
    %c1_87 = arith.constant 1 : index
    %87 = vector.load %arg8[%c0_86, %c1_87] : memref<32x896xbf16, #tpu.memory_space<vmem>>, vector<32x768xbf16>
    %cst_88 = arith.constant dense<0.000000e+00> : vector<8x768xf32>
    %88 = tpu.matmul %86, %87, %cst_88 {dimension_numbers = #tpu.dot_dimension_numbers<[1], [0], [0], [1], [0, 0, 1, 1], [], []>} : vector<8x32xbf16>, vector<32x768xbf16>, vector<8x768xf32> -> vector<8x768xf32>
    %89 = arith.addf %84, %88 : vector<8x768xf32>
    %c2_89 = arith.constant 2 : index
    %c0_90 = arith.constant 0 : index
    %c0_91 = arith.constant 0 : index
    %90 = vector.load %arg4[%c2_89, %c0_90, %c0_91] : memref<9x8x32xbf16, #tpu.memory_space<vmem>>, vector<1x8x32xbf16>
    %91 = vector.shape_cast %90 : vector<1x8x32xbf16> to vector<8x32xbf16>
    %c0_92 = arith.constant 0 : index
    %c2_93 = arith.constant 2 : index
    %92 = vector.load %arg8[%c0_92, %c2_93] : memref<32x896xbf16, #tpu.memory_space<vmem>>, vector<32x768xbf16>
    %cst_94 = arith.constant dense<0.000000e+00> : vector<8x768xf32>
    %93 = tpu.matmul %91, %92, %cst_94 {dimension_numbers = #tpu.dot_dimension_numbers<[1], [0], [0], [1], [0, 0, 1, 1], [], []>} : vector<8x32xbf16>, vector<32x768xbf16>, vector<8x768xf32> -> vector<8x768xf32>
    %94 = arith.addf %89, %93 : vector<8x768xf32>
    %c3_95 = arith.constant 3 : index
    %c0_96 = arith.constant 0 : index
    %c0_97 = arith.constant 0 : index
    %95 = vector.load %arg4[%c3_95, %c0_96, %c0_97] : memref<9x8x32xbf16, #tpu.memory_space<vmem>>, vector<1x8x32xbf16>
    %96 = vector.shape_cast %95 : vector<1x8x32xbf16> to vector<8x32xbf16>
    %c0_98 = arith.constant 0 : index
    %c18 = arith.constant 18 : index
    %97 = vector.load %arg8[%c0_98, %c18] : memref<32x896xbf16, #tpu.memory_space<vmem>>, vector<32x768xbf16>
    %cst_99 = arith.constant dense<0.000000e+00> : vector<8x768xf32>
    %98 = tpu.matmul %96, %97, %cst_99 {dimension_numbers = #tpu.dot_dimension_numbers<[1], [0], [0], [1], [0, 0, 1, 1], [], []>} : vector<8x32xbf16>, vector<32x768xbf16>, vector<8x768xf32> -> vector<8x768xf32>
    %99 = arith.addf %94, %98 : vector<8x768xf32>
    %c4_100 = arith.constant 4 : index
    %c0_101 = arith.constant 0 : index
    %c0_102 = arith.constant 0 : index
    %100 = vector.load %arg4[%c4_100, %c0_101, %c0_102] : memref<9x8x32xbf16, #tpu.memory_space<vmem>>, vector<1x8x32xbf16>
    %101 = vector.shape_cast %100 : vector<1x8x32xbf16> to vector<8x32xbf16>
    %c0_103 = arith.constant 0 : index
    %c19 = arith.constant 19 : index
    %102 = vector.load %arg8[%c0_103, %c19] : memref<32x896xbf16, #tpu.memory_space<vmem>>, vector<32x768xbf16>
    %cst_104 = arith.constant dense<0.000000e+00> : vector<8x768xf32>
    %103 = tpu.matmul %101, %102, %cst_104 {dimension_numbers = #tpu.dot_dimension_numbers<[1], [0], [0], [1], [0, 0, 1, 1], [], []>} : vector<8x32xbf16>, vector<32x768xbf16>, vector<8x768xf32> -> vector<8x768xf32>
    %104 = arith.addf %99, %103 : vector<8x768xf32>
    %c5_105 = arith.constant 5 : index
    %c0_106 = arith.constant 0 : index
    %c0_107 = arith.constant 0 : index
    %105 = vector.load %arg4[%c5_105, %c0_106, %c0_107] : memref<9x8x32xbf16, #tpu.memory_space<vmem>>, vector<1x8x32xbf16>
    %106 = vector.shape_cast %105 : vector<1x8x32xbf16> to vector<8x32xbf16>
    %c0_108 = arith.constant 0 : index
    %c20 = arith.constant 20 : index
    %107 = vector.load %arg8[%c0_108, %c20] : memref<32x896xbf16, #tpu.memory_space<vmem>>, vector<32x768xbf16>
    %cst_109 = arith.constant dense<0.000000e+00> : vector<8x768xf32>
    %108 = tpu.matmul %106, %107, %cst_109 {dimension_numbers = #tpu.dot_dimension_numbers<[1], [0], [0], [1], [0, 0, 1, 1], [], []>} : vector<8x32xbf16>, vector<32x768xbf16>, vector<8x768xf32> -> vector<8x768xf32>
    %109 = arith.addf %104, %108 : vector<8x768xf32>
    %c6_110 = arith.constant 6 : index
    %c0_111 = arith.constant 0 : index
    %c0_112 = arith.constant 0 : index
    %110 = vector.load %arg4[%c6_110, %c0_111, %c0_112] : memref<9x8x32xbf16, #tpu.memory_space<vmem>>, vector<1x8x32xbf16>
    %111 = vector.shape_cast %110 : vector<1x8x32xbf16> to vector<8x32xbf16>
    %c0_113 = arith.constant 0 : index
    %c36 = arith.constant 36 : index
    %112 = vector.load %arg8[%c0_113, %c36] : memref<32x896xbf16, #tpu.memory_space<vmem>>, vector<32x768xbf16>
    %cst_114 = arith.constant dense<0.000000e+00> : vector<8x768xf32>
    %113 = tpu.matmul %111, %112, %cst_114 {dimension_numbers = #tpu.dot_dimension_numbers<[1], [0], [0], [1], [0, 0, 1, 1], [], []>} : vector<8x32xbf16>, vector<32x768xbf16>, vector<8x768xf32> -> vector<8x768xf32>
    %114 = arith.addf %109, %113 : vector<8x768xf32>
    %c7_115 = arith.constant 7 : index
    %c0_116 = arith.constant 0 : index
    %c0_117 = arith.constant 0 : index
    %115 = vector.load %arg4[%c7_115, %c0_116, %c0_117] : memref<9x8x32xbf16, #tpu.memory_space<vmem>>, vector<1x8x32xbf16>
    %116 = vector.shape_cast %115 : vector<1x8x32xbf16> to vector<8x32xbf16>
    %c0_118 = arith.constant 0 : index
    %c37 = arith.constant 37 : index
    %117 = vector.load %arg8[%c0_118, %c37] : memref<32x896xbf16, #tpu.memory_space<vmem>>, vector<32x768xbf16>
    %cst_119 = arith.constant dense<0.000000e+00> : vector<8x768xf32>
    %118 = tpu.matmul %116, %117, %cst_119 {dimension_numbers = #tpu.dot_dimension_numbers<[1], [0], [0], [1], [0, 0, 1, 1], [], []>} : vector<8x32xbf16>, vector<32x768xbf16>, vector<8x768xf32> -> vector<8x768xf32>
    %119 = arith.addf %114, %118 : vector<8x768xf32>
    %c8_120 = arith.constant 8 : index
    %c0_121 = arith.constant 0 : index
    %c0_122 = arith.constant 0 : index
    %120 = vector.load %arg4[%c8_120, %c0_121, %c0_122] : memref<9x8x32xbf16, #tpu.memory_space<vmem>>, vector<1x8x32xbf16>
    %121 = vector.shape_cast %120 : vector<1x8x32xbf16> to vector<8x32xbf16>
    %c0_123 = arith.constant 0 : index
    %c38 = arith.constant 38 : index
    %122 = vector.load %arg8[%c0_123, %c38] : memref<32x896xbf16, #tpu.memory_space<vmem>>, vector<32x768xbf16>
    %cst_124 = arith.constant dense<0.000000e+00> : vector<8x768xf32>
    %123 = tpu.matmul %121, %122, %cst_124 {dimension_numbers = #tpu.dot_dimension_numbers<[1], [0], [0], [1], [0, 0, 1, 1], [], []>} : vector<8x32xbf16>, vector<32x768xbf16>, vector<8x768xf32> -> vector<8x768xf32>
    %124 = arith.addf %119, %123 : vector<8x768xf32>
    %125 = arith.negf %124 : vector<8x768xf32>
    %126 = math.exp %125 : vector<8x768xf32>
    %cst_125 = arith.constant 1.000000e+00 : f32
    %127 = vector.broadcast %cst_125 : f32 to vector<8x768xf32>
    %128 = arith.addf %127, %126 : vector<8x768xf32>
    %129 = arith.divf %127, %128 : vector<8x768xf32>
    %c0_126 = arith.constant 0 : index
    %c0_127 = arith.constant 0 : index
    %c0_128 = arith.constant 0 : index
    %130 = vector.load %arg6[%c0_126, %c0_127, %c0_128] : memref<1x8x768xf32, #tpu.memory_space<vmem>>, vector<1x8x768xf32>
    %131 = vector.shape_cast %130 : vector<1x8x768xf32> to vector<8x768xf32>
    %132 = vector.shape_cast %129 : vector<8x768xf32> to vector<1x8x768xf32>
    tpu.vector_store %arg6[%c0_126, %c0_127, %c0_128], %132 {strides = array<i32>} : memref<1x8x768xf32, #tpu.memory_space<vmem>>, vector<1x8x768xf32>,
    return
  }
  func.func @transform_0(%arg0: i32) -> (i32, i32, i32) {
    %c0_i32 = arith.constant 0 : i32
    %c0_i32_0 = arith.constant 0 : i32
    %c0_i32_1 = arith.constant 0 : i32
    return %arg0, %c0_i32, %c0_i32_0 : i32, i32, i32
  }
  func.func @transform_1(%arg0: i32) -> (i32, i32, i32) {
    %c0_i32 = arith.constant 0 : i32
    %c0_i32_0 = arith.constant 0 : i32
    %c0_i32_1 = arith.constant 0 : i32
    %c0_i32_2 = arith.constant 0 : i32
    return %c0_i32, %c0_i32_0, %c0_i32_1 : i32, i32, i32
  }
  func.func @transform_2(%arg0: i32) -> (i32, i32) {
    %c0_i32 = arith.constant 0 : i32
    %c0_i32_0 = arith.constant 0 : i32
    %c0_i32_1 = arith.constant 0 : i32
    return %c0_i32, %c0_i32_0 : i32, i32
  }
  func.func @transform_3(%arg0: i32) -> (i32, i32, i32) {
    %c0_i32 = arith.constant 0 : i32
    %c0_i32_0 = arith.constant 0 : i32
    %c0_i32_1 = arith.constant 0 : i32
    %c0_i32_2 = arith.constant 0 : i32
    return %c0_i32, %c0_i32_0, %c0_i32_1 : i32, i32, i32
  }
  func.func @transform_4(%arg0: i32) -> (i32, i32) {
    %c0_i32 = arith.constant 0 : i32
    %c0_i32_0 = arith.constant 0 : i32
    %c0_i32_1 = arith.constant 0 : i32
    return %c0_i32, %c0_i32_0 : i32, i32
  }
  func.func @transform_5(%arg0: i32) -> (i32, i32, i32) {
    %c0_i32 = arith.constant 0 : i32
    %c0_i32_0 = arith.constant 0 : i32
    %c0_i32_1 = arith.constant 0 : i32
    return %arg0, %c0_i32, %c0_i32_0 : i32, i32, i32
  }
}

</mosaic_0001>

<llo_original>
// kernel: tpu_custom_call.1
$region0: #{tpu_custom_call.1}
  #allocation0 [shape = 'u32[]', space=smem, size = 0x4, offset = 0x4, fixed_abs, tag = 'smem constant byte address 0x4 - core index']
  #allocation1 [shape = 'u32[72,128]{1,0:T(1,128)}', space=vmem, size = 0x9000, scoped, tag = 'internal scratch']
  #allocation2 [shape = 'f32[32,896]{1,0:T(8,128)}', space=vmem, size = 0x1c000, scoped, tag = 'scratch operand']
  #allocation3 [shape = 'bf16[32,896]{1,0:T(8,128)(2,1)}', space=vmem, size = 0xe000, scoped, tag = 'scratch operand']
  %s0 = inlined_call_operand.vmem [shape: bf16[1,8,1024], index: 0, kind: input, shape index: {}]
  %s1 = inlined_call_operand.vmem [shape: bf16[9,32,8], index: 1, kind: input, shape index: {}]
  %s2 = inlined_call_operand.vmem [shape: f32[32,1], index: 2, kind: input, shape index: {}]
  %s3 = inlined_call_operand.vmem [shape: bf16[9,8,32], index: 3, kind: input, shape index: {}]
  %s4 = inlined_call_operand.vmem [shape: f32[8,1], index: 4, kind: input, shape index: {}]
  %s5 = inlined_call_operand.hbm [shape: f32[1,8,768], index: 5, kind: output, shape index: {}]
  %s6 = sld [smem:[#allocation0]]
  $region30: #{tpu_custom_call.1} parent=0
    _
  %s8 = ssub.s32 1, %s6
  %s9 = scalar_select 0, %s8, %s6
  $region1: #{tpu_custom_call.1} parent=0
    #allocation4 [shape = 'u8[24576]{0}', space=vmem, size = 0x6000, scoped, tag = 'output window, operand 0, single buffered']
    #allocation5 [shape = 's32[1]{0}', space=sflag, size = 0x4, scoped, tag = 'scoped memory for tpu_custom_call.1']
    %10 = vsyncpa [#allocation5], 0
    // Predicated region
    $region2: #{tpu_custom_call.1} parent=1 // pred_check
      _
    $region3: #{tpu_custom_call.1} parent=1 // pred_check_branch
      %12 = sbr.rel (0) target = $region5
    $region4: #{tpu_custom_call.1} parent=1 // pred_region
      _
    $region5: #{tpu_custom_call.1} parent=1 // pred_fallthru
      _
    // Predicated region
    $region6: #{tpu_custom_call.1} parent=1 // pred_check
      _
    $region7: #{tpu_custom_call.1} parent=1 // pred_check_branch
      %14 = sbr.rel (0) target = $region9
    $region8: #{tpu_custom_call.1} parent=1 // pred_region
      _
    $region9: #{tpu_custom_call.1} parent=1 // pred_fallthru
      _
    // Predicated region
    $region10: #{tpu_custom_call.1} parent=1 // pred_check
      _
    $region11: #{tpu_custom_call.1} parent=1 // pred_check_branch
      %16 = sbr.rel (0) target = $region13
    $region12: #{tpu_custom_call.1} parent=1 // pred_region
      _
    $region13: #{tpu_custom_call.1} parent=1 // pred_fallthru
      _
    // Predicated region
    $region14: #{tpu_custom_call.1} parent=1 // pred_check
      _
    $region15: #{tpu_custom_call.1} parent=1 // pred_check_branch
      %18 = sbr.rel (0) target = $region17
    $region16: #{tpu_custom_call.1} parent=1 // pred_region
      _
    $region17: #{tpu_custom_call.1} parent=1 // pred_fallthru
      _
    // Predicated region
    $region18: #{tpu_custom_call.1} parent=1 // pred_check
      _
    $region19: #{tpu_custom_call.1} parent=1 // pred_check_branch
      %20 = sbr.rel (0) target = $region21
    $region20: #{tpu_custom_call.1} parent=1 // pred_region
      _
    $region21: #{tpu_custom_call.1} parent=1 // pred_fallthru
      _
    %v22 = vld [vmem:[%s0] sm:$0xff]
    %v23 = vld [vmem:[%s0 + $0x8] sm:$0xff]
    %v24 = vld [vmem:[%s0 + $0x10] sm:$0xff]
    %v25 = vld [vmem:[%s0 + $0x18] sm:$0xff]
    %v26 = vld [vmem:[%s2] sm:$0xff]
    %v27 = vld [vmem:[%s2 + $0x8] sm:$0xff]
    %v28 = vld [vmem:[%s2 + $0x10] sm:$0xff]
    %v29 = vld [vmem:[%s2 + $0x18] sm:$0xff]
    %31 = vset.pattern.permute.xlu0 0
    %32 = vperm.xlu0 %31, %v26
    %v33 = vpop.permute.xlu0 %32
    %36 = vset.pattern.permute.xlu0 0
    %37 = vperm.xlu0 %36, %v27
    %v38 = vpop.permute.xlu0 %37
    %41 = vset.pattern.permute.xlu0 0
    %42 = vperm.xlu0 %41, %v28
    %v43 = vpop.permute.xlu0 %42
    %46 = vset.pattern.permute.xlu0 0
    %47 = vperm.xlu0 %46, %v29
    %v48 = vpop.permute.xlu0 %47
    %50 = vst [vmem:[#allocation2] sm:$0xff] %v33
    %51 = vst [vmem:[#allocation2 + $0x8] sm:$0xff] %v33
    %52 = vst [vmem:[#allocation2 + $0x10] sm:$0xff] %v33
    %53 = vst [vmem:[#allocation2 + $0x18] sm:$0xff] %v33
    %54 = vst [vmem:[#allocation2 + $0x20] sm:$0xff] %v33
    %55 = vst [vmem:[#allocation2 + $0x28] sm:$0xff] %v33
    %56 = vst [vmem:[#allocation2 + $0x30] sm:$0xff] %v33
    %57 = vst [vmem:[#allocation2 + $0x38] sm:$0xff] %v38
    %58 = vst [vmem:[#allocation2 + $0x40] sm:$0xff] %v38
    %59 = vst [vmem:[#allocation2 + $0x48] sm:$0xff] %v38
    %60 = vst [vmem:[#allocation2 + $0x50] sm:$0xff] %v38
    %61 = vst [vmem:[#allocation2 + $0x58] sm:$0xff] %v38
    %62 = vst [vmem:[#allocation2 + $0x60] sm:$0xff] %v38
    %63 = vst [vmem:[#allocation2 + $0x68] sm:$0xff] %v38
    %64 = vst [vmem:[#allocation2 + $0x70] sm:$0xff] %v43
    %65 = vst [vmem:[#allocation2 + $0x78] sm:$0xff] %v43
    %66 = vst [vmem:[#allocation2 + $0x80] sm:$0xff] %v43
    %67 = vst [vmem:[#allocation2 + $0x88] sm:$0xff] %v43
    %68 = vst [vmem:[#allocation2 + $0x90] sm:$0xff] %v43
    %69 = vst [vmem:[#allocation2 + $0x98] sm:$0xff] %v43
    %70 = vst [vmem:[#allocation2 + $0xa0] sm:$0xff] %v43
    %71 = vst [vmem:[#allocation2 + $0xa8] sm:$0xff] %v48
    %72 = vst [vmem:[#allocation2 + $0xb0] sm:$0xff] %v48
    %73 = vst [vmem:[#allocation2 + $0xb8] sm:$0xff] %v48
    %74 = vst [vmem:[#allocation2 + $0xc0] sm:$0xff] %v48
    %75 = vst [vmem:[#allocation2 + $0xc8] sm:$0xff] %v48
    %76 = vst [vmem:[#allocation2 + $0xd0] sm:$0xff] %v48
    %77 = vst [vmem:[#allocation2 + $0xd8] sm:$0xff] %v48
    %v78 = vld [vmem:[#allocation2] sm:$0xff]
    %v79 = vld [vmem:[#allocation2 + $0x8] sm:$0xff]
    %v80 = vld [vmem:[#allocation2 + $0x10] sm:$0xff]
    %v81 = vld [vmem:[#allocation2 + $0x18] sm:$0xff]
    %v82 = vld [vmem:[#allocation2 + $0x20] sm:$0xff]
    %v83 = vld [vmem:[#allocation2 + $0x28] sm:$0xff]
    %v84 = vld [vmem:[#allocation2 + $0x30] sm:$0xff]
    %v85 = vld [vmem:[#allocation2 + $0x38] sm:$0xff]
    %v86 = vld [vmem:[#allocation2 + $0x40] sm:$0xff]
    %v87 = vld [vmem:[#allocation2 + $0x48] sm:$0xff]
    %v88 = vld [vmem:[#allocation2 + $0x50] sm:$0xff]
    %v89 = vld [vmem:[#allocation2 + $0x58] sm:$0xff]
    %v90 = vld [vmem:[#allocation2 + $0x60] sm:$0xff]
    %v91 = vld [vmem:[#allocation2 + $0x68] sm:$0xff]
    %v92 = vld [vmem:[#allocation2 + $0x70] sm:$0xff]
    %v93 = vld [vmem:[#allocation2 + $0x78] sm:$0xff]
    %v94 = vld [vmem:[#allocation2 + $0x80] sm:$0xff]
    %v95 = vld [vmem:[#allocation2 + $0x88] sm:$0xff]
    %v96 = vld [vmem:[#allocation2 + $0x90] sm:$0xff]
    %v97 = vld [vmem:[#allocation2 + $0x98] sm:$0xff]
    %v98 = vld [vmem:[#allocation2 + $0xa0] sm:$0xff]
    %v99 = vld [vmem:[#allocation2 + $0xa8] sm:$0xff]
    %v100 = vld [vmem:[#allocation2 + $0xb0] sm:$0xff]
    %v101 = vld [vmem:[#allocation2 + $0xb8] sm:$0xff]
    %v102 = vld [vmem:[#allocation2 + $0xc0] sm:$0xff]
    %v103 = vld [vmem:[#allocation2 + $0xc8] sm:$0xff]
    %v104 = vld [vmem:[#allocation2 + $0xd0] sm:$0xff]
    %v105 = vld [vmem:[#allocation2 + $0xd8] sm:$0xff]
    %v106 = vld [vmem:[%s1] sm:$0xf]
    %v107 = vld [vmem:[%s1 + $0x4] sm:$0xf]
    %v108 = vld [vmem:[%s1 + $0x8] sm:$0xf]
    %v109 = vld [vmem:[%s1 + $0xc] sm:$0xf]
    %v114 = vunpack.c.l.b16 %v106
    %v115 = vunpack.c.l.b16 %v107
    %v116 = vunpack.c.l.b16 %v108
    %v117 = vunpack.c.l.b16 %v109
    %v118 = vpack.c.b16 %v115, %v114
    %v119 = vpack.c.b16 %v117, %v116
    %v124 = vunpack.c.l.b16 %v22
    %v125 = vunpack.c.h.b16 %v22
    %v126 = vunpack.c.l.b16 %v23
    %v127 = vunpack.c.h.b16 %v23
    %v128 = vunpack.c.l.b16 %v24
    %v129 = vunpack.c.h.b16 %v24
    %v130 = vunpack.c.l.b16 %v25
    %v131 = vpack.c.b16 %v124, %v124
    %v132 = vpack.c.b16 %v125, %v125
    %v133 = vpack.c.b16 %v126, %v126
    %v134 = vpack.c.b16 %v127, %v127
    %v135 = vpack.c.b16 %v128, %v128
    %v136 = vpack.c.b16 %v129, %v129
    %v137 = vpack.c.b16 %v130, %v130
    %vm138 = vcmask 64512
    %v140 = vsel %vm138, %v118, 0
    %v143 = vsel %vm138, %v119, 0
    %vm145 = vcmask 1043456
    %v147 = vsel %vm145, %v131, 0
    %v150 = vsel %vm145, %v132, 0
    %v153 = vsel %vm145, %v133, 0
    %v156 = vsel %vm145, %v134, 0
    %v159 = vsel %vm145, %v135, 0
    %v162 = vsel %vm145, %v136, 0
    %v165 = vsel %vm145, %v137, 0
    %167 = vmatpush.bf16.msra.mxu0 0
    %168 = vmatpush.bf16.msra.mxu0 0
    %169 = vmatpush.bf16.msra.mxu0 0
    %170 = vmatpush.bf16.msra.mxu0 0
    %171 = vmatpush.bf16.msra.mxu0 0
    %172 = vmatpush.bf16.msra.mxu0 0
    %173 = vmatpush.bf16.msra.mxu0 0
    %174 = vmatpush.bf16.msra.mxu0 %v147
    %175 = vmatmul.bf16.gmra.mxu0 %v140
    %v176 = vpop.f32.mrf.mxu0
    %v177 = vadd.f32 0.0, %v176
    %v178 = vpop.f32.mrf.mxu0
    %v179 = vadd.f32 0.0, %v178
    %180 = vmatmul.bf16.gmra.mxu0 %v143
    %v181 = vpop.f32.mrf.mxu0
    %v182 = vadd.f32 0.0, %v181
    %v183 = vpop.f32.mrf.mxu0
    %v184 = vadd.f32 0.0, %v183
    %185 = vdwg.mxu0
    %186 = vmatpush.bf16.msra.mxu0 0
    %187 = vmatpush.bf16.msra.mxu0 0
    %188 = vmatpush.bf16.msra.mxu0 0
    %189 = vmatpush.bf16.msra.mxu0 0
    %190 = vmatpush.bf16.msra.mxu0 0
    %191 = vmatpush.bf16.msra.mxu0 0
    %192 = vmatpush.bf16.msra.mxu0 0
    %193 = vmatpush.bf16.msra.mxu0 %v150
    %194 = vmatmul.bf16.gmra.mxu0 %v140
    %v195 = vpop.f32.mrf.mxu0
    %v196 = vadd.f32 0.0, %v195
    %v197 = vpop.f32.mrf.mxu0
    %v198 = vadd.f32 0.0, %v197
    %199 = vmatmul.bf16.gmra.mxu0 %v143
    %v200 = vpop.f32.mrf.mxu0
    %v201 = vadd.f32 0.0, %v200
    %v202 = vpop.f32.mrf.mxu0
    %v203 = vadd.f32 0.0, %v202
    %204 = vdwg.mxu0
    %205 = vmatpush.bf16.msra.mxu0 0
    %206 = vmatpush.bf16.msra.mxu0 0
    %207 = vmatpush.bf16.msra.mxu0 0
    %208 = vmatpush.bf16.msra.mxu0 0
    %209 = vmatpush.bf16.msra.mxu0 0
    %210 = vmatpush.bf16.msra.mxu0 0
    %211 = vmatpush.bf16.msra.mxu0 0
    %212 = vmatpush.bf16.msra.mxu0 %v153
    %213 = vmatmul.bf16.gmra.mxu0 %v140
    %v214 = vpop.f32.mrf.mxu0
    %v215 = vadd.f32 0.0, %v214
    %v216 = vpop.f32.mrf.mxu0
    %v217 = vadd.f32 0.0, %v216
    %218 = vmatmul.bf16.gmra.mxu0 %v143
    %v219 = vpop.f32.mrf.mxu0
    %v220 = vadd.f32 0.0, %v219
    %v221 = vpop.f32.mrf.mxu0
    %v222 = vadd.f32 0.0, %v221
    %223 = vdwg.mxu0
    %224 = vmatpush.bf16.msra.mxu0 0
    %225 = vmatpush.bf16.msra.mxu0 0
    %226 = vmatpush.bf16.msra.mxu0 0
    %227 = vmatpush.bf16.msra.mxu0 0
    %228 = vmatpush.bf16.msra.mxu0 0
    %229 = vmatpush.bf16.msra.mxu0 0
    %230 = vmatpush.bf16.msra.mxu0 0
    %231 = vmatpush.bf16.msra.mxu0 %v156
    %232 = vmatmul.bf16.gmra.mxu0 %v140
    %v233 = vpop.f32.mrf.mxu0
    %v234 = vadd.f32 0.0, %v233
    %v235 = vpop.f32.mrf.mxu0
    %v236 = vadd.f32 0.0, %v235
    %237 = vmatmul.bf16.gmra.mxu0 %v143
    %v238 = vpop.f32.mrf.mxu0
    %v239 = vadd.f32 0.0, %v238
    %v240 = vpop.f32.mrf.mxu0
    %v241 = vadd.f32 0.0, %v240
    %242 = vdwg.mxu0
    %243 = vmatpush.bf16.msra.mxu0 0
    %244 = vmatpush.bf16.msra.mxu0 0
    %245 = vmatpush.bf16.msra.mxu0 0
    %246 = vmatpush.bf16.msra.mxu0 0
    %247 = vmatpush.bf16.msra.mxu0 0
    %248 = vmatpush.bf16.msra.mxu0 0
    %249 = vmatpush.bf16.msra.mxu0 0
    %250 = vmatpush.bf16.msra.mxu0 %v159
    %251 = vmatmul.bf16.gmra.mxu0 %v140
    %v252 = vpop.f32.mrf.mxu0
    %v253 = vadd.f32 0.0, %v252
    %v254 = vpop.f32.mrf.mxu0
    %v255 = vadd.f32 0.0, %v254
    %256 = vmatmul.bf16.gmra.mxu0 %v143
    %v257 = vpop.f32.mrf.mxu0
    %v258 = vadd.f32 0.0, %v257
    %v259 = vpop.f32.mrf.mxu0
    %v260 = vadd.f32 0.0, %v259
    %261 = vdwg.mxu0
    %262 = vmatpush.bf16.msra.mxu0 0
    %263 = vmatpush.bf16.msra.mxu0 0
    %264 = vmatpush.bf16.msra.mxu0 0
    %265 = vmatpush.bf16.msra.mxu0 0
    %266 = vmatpush.bf16.msra.mxu0 0
    %267 = vmatpush.bf16.msra.mxu0 0
    %268 = vmatpush.bf16.msra.mxu0 0
    %269 = vmatpush.bf16.msra.mxu0 %v162
    %270 = vmatmul.bf16.gmra.mxu0 %v140
    %v271 = vpop.f32.mrf.mxu0
    %v272 = vadd.f32 0.0, %v271
    %v273 = vpop.f32.mrf.mxu0
    %v274 = vadd.f32 0.0, %v273
    %275 = vmatmul.bf16.gmra.mxu0 %v143
    %v276 = vpop.f32.mrf.mxu0
    %v277 = vadd.f32 0.0, %v276
    %v278 = vpop.f32.mrf.mxu0
    %v279 = vadd.f32 0.0, %v278
    %280 = vdwg.mxu0
    %281 = vmatpush.bf16.msra.mxu0 0
    %282 = vmatpush.bf16.msra.mxu0 0
    %283 = vmatpush.bf16.msra.mxu0 0
    %284 = vmatpush.bf16.msra.mxu0 0
    %285 = vmatpush.bf16.msra.mxu0 0
    %286 = vmatpush.bf16.msra.mxu0 0
    %287 = vmatpush.bf16.msra.mxu0 0
    %288 = vmatpush.bf16.msra.mxu0 %v165
    %289 = vmatmul.bf16.gmra.mxu0 %v140
    %v290 = vpop.f32.mrf.mxu0
    %v291 = vadd.f32 0.0, %v290
    %v292 = vpop.f32.mrf.mxu0
    %v293 = vadd.f32 0.0, %v292
    %294 = vmatmul.bf16.gmra.mxu0 %v143
    %v295 = vpop.f32.mrf.mxu0
    %v296 = vadd.f32 0.0, %v295
    %v297 = vpop.f32.mrf.mxu0
    %v298 = vadd.f32 0.0, %v297
    %299 = vdwg.mxu0
    %v300 = vadd.f32 %v78, %v177
    %v301 = vadd.f32 %v79, %v196
    %v302 = vadd.f32 %v80, %v215
    %v303 = vadd.f32 %v81, %v234
    %v304 = vadd.f32 %v82, %v253
    %v305 = vadd.f32 %v83, %v272
    %v306 = vadd.f32 %v84, %v291
    %v307 = vadd.f32 %v85, %v179
    %v308 = vadd.f32 %v86, %v198
    %v309 = vadd.f32 %v87, %v217
    %v310 = vadd.f32 %v88, %v236
    %v311 = vadd.f32 %v89, %v255
    %v312 = vadd.f32 %v90, %v274
    %v313 = vadd.f32 %v91, %v293
    %v314 = vadd.f32 %v92, %v182
    %v315 = vadd.f32 %v93, %v201
    %v316 = vadd.f32 %v94, %v220
    %v317 = vadd.f32 %v95, %v239
    %v318 = vadd.f32 %v96, %v258
    %v319 = vadd.f32 %v97, %v277
    %v320 = vadd.f32 %v98, %v296
    %v321 = vadd.f32 %v99, %v184
    %v322 = vadd.f32 %v100, %v203
    %v323 = vadd.f32 %v101, %v222
    %v324 = vadd.f32 %v102, %v241
    %v325 = vadd.f32 %v103, %v260
    %v326 = vadd.f32 %v104, %v279
    %v327 = vadd.f32 %v105, %v298
    %328 = vst [vmem:[#allocation2] sm:$0xff] %v300
    %329 = vst [vmem:[#allocation2 + $0x8] sm:$0xff] %v301
    %330 = vst [vmem:[#allocation2 + $0x10] sm:$0xff] %v302
    %331 = vst [vmem:[#allocation2 + $0x18] sm:$0xff] %v303
    %332 = vst [vmem:[#allocation2 + $0x20] sm:$0xff] %v304
    %333 = vst [vmem:[#allocation2 + $0x28] sm:$0xff] %v305
    %334 = vst [vmem:[#allocation2 + $0x30] sm:$0xff] %v306
    %335 = vst [vmem:[#allocation2 + $0x38] sm:$0xff] %v307
    %336 = vst [vmem:[#allocation2 + $0x40] sm:$0xff] %v308
    %337 = vst [vmem:[#allocation2 + $0x48] sm:$0xff] %v309
    %338 = vst [vmem:[#allocation2 + $0x50] sm:$0xff] %v310
    %339 = vst [vmem:[#allocation2 + $0x58] sm:$0xff] %v311
    %340 = vst [vmem:[#allocation2 + $0x60] sm:$0xff] %v312
    %341 = vst [vmem:[#allocation2 + $0x68] sm:$0xff] %v313
    %342 = vst [vmem:[#allocation2 + $0x70] sm:$0xff] %v314
    %343 = vst [vmem:[#allocation2 + $0x78] sm:$0xff] %v315
    %344 = vst [vmem:[#allocation2 + $0x80] sm:$0xff] %v316
    %345 = vst [vmem:[#allocation2 + $0x88] sm:$0xff] %v317
    %346 = vst [vmem:[#allocation2 + $0x90] sm:$0xff] %v318
    %347 = vst [vmem:[#allocation2 + $0x98] sm:$0xff] %v319
    %348 = vst [vmem:[#allocation2 + $0xa0] sm:$0xff] %v320
    %349 = vst [vmem:[#allocation2 + $0xa8] sm:$0xff] %v321
    %350 = vst [vmem:[#allocation2 + $0xb0] sm:$0xff] %v322
    %351 = vst [vmem:[#allocation2 + $0xb8] sm:$0xff] %v323
    %352 = vst [vmem:[#allocation2 + $0xc0] sm:$0xff] %v324
    %353 = vst [vmem:[#allocation2 + $0xc8] sm:$0xff] %v325
    %354 = vst [vmem:[#allocation2 + $0xd0] sm:$0xff] %v326
    %355 = vst [vmem:[#allocation2 + $0xd8] sm:$0xff] %v327
    %v356 = vld [vmem:[#allocation2] sm:$0xff]
    %v357 = vld [vmem:[#allocation2 + $0x8] sm:$0xff]
    %v358 = vld [vmem:[#allocation2 + $0x10] sm:$0xff]
    %v359 = vld [vmem:[#allocation2 + $0x18] sm:$0xff]
    %v360 = vld [vmem:[#allocation2 + $0x20] sm:$0xff]
    %v361 = vld [vmem:[#allocation2 + $0x28] sm:$0xff]
    %v362 = vld [vmem:[#allocation2 + $0x30] sm:$0xff]
    %v363 = vld [vmem:[#allocation2 + $0x38] sm:$0xff]
    %v364 = vld [vmem:[#allocation2 + $0x40] sm:$0xff]
    %v365 = vld [vmem:[#allocation2 + $0x48] sm:$0xff]
    %v366 = vld [vmem:[#allocation2 + $0x50] sm:$0xff]
    %v367 = vld [vmem:[#allocation2 + $0x58] sm:$0xff]
    %v368 = vld [vmem:[#allocation2 + $0x60] sm:$0xff]
    %v369 = vld [vmem:[#allocation2 + $0x68] sm:$0xff]
    %v370 = vld [vmem:[#allocation2 + $0x70] sm:$0xff]
    %v371 = vld [vmem:[#allocation2 + $0x78] sm:$0xff]
    %v372 = vld [vmem:[#allocation2 + $0x80] sm:$0xff]
    %v373 = vld [vmem:[#allocation2 + $0x88] sm:$0xff]
    %v374 = vld [vmem:[#allocation2 + $0x90] sm:$0xff]
    %v375 = vld [vmem:[#allocation2 + $0x98] sm:$0xff]
    %v376 = vld [vmem:[#allocation2 + $0xa0] sm:$0xff]
    %v377 = vld [vmem:[#allocation2 + $0xa8] sm:$0xff]
    %v378 = vld [vmem:[#allocation2 + $0xb0] sm:$0xff]
    %v379 = vld [vmem:[#allocation2 + $0xb8] sm:$0xff]
    %v380 = vld [vmem:[#allocation2 + $0xc0] sm:$0xff]
    %v381 = vld [vmem:[#allocation2 + $0xc8] sm:$0xff]
    %v382 = vld [vmem:[#allocation2 + $0xd0] sm:$0xff]
    %v383 = vld [vmem:[#allocation2 + $0xd8] sm:$0xff]
    %s384 = scalar_lea.vmem %s1, 16
    %v385 = vld [vmem:[%s384] sm:$0xf]
    %v386 = vld [vmem:[%s384 + $0x4] sm:$0xf]
    %v387 = vld [vmem:[%s384 + $0x8] sm:$0xf]
    %v388 = vld [vmem:[%s384 + $0xc] sm:$0xf]
    %v393 = vunpack.c.l.b16 %v385
    %v394 = vunpack.c.l.b16 %v386
    %v395 = vunpack.c.l.b16 %v387
    %v396 = vunpack.c.l.b16 %v388
    %v397 = vpack.c.b16 %v394, %v393
    %v398 = vpack.c.b16 %v396, %v395
    %v399 = vunpack.c.h.b16 %v25
    %v400 = vpack.c.b16 %v399, %v399
    %401 = vrot.lane.b32.xlu0 %v131, 127
    %v402 = vpop.permute.xlu0 %401
    %403 = vrot.lane.b32.xlu0 %v132, 127
    %v404 = vpop.permute.xlu0 %403
    %405 = vrot.lane.b32.xlu0 %v133, 127
    %v406 = vpop.permute.xlu0 %405
    %407 = vrot.lane.b32.xlu0 %v134, 127
    %v408 = vpop.permute.xlu0 %407
    %409 = vrot.lane.b32.xlu0 %v135, 127
    %v410 = vpop.permute.xlu0 %409
    %411 = vrot.lane.b32.xlu0 %v136, 127
    %v412 = vpop.permute.xlu0 %411
    %413 = vrot.lane.b32.xlu0 %v137, 127
    %v414 = vpop.permute.xlu0 %413
    %415 = vrot.lane.b32.xlu0 %v400, 127
    %v416 = vpop.permute.xlu0 %415
    %vm417 = vcmask 1039360
    %v418 = vsel %vm417, %v402, %v404
    %v419 = vsel %vm417, %v404, %v406
    %v420 = vsel %vm417, %v406, %v408
    %v421 = vsel %vm417, %v408, %v410
    %v422 = vsel %vm417, %v410, %v412
    %v423 = vsel %vm417, %v412, %v414
    %v424 = vsel %vm417, %v414, %v416
    %v426 = vsel %vm138, %v397, 0
    %v429 = vsel %vm138, %v398, 0
    %v432 = vsel %vm145, %v418, 0
    %v435 = vsel %vm145, %v419, 0
    %v438 = vsel %vm145, %v420, 0
    %v441 = vsel %vm145, %v421, 0
    %v444 = vsel %vm145, %v422, 0
    %v447 = vsel %vm145, %v423, 0
    %v450 = vsel %vm145, %v424, 0
    %452 = vmatpush.bf16.msra.mxu0 0
    %453 = vmatpush.bf16.msra.mxu0 0
    %454 = vmatpush.bf16.msra.mxu0 0
    %455 = vmatpush.bf16.msra.mxu0 0
    %456 = vmatpush.bf16.msra.mxu0 0
    %457 = vmatpush.bf16.msra.mxu0 0
    %458 = vmatpush.bf16.msra.mxu0 0
    %459 = vmatpush.bf16.msra.mxu0 %v432
    %460 = vmatmul.bf16.gmra.mxu0 %v426
    %v461 = vpop.f32.mrf.mxu0
    %v462 = vadd.f32 0.0, %v461
    %v463 = vpop.f32.mrf.mxu0
    %v464 = vadd.f32 0.0, %v463
    %465 = vmatmul.bf16.gmra.mxu0 %v429
    %v466 = vpop.f32.mrf.mxu0
    %v467 = vadd.f32 0.0, %v466
    %v468 = vpop.f32.mrf.mxu0
    %v469 = vadd.f32 0.0, %v468
    %470 = vdwg.mxu0
    %471 = vmatpush.bf16.msra.mxu0 0
    %472 = vmatpush.bf16.msra.mxu0 0
    %473 = vmatpush.bf16.msra.mxu0 0
    %474 = vmatpush.bf16.msra.mxu0 0
    %475 = vmatpush.bf16.msra.mxu0 0
    %476 = vmatpush.bf16.msra.mxu0 0
    %477 = vmatpush.bf16.msra.mxu0 0
    %478 = vmatpush.bf16.msra.mxu0 %v435
    %479 = vmatmul.bf16.gmra.mxu0 %v426
    %v480 = vpop.f32.mrf.mxu0
    %v481 = vadd.f32 0.0, %v480
    %v482 = vpop.f32.mrf.mxu0
    %v483 = vadd.f32 0.0, %v482
    %484 = vmatmul.bf16.gmra.mxu0 %v429
    %v485 = vpop.f32.mrf.mxu0
    %v486 = vadd.f32 0.0, %v485
    %v487 = vpop.f32.mrf.mxu0
    %v488 = vadd.f32 0.0, %v487
    %489 = vdwg.mxu0
    %490 = vmatpush.bf16.msra.mxu0 0
    %491 = vmatpush.bf16.msra.mxu0 0
    %492 = vmatpush.bf16.msra.mxu0 0
    %493 = vmatpush.bf16.msra.mxu0 0
    %494 = vmatpush.bf16.msra.mxu0 0
    %495 = vmatpush.bf16.msra.mxu0 0
    %496 = vmatpush.bf16.msra.mxu0 0
    %497 = vmatpush.bf16.msra.mxu0 %v438
    %498 = vmatmul.bf16.gmra.mxu0 %v426
    %v499 = vpop.f32.mrf.mxu0
    %v500 = vadd.f32 0.0, %v499
    %v501 = vpop.f32.mrf.mxu0
    %v502 = vadd.f32 0.0, %v501
    %503 = vmatmul.bf16.gmra.mxu0 %v429
    %v504 = vpop.f32.mrf.mxu0
    %v505 = vadd.f32 0.0, %v504
    %v506 = vpop.f32.mrf.mxu0
    %v507 = vadd.f32 0.0, %v506
    %508 = vdwg.mxu0
    %509 = vmatpush.bf16.msra.mxu0 0
    %510 = vmatpush.bf16.msra.mxu0 0
    %511 = vmatpush.bf16.msra.mxu0 0
    %512 = vmatpush.bf16.msra.mxu0 0
    %513 = vmatpush.bf16.msra.mxu0 0
    %514 = vmatpush.bf16.msra.mxu0 0
    %515 = vmatpush.bf16.msra.mxu0 0
    %516 = vmatpush.bf16.msra.mxu0 %v441
    %517 = vmatmul.bf16.gmra.mxu0 %v426
    %v518 = vpop.f32.mrf.mxu0
    %v519 = vadd.f32 0.0, %v518
    %v520 = vpop.f32.mrf.mxu0
    %v521 = vadd.f32 0.0, %v520
    %522 = vmatmul.bf16.gmra.mxu0 %v429
    %v523 = vpop.f32.mrf.mxu0
    %v524 = vadd.f32 0.0, %v523
    %v525 = vpop.f32.mrf.mxu0
    %v526 = vadd.f32 0.0, %v525
    %527 = vdwg.mxu0
    %528 = vmatpush.bf16.msra.mxu0 0
    %529 = vmatpush.bf16.msra.mxu0 0
    %530 = vmatpush.bf16.msra.mxu0 0
    %531 = vmatpush.bf16.msra.mxu0 0
    %532 = vmatpush.bf16.msra.mxu0 0
    %533 = vmatpush.bf16.msra.mxu0 0
    %534 = vmatpush.bf16.msra.mxu0 0
    %535 = vmatpush.bf16.msra.mxu0 %v444
    %536 = vmatmul.bf16.gmra.mxu0 %v426
    %v537 = vpop.f32.mrf.mxu0
    %v538 = vadd.f32 0.0, %v537
    %v539 = vpop.f32.mrf.mxu0
    %v540 = vadd.f32 0.0, %v539
    %541 = vmatmul.bf16.gmra.mxu0 %v429
    %v542 = vpop.f32.mrf.mxu0
    %v543 = vadd.f32 0.0, %v542
    %v544 = vpop.f32.mrf.mxu0
    %v545 = vadd.f32 0.0, %v544
    %546 = vdwg.mxu0
    %547 = vmatpush.bf16.msra.mxu0 0
    %548 = vmatpush.bf16.msra.mxu0 0
    %549 = vmatpush.bf16.msra.mxu0 0
    %550 = vmatpush.bf16.msra.mxu0 0
    %551 = vmatpush.bf16.msra.mxu0 0
    %552 = vmatpush.bf16.msra.mxu0 0
    %553 = vmatpush.bf16.msra.mxu0 0
    %554 = vmatpush.bf16.msra.mxu0 %v447
    %555 = vmatmul.bf16.gmra.mxu0 %v426
    %v556 = vpop.f32.mrf.mxu0
    %v557 = vadd.f32 0.0, %v556
    %v558 = vpop.f32.mrf.mxu0
    %v559 = vadd.f32 0.0, %v558
    %560 = vmatmul.bf16.gmra.mxu0 %v429
    %v561 = vpop.f32.mrf.mxu0
    %v562 = vadd.f32 0.0, %v561
    %v563 = vpop.f32.mrf.mxu0
    %v564 = vadd.f32 0.0, %v563
    %565 = vdwg.mxu0
    %566 = vmatpush.bf16.msra.mxu0 0
    %567 = vmatpush.bf16.msra.mxu0 0
    %568 = vmatpush.bf16.msra.mxu0 0
    %569 = vmatpush.bf16.msra.mxu0 0
    %570 = vmatpush.bf16.msra.mxu0 0
    %571 = vmatpush.bf16.msra.mxu0 0
    %572 = vmatpush.bf16.msra.mxu0 0
    %573 = vmatpush.bf16.msra.mxu0 %v450
    %574 = vmatmul.bf16.gmra.mxu0 %v426
    %v575 = vpop.f32.mrf.mxu0
    %v576 = vadd.f32 0.0, %v575
    %v577 = vpop.f32.mrf.mxu0
    %v578 = vadd.f32 0.0, %v577
    %579 = vmatmul.bf16.gmra.mxu0 %v429
    %v580 = vpop.f32.mrf.mxu0
    %v581 = vadd.f32 0.0, %v580
    %v582 = vpop.f32.mrf.mxu0
    %v583 = vadd.f32 0.0, %v582
    %584 = vdwg.mxu0
    %v585 = vadd.f32 %v356, %v462
    %v586 = vadd.f32 %v357, %v481
    %v587 = vadd.f32 %v358, %v500
    %v588 = vadd.f32 %v359, %v519
    %v589 = vadd.f32 %v360, %v538
    %v590 = vadd.f32 %v361, %v557
    %v591 = vadd.f32 %v362, %v576
    %v592 = vadd.f32 %v363, %v464
    %v593 = vadd.f32 %v364, %v483
    %v594 = vadd.f32 %v365, %v502
    %v595 = vadd.f32 %v366, %v521
    %v596 = vadd.f32 %v367, %v540
    %v597 = vadd.f32 %v368, %v559
    %v598 = vadd.f32 %v369, %v578
    %v599 = vadd.f32 %v370, %v467
    %v600 = vadd.f32 %v371, %v486
    %v601 = vadd.f32 %v372, %v505
    %v602 = vadd.f32 %v373, %v524
    %v603 = vadd.f32 %v374, %v543
    %v604 = vadd.f32 %v375, %v562
    %v605 = vadd.f32 %v376, %v581
    %v606 = vadd.f32 %v377, %v469
    %v607 = vadd.f32 %v378, %v488
    %v608 = vadd.f32 %v379, %v507
    %v609 = vadd.f32 %v380, %v526
    %v610 = vadd.f32 %v381, %v545
    %v611 = vadd.f32 %v382, %v564
    %v612 = vadd.f32 %v383, %v583
    %613 = vst [vmem:[#allocation2] sm:$0xff] %v585
    %614 = vst [vmem:[#allocation2 + $0x8] sm:$0xff] %v586
    %615 = vst [vmem:[#allocation2 + $0x10] sm:$0xff] %v587
    %616 = vst [vmem:[#allocation2 + $0x18] sm:$0xff] %v588
    %617 = vst [vmem:[#allocation2 + $0x20] sm:$0xff] %v589
    %618 = vst [vmem:[#allocation2 + $0x28] sm:$0xff] %v590
    %619 = vst [vmem:[#allocation2 + $0x30] sm:$0xff] %v591
    %620 = vst [vmem:[#allocation2 + $0x38] sm:$0xff] %v592
    %621 = vst [vmem:[#allocation2 + $0x40] sm:$0xff] %v593
    %622 = vst [vmem:[#allocation2 + $0x48] sm:$0xff] %v594
    %623 = vst [vmem:[#allocation2 + $0x50] sm:$0xff] %v595
    %624 = vst [vmem:[#allocation2 + $0x58] sm:$0xff] %v596
    %625 = vst [vmem:[#allocation2 + $0x60] sm:$0xff] %v597
    %626 = vst [vmem:[#allocation2 + $0x68] sm:$0xff] %v598
    %627 = vst [vmem:[#allocation2 + $0x70] sm:$0xff] %v599
    %628 = vst [vmem:[#allocation2 + $0x78] sm:$0xff] %v600
    %629 = vst [vmem:[#allocation2 + $0x80] sm:$0xff] %v601
    %630 = vst [vmem:[#allocation2 + $0x88] sm:$0xff] %v602
    %631 = vst [vmem:[#allocation2 + $0x90] sm:$0xff] %v603
    %632 = vst [vmem:[#allocation2 + $0x98] sm:$0xff] %v604
    %633 = vst [vmem:[#allocation2 + $0xa0] sm:$0xff] %v605
    %634 = vst [vmem:[#allocation2 + $0xa8] sm:$0xff] %v606
    %635 = vst [vmem:[#allocation2 + $0xb0] sm:$0xff] %v607
    %636 = vst [vmem:[#allocation2 + $0xb8] sm:$0xff] %v608
    %637 = vst [vmem:[#allocation2 + $0xc0] sm:$0xff] %v609
    %638 = vst [vmem:[#allocation2 + $0xc8] sm:$0xff] %v610
    %639 = vst [vmem:[#allocation2 + $0xd0] sm:$0xff] %v611
    %640 = vst [vmem:[#allocation2 + $0xd8] sm:$0xff] %v612
    %v641 = vld [vmem:[#allocation2] sm:$0xff]
    %v642 = vld [vmem:[#allocation2 + $0x8] sm:$0xff]
    %v643 = vld [vmem:[#allocation2 + $0x10] sm:$0xff]
    %v644 = vld [vmem:[#allocation2 + $0x18] sm:$0xff]
    %v645 = vld [vmem:[#allocation2 + $0x20] sm:$0xff]
    %v646 = vld [vmem:[#allocation2 + $0x28] sm:$0xff]
    %v647 = vld [vmem:[#allocation2 + $0x30] sm:$0xff]
    %v648 = vld [vmem:[#allocation2 + $0x38] sm:$0xff]
    %v649 = vld [vmem:[#allocation2 + $0x40] sm:$0xff]
    %v650 = vld [vmem:[#allocation2 + $0x48] sm:$0xff]
    %v651 = vld [vmem:[#allocation2 + $0x50] sm:$0xff]
    %v652 = vld [vmem:[#allocation2 + $0x58] sm:$0xff]
    %v653 = vld [vmem:[#allocation2 + $0x60] sm:$0xff]
    %v654 = vld [vmem:[#allocation2 + $0x68] sm:$0xff]
    %v655 = vld [vmem:[#allocation2 + $0x70] sm:$0xff]
    %v656 = vld [vmem:[#allocation2 + $0x78] sm:$0xff]
    %v657 = vld [vmem:[#allocation2 + $0x80] sm:$0xff]
    %v658 = vld [vmem:[#allocation2 + $0x88] sm:$0xff]
    %v659 = vld [vmem:[#allocation2 + $0x90] sm:$0xff]
    %v660 = vld [vmem:[#allocation2 + $0x98] sm:$0xff]
    %v661 = vld [vmem:[#allocation2 + $0xa0] sm:$0xff]
    %v662 = vld [vmem:[#allocation2 + $0xa8] sm:$0xff]
    %v663 = vld [vmem:[#allocation2 + $0xb0] sm:$0xff]
    %v664 = vld [vmem:[#allocation2 + $0xb8] sm:$0xff]
    %v665 = vld [vmem:[#allocation2 + $0xc0] sm:$0xff]
    %v666 = vld [vmem:[#allocation2 + $0xc8] sm:$0xff]
    %v667 = vld [vmem:[#allocation2 + $0xd0] sm:$0xff]
    %v668 = vld [vmem:[#allocation2 + $0xd8] sm:$0xff]
    %s669 = scalar_lea.vmem %s1, 32
    %v670 = vld [vmem:[%s669] sm:$0xf]
    %v671 = vld [vmem:[%s669 + $0x4] sm:$0xf]
    %v672 = vld [vmem:[%s669 + $0x8] sm:$0xf]
    %v673 = vld [vmem:[%s669 + $0xc] sm:$0xf]
    %v678 = vunpack.c.l.b16 %v670
    %v679 = vunpack.c.l.b16 %v671
    %v680 = vunpack.c.l.b16 %v672
    %v681 = vunpack.c.l.b16 %v673
    %v682 = vpack.c.b16 %v679, %v678
    %v683 = vpack.c.b16 %v681, %v680
    %684 = vrot.lane.b32.xlu0 %v131, 126
    %v685 = vpop.permute.xlu0 %684
    %686 = vrot.lane.b32.xlu0 %v132, 126
    %v687 = vpop.permute.xlu0 %686
    %688 = vrot.lane.b32.xlu0 %v133, 126
    %v689 = vpop.permute.xlu0 %688
    %690 = vrot.lane.b32.xlu0 %v134, 126
    %v691 = vpop.permute.xlu0 %690
    %692 = vrot.lane.b32.xlu0 %v135, 126
    %v693 = vpop.permute.xlu0 %692
    %694 = vrot.lane.b32.xlu0 %v136, 126
    %v695 = vpop.permute.xlu0 %694
    %696 = vrot.lane.b32.xlu0 %v137, 126
    %v697 = vpop.permute.xlu0 %696
    %698 = vrot.lane.b32.xlu0 %v400, 126
    %v699 = vpop.permute.xlu0 %698
    %vm700 = vcmask 1031168
    %v701 = vsel %vm700, %v685, %v687
    %v702 = vsel %vm700, %v687, %v689
    %v703 = vsel %vm700, %v689, %v691
    %v704 = vsel %vm700, %v691, %v693
    %v705 = vsel %vm700, %v693, %v695
    %v706 = vsel %vm700, %v695, %v697
    %v707 = vsel %vm700, %v697, %v699
    %v709 = vsel %vm138, %v682, 0
    %v712 = vsel %vm138, %v683, 0
    %v715 = vsel %vm145, %v701, 0
    %v718 = vsel %vm145, %v702, 0
    %v721 = vsel %vm145, %v703, 0
    %v724 = vsel %vm145, %v704, 0
    %v727 = vsel %vm145, %v705, 0
    %v730 = vsel %vm145, %v706, 0
    %v733 = vsel %vm145, %v707, 0
    %735 = vmatpush.bf16.msra.mxu0 0
    %736 = vmatpush.bf16.msra.mxu0 0
    %737 = vmatpush.bf16.msra.mxu0 0
    %738 = vmatpush.bf16.msra.mxu0 0
    %739 = vmatpush.bf16.msra.mxu0 0
    %740 = vmatpush.bf16.msra.mxu0 0
    %741 = vmatpush.bf16.msra.mxu0 0
    %742 = vmatpush.bf16.msra.mxu0 %v715
    %743 = vmatmul.bf16.gmra.mxu0 %v709
    %v744 = vpop.f32.mrf.mxu0
    %v745 = vadd.f32 0.0, %v744
    %v746 = vpop.f32.mrf.mxu0
    %v747 = vadd.f32 0.0, %v746
    %748 = vmatmul.bf16.gmra.mxu0 %v712
    %v749 = vpop.f32.mrf.mxu0
    %v750 = vadd.f32 0.0, %v749
    %v751 = vpop.f32.mrf.mxu0
    %v752 = vadd.f32 0.0, %v751
    %753 = vdwg.mxu0
    %754 = vmatpush.bf16.msra.mxu0 0
    %755 = vmatpush.bf16.msra.mxu0 0
    %756 = vmatpush.bf16.msra.mxu0 0
    %757 = vmatpush.bf16.msra.mxu0 0
    %758 = vmatpush.bf16.msra.mxu0 0
    %759 = vmatpush.bf16.msra.mxu0 0
    %760 = vmatpush.bf16.msra.mxu0 0
    %761 = vmatpush.bf16.msra.mxu0 %v718
    %762 = vmatmul.bf16.gmra.mxu0 %v709
    %v763 = vpop.f32.mrf.mxu0
    %v764 = vadd.f32 0.0, %v763
    %v765 = vpop.f32.mrf.mxu0
    %v766 = vadd.f32 0.0, %v765
    %767 = vmatmul.bf16.gmra.mxu0 %v712
    %v768 = vpop.f32.mrf.mxu0
    %v769 = vadd.f32 0.0, %v768
    %v770 = vpop.f32.mrf.mxu0
    %v771 = vadd.f32 0.0, %v770
    %772 = vdwg.mxu0
    %773 = vmatpush.bf16.msra.mxu0 0
    %774 = vmatpush.bf16.msra.mxu0 0
    %775 = vmatpush.bf16.msra.mxu0 0
    %776 = vmatpush.bf16.msra.mxu0 0
    %777 = vmatpush.bf16.msra.mxu0 0
    %778 = vmatpush.bf16.msra.mxu0 0
    %779 = vmatpush.bf16.msra.mxu0 0
    %780 = vmatpush.bf16.msra.mxu0 %v721
    %781 = vmatmul.bf16.gmra.mxu0 %v709
    %v782 = vpop.f32.mrf.mxu0
    %v783 = vadd.f32 0.0, %v782
    %v784 = vpop.f32.mrf.mxu0
    %v785 = vadd.f32 0.0, %v784
    %786 = vmatmul.bf16.gmra.mxu0 %v712
    %v787 = vpop.f32.mrf.mxu0
    %v788 = vadd.f32 0.0, %v787
    %v789 = vpop.f32.mrf.mxu0
    %v790 = vadd.f32 0.0, %v789
    %791 = vdwg.mxu0
    %792 = vmatpush.bf16.msra.mxu0 0
    %793 = vmatpush.bf16.msra.mxu0 0
    %794 = vmatpush.bf16.msra.mxu0 0
    %795 = vmatpush.bf16.msra.mxu0 0
    %796 = vmatpush.bf16.msra.mxu0 0
    %797 = vmatpush.bf16.msra.mxu0 0
    %798 = vmatpush.bf16.msra.mxu0 0
    %799 = vmatpush.bf16.msra.mxu0 %v724
    %800 = vmatmul.bf16.gmra.mxu0 %v709
    %v801 = vpop.f32.mrf.mxu0
    %v802 = vadd.f32 0.0, %v801
    %v803 = vpop.f32.mrf.mxu0
    %v804 = vadd.f32 0.0, %v803
    %805 = vmatmul.bf16.gmra.mxu0 %v712
    %v806 = vpop.f32.mrf.mxu0
    %v807 = vadd.f32 0.0, %v806
    %v808 = vpop.f32.mrf.mxu0
    %v809 = vadd.f32 0.0, %v808
    %810 = vdwg.mxu0
    %811 = vmatpush.bf16.msra.mxu0 0
    %812 = vmatpush.bf16.msra.mxu0 0
    %813 = vmatpush.bf16.msra.mxu0 0
    %814 = vmatpush.bf16.msra.mxu0 0
    %815 = vmatpush.bf16.msra.mxu0 0
    %816 = vmatpush.bf16.msra.mxu0 0
    %817 = vmatpush.bf16.msra.mxu0 0
    %818 = vmatpush.bf16.msra.mxu0 %v727
    %819 = vmatmul.bf16.gmra.mxu0 %v709
    %v820 = vpop.f32.mrf.mxu0
    %v821 = vadd.f32 0.0, %v820
    %v822 = vpop.f32.mrf.mxu0
    %v823 = vadd.f32 0.0, %v822
    %824 = vmatmul.bf16.gmra.mxu0 %v712
    %v825 = vpop.f32.mrf.mxu0
    %v826 = vadd.f32 0.0, %v825
    %v827 = vpop.f32.mrf.mxu0
    %v828 = vadd.f32 0.0, %v827
    %829 = vdwg.mxu0
    %830 = vmatpush.bf16.msra.mxu0 0
    %831 = vmatpush.bf16.msra.mxu0 0
    %832 = vmatpush.bf16.msra.mxu0 0
    %833 = vmatpush.bf16.msra.mxu0 0
    %834 = vmatpush.bf16.msra.mxu0 0
    %835 = vmatpush.bf16.msra.mxu0 0
    %836 = vmatpush.bf16.msra.mxu0 0
    %837 = vmatpush.bf16.msra.mxu0 %v730
    %838 = vmatmul.bf16.gmra.mxu0 %v709
    %v839 = vpop.f32.mrf.mxu0
    %v840 = vadd.f32 0.0, %v839
    %v841 = vpop.f32.mrf.mxu0
    %v842 = vadd.f32 0.0, %v841
    %843 = vmatmul.bf16.gmra.mxu0 %v712
    %v844 = vpop.f32.mrf.mxu0
    %v845 = vadd.f32 0.0, %v844
    %v846 = vpop.f32.mrf.mxu0
    %v847 = vadd.f32 0.0, %v846
    %848 = vdwg.mxu0
    %849 = vmatpush.bf16.msra.mxu0 0
    %850 = vmatpush.bf16.msra.mxu0 0
    %851 = vmatpush.bf16.msra.mxu0 0
    %852 = vmatpush.bf16.msra.mxu0 0
    %853 = vmatpush.bf16.msra.mxu0 0
    %854 = vmatpush.bf16.msra.mxu0 0
    %855 = vmatpush.bf16.msra.mxu0 0
    %856 = vmatpush.bf16.msra.mxu0 %v733
    %857 = vmatmul.bf16.gmra.mxu0 %v709
    %v858 = vpop.f32.mrf.mxu0
    %v859 = vadd.f32 0.0, %v858
    %v860 = vpop.f32.mrf.mxu0
    %v861 = vadd.f32 0.0, %v860
    %862 = vmatmul.bf16.gmra.mxu0 %v712
    %v863 = vpop.f32.mrf.mxu0
    %v864 = vadd.f32 0.0, %v863
    %v865 = vpop.f32.mrf.mxu0
    %v866 = vadd.f32 0.0, %v865
    %867 = vdwg.mxu0
    %v868 = vadd.f32 %v641, %v745
    %v869 = vadd.f32 %v642, %v764
    %v870 = vadd.f32 %v643, %v783
    %v871 = vadd.f32 %v644, %v802
    %v872 = vadd.f32 %v645, %v821
    %v873 = vadd.f32 %v646, %v840
    %v874 = vadd.f32 %v647, %v859
    %v875 = vadd.f32 %v648, %v747
    %v876 = vadd.f32 %v649, %v766
    %v877 = vadd.f32 %v650, %v785
    %v878 = vadd.f32 %v651, %v804
    %v879 = vadd.f32 %v652, %v823
    %v880 = vadd.f32 %v653, %v842
    %v881 = vadd.f32 %v654, %v861
    %v882 = vadd.f32 %v655, %v750
    %v883 = vadd.f32 %v656, %v769
    %v884 = vadd.f32 %v657, %v788
    %v885 = vadd.f32 %v658, %v807
    %v886 = vadd.f32 %v659, %v826
    %v887 = vadd.f32 %v660, %v845
    %v888 = vadd.f32 %v661, %v864
    %v889 = vadd.f32 %v662, %v752
    %v890 = vadd.f32 %v663, %v771
    %v891 = vadd.f32 %v664, %v790
    %v892 = vadd.f32 %v665, %v809
    %v893 = vadd.f32 %v666, %v828
    %v894 = vadd.f32 %v667, %v847
    %v895 = vadd.f32 %v668, %v866
    %896 = vst [vmem:[#allocation2] sm:$0xff] %v868
    %897 = vst [vmem:[#allocation2 + $0x8] sm:$0xff] %v869
    %898 = vst [vmem:[#allocation2 + $0x10] sm:$0xff] %v870
    %899 = vst [vmem:[#allocation2 + $0x18] sm:$0xff] %v871
    %900 = vst [vmem:[#allocation2 + $0x20] sm:$0xff] %v872
    %901 = vst [vmem:[#allocation2 + $0x28] sm:$0xff] %v873
    %902 = vst [vmem:[#allocation2 + $0x30] sm:$0xff] %v874
    %903 = vst [vmem:[#allocation2 + $0x38] sm:$0xff] %v875
    %904 = vst [vmem:[#allocation2 + $0x40] sm:$0xff] %v876
    %905 = vst [vmem:[#allocation2 + $0x48] sm:$0xff] %v877
    %906 = vst [vmem:[#allocation2 + $0x50] sm:$0xff] %v878
    %907 = vst [vmem:[#allocation2 + $0x58] sm:$0xff] %v879
    %908 = vst [vmem:[#allocation2 + $0x60] sm:$0xff] %v880
    %909 = vst [vmem:[#allocation2 + $0x68] sm:$0xff] %v881
    %910 = vst [vmem:[#allocation2 + $0x70] sm:$0xff] %v882
    %911 = vst [vmem:[#allocation2 + $0x78] sm:$0xff] %v883
    %912 = vst [vmem:[#allocation2 + $0x80] sm:$0xff] %v884
    %913 = vst [vmem:[#allocation2 + $0x88] sm:$0xff] %v885
    %914 = vst [vmem:[#allocation2 + $0x90] sm:$0xff] %v886
    %915 = vst [vmem:[#allocation2 + $0x98] sm:$0xff] %v887
    %916 = vst [vmem:[#allocation2 + $0xa0] sm:$0xff] %v888
    %917 = vst [vmem:[#allocation2 + $0xa8] sm:$0xff] %v889
    %918 = vst [vmem:[#allocation2 + $0xb0] sm:$0xff] %v890
    %919 = vst [vmem:[#allocation2 + $0xb8] sm:$0xff] %v891
    %920 = vst [vmem:[#allocation2 + $0xc0] sm:$0xff] %v892
    %921 = vst [vmem:[#allocation2 + $0xc8] sm:$0xff] %v893
    %922 = vst [vmem:[#allocation2 + $0xd0] sm:$0xff] %v894
    %923 = vst [vmem:[#allocation2 + $0xd8] sm:$0xff] %v895
    %v924 = vld [vmem:[#allocation2] sm:$0xff]
    %v925 = vld [vmem:[#allocation2 + $0x8] sm:$0xff]
    %v926 = vld [vmem:[#allocation2 + $0x10] sm:$0xff]
    %v927 = vld [vmem:[#allocation2 + $0x18] sm:$0xff]
    %v928 = vld [vmem:[#allocation2 + $0x20] sm:$0xff]
    %v929 = vld [vmem:[#allocation2 + $0x28] sm:$0xff]
    %v930 = vld [vmem:[#allocation2 + $0x30] sm:$0xff]
    %v931 = vld [vmem:[#allocation2 + $0x38] sm:$0xff]
    %v932 = vld [vmem:[#allocation2 + $0x40] sm:$0xff]
    %v933 = vld [vmem:[#allocation2 + $0x48] sm:$0xff]
    %v934 = vld [vmem:[#allocation2 + $0x50] sm:$0xff]
    %v935 = vld [vmem:[#allocation2 + $0x58] sm:$0xff]
    %v936 = vld [vmem:[#allocation2 + $0x60] sm:$0xff]
    %v937 = vld [vmem:[#allocation2 + $0x68] sm:$0xff]
    %v938 = vld [vmem:[#allocation2 + $0x70] sm:$0xff]
    %v939 = vld [vmem:[#allocation2 + $0x78] sm:$0xff]
    %v940 = vld [vmem:[#allocation2 + $0x80] sm:$0xff]
    %v941 = vld [vmem:[#allocation2 + $0x88] sm:$0xff]
    %v942 = vld [vmem:[#allocation2 + $0x90] sm:$0xff]
    %v943 = vld [vmem:[#allocation2 + $0x98] sm:$0xff]
    %v944 = vld [vmem:[#allocation2 + $0xa0] sm:$0xff]
    %v945 = vld [vmem:[#allocation2 + $0xa8] sm:$0xff]
    %v946 = vld [vmem:[#allocation2 + $0xb0] sm:$0xff]
    %v947 = vld [vmem:[#allocation2 + $0xb8] sm:$0xff]
    %v948 = vld [vmem:[#allocation2 + $0xc0] sm:$0xff]
    %v949 = vld [vmem:[#allocation2 + $0xc8] sm:$0xff]
    %v950 = vld [vmem:[#allocation2 + $0xd0] sm:$0xff]
    %v951 = vld [vmem:[#allocation2 + $0xd8] sm:$0xff]
    %s952 = scalar_lea.vmem %s1, 48
    %v953 = vld [vmem:[%s952] sm:$0xf]
    %v954 = vld [vmem:[%s952 + $0x4] sm:$0xf]
    %v955 = vld [vmem:[%s952 + $0x8] sm:$0xf]
    %v956 = vld [vmem:[%s952 + $0xc] sm:$0xf]
    %v961 = vunpack.c.l.b16 %v953
    %v962 = vunpack.c.l.b16 %v954
    %v963 = vunpack.c.l.b16 %v955
    %v964 = vunpack.c.l.b16 %v956
    %v965 = vpack.c.b16 %v962, %v961
    %v966 = vpack.c.b16 %v964, %v963
    %967 = vrot.lane.b32.xlu0 %v131, 110
    %v968 = vpop.permute.xlu0 %967
    %969 = vrot.lane.b32.xlu0 %v132, 110
    %v970 = vpop.permute.xlu0 %969
    %971 = vrot.lane.b32.xlu0 %v133, 110
    %v972 = vpop.permute.xlu0 %971
    %973 = vrot.lane.b32.xlu0 %v134, 110
    %v974 = vpop.permute.xlu0 %973
    %975 = vrot.lane.b32.xlu0 %v135, 110
    %v976 = vpop.permute.xlu0 %975
    %977 = vrot.lane.b32.xlu0 %v136, 110
    %v978 = vpop.permute.xlu0 %977
    %979 = vrot.lane.b32.xlu0 %v137, 110
    %v980 = vpop.permute.xlu0 %979
    %981 = vrot.lane.b32.xlu0 %v400, 110
    %v982 = vpop.permute.xlu0 %981
    %vm983 = vcmask 900096
    %v984 = vsel %vm983, %v968, %v970
    %v985 = vsel %vm983, %v970, %v972
    %v986 = vsel %vm983, %v972, %v974
    %v987 = vsel %vm983, %v974, %v976
    %v988 = vsel %vm983, %v976, %v978
    %v989 = vsel %vm983, %v978, %v980
    %v990 = vsel %vm983, %v980, %v982
    %v992 = vsel %vm138, %v965, 0
    %v995 = vsel %vm138, %v966, 0
    %v998 = vsel %vm145, %v984, 0
    %v1001 = vsel %vm145, %v985, 0
    %v1004 = vsel %vm145, %v986, 0
    %v1007 = vsel %vm145, %v987, 0
    %v1010 = vsel %vm145, %v988, 0
    %v1013 = vsel %vm145, %v989, 0
    %v1016 = vsel %vm145, %v990, 0
    %1018 = vmatpush.bf16.msra.mxu0 0
    %1019 = vmatpush.bf16.msra.mxu0 0
    %1020 = vmatpush.bf16.msra.mxu0 0
    %1021 = vmatpush.bf16.msra.mxu0 0
    %1022 = vmatpush.bf16.msra.mxu0 0
    %1023 = vmatpush.bf16.msra.mxu0 0
    %1024 = vmatpush.bf16.msra.mxu0 0
    %1025 = vmatpush.bf16.msra.mxu0 %v998
    %1026 = vmatmul.bf16.gmra.mxu0 %v992
    %v1027 = vpop.f32.mrf.mxu0
    %v1028 = vadd.f32 0.0, %v1027
    %v1029 = vpop.f32.mrf.mxu0
    %v1030 = vadd.f32 0.0, %v1029
    %1031 = vmatmul.bf16.gmra.mxu0 %v995
    %v1032 = vpop.f32.mrf.mxu0
    %v1033 = vadd.f32 0.0, %v1032
    %v1034 = vpop.f32.mrf.mxu0
    %v1035 = vadd.f32 0.0, %v1034
    %1036 = vdwg.mxu0
    %1037 = vmatpush.bf16.msra.mxu0 0
    %1038 = vmatpush.bf16.msra.mxu0 0
    %1039 = vmatpush.bf16.msra.mxu0 0
    %1040 = vmatpush.bf16.msra.mxu0 0
    %1041 = vmatpush.bf16.msra.mxu0 0
    %1042 = vmatpush.bf16.msra.mxu0 0
    %1043 = vmatpush.bf16.msra.mxu0 0
    %1044 = vmatpush.bf16.msra.mxu0 %v1001
    %1045 = vmatmul.bf16.gmra.mxu0 %v992
    %v1046 = vpop.f32.mrf.mxu0
    %v1047 = vadd.f32 0.0, %v1046
    %v1048 = vpop.f32.mrf.mxu0
    %v1049 = vadd.f32 0.0, %v1048
    %1050 = vmatmul.bf16.gmra.mxu0 %v995
    %v1051 = vpop.f32.mrf.mxu0
    %v1052 = vadd.f32 0.0, %v1051
    %v1053 = vpop.f32.mrf.mxu0
    %v1054 = vadd.f32 0.0, %v1053
    %1055 = vdwg.mxu0
    %1056 = vmatpush.bf16.msra.mxu0 0
    %1057 = vmatpush.bf16.msra.mxu0 0
    %1058 = vmatpush.bf16.msra.mxu0 0
    %1059 = vmatpush.bf16.msra.mxu0 0
    %1060 = vmatpush.bf16.msra.mxu0 0
    %1061 = vmatpush.bf16.msra.mxu0 0
    %1062 = vmatpush.bf16.msra.mxu0 0
    %1063 = vmatpush.bf16.msra.mxu0 %v1004
    %1064 = vmatmul.bf16.gmra.mxu0 %v992
    %v1065 = vpop.f32.mrf.mxu0
    %v1066 = vadd.f32 0.0, %v1065
    %v1067 = vpop.f32.mrf.mxu0
    %v1068 = vadd.f32 0.0, %v1067
    %1069 = vmatmul.bf16.gmra.mxu0 %v995
    %v1070 = vpop.f32.mrf.mxu0
    %v1071 = vadd.f32 0.0, %v1070
    %v1072 = vpop.f32.mrf.mxu0
    %v1073 = vadd.f32 0.0, %v1072
    %1074 = vdwg.mxu0
    %1075 = vmatpush.bf16.msra.mxu0 0
    %1076 = vmatpush.bf16.msra.mxu0 0
    %1077 = vmatpush.bf16.msra.mxu0 0
    %1078 = vmatpush.bf16.msra.mxu0 0
    %1079 = vmatpush.bf16.msra.mxu0 0
    %1080 = vmatpush.bf16.msra.mxu0 0
    %1081 = vmatpush.bf16.msra.mxu0 0
    %1082 = vmatpush.bf16.msra.mxu0 %v1007
    %1083 = vmatmul.bf16.gmra.mxu0 %v992
    %v1084 = vpop.f32.mrf.mxu0
    %v1085 = vadd.f32 0.0, %v1084
    %v1086 = vpop.f32.mrf.mxu0
    %v1087 = vadd.f32 0.0, %v1086
    %1088 = vmatmul.bf16.gmra.mxu0 %v995
    %v1089 = vpop.f32.mrf.mxu0
    %v1090 = vadd.f32 0.0, %v1089
    %v1091 = vpop.f32.mrf.mxu0
    %v1092 = vadd.f32 0.0, %v1091
    %1093 = vdwg.mxu0
    %1094 = vmatpush.bf16.msra.mxu0 0
    %1095 = vmatpush.bf16.msra.mxu0 0
    %1096 = vmatpush.bf16.msra.mxu0 0
    %1097 = vmatpush.bf16.msra.mxu0 0
    %1098 = vmatpush.bf16.msra.mxu0 0
    %1099 = vmatpush.bf16.msra.mxu0 0
    %1100 = vmatpush.bf16.msra.mxu0 0
    %1101 = vmatpush.bf16.msra.mxu0 %v1010
    %1102 = vmatmul.bf16.gmra.mxu0 %v992
    %v1103 = vpop.f32.mrf.mxu0
    %v1104 = vadd.f32 0.0, %v1103
    %v1105 = vpop.f32.mrf.mxu0
    %v1106 = vadd.f32 0.0, %v1105
    %1107 = vmatmul.bf16.gmra.mxu0 %v995
    %v1108 = vpop.f32.mrf.mxu0
    %v1109 = vadd.f32 0.0, %v1108
    %v1110 = vpop.f32.mrf.mxu0
    %v1111 = vadd.f32 0.0, %v1110
    %1112 = vdwg.mxu0
    %1113 = vmatpush.bf16.msra.mxu0 0
    %1114 = vmatpush.bf16.msra.mxu0 0
    %1115 = vmatpush.bf16.msra.mxu0 0
    %1116 = vmatpush.bf16.msra.mxu0 0
    %1117 = vmatpush.bf16.msra.mxu0 0
    %1118 = vmatpush.bf16.msra.mxu0 0
    %1119 = vmatpush.bf16.msra.mxu0 0
    %1120 = vmatpush.bf16.msra.mxu0 %v1013
    %1121 = vmatmul.bf16.gmra.mxu0 %v992
    %v1122 = vpop.f32.mrf.mxu0
    %v1123 = vadd.f32 0.0, %v1122
    %v1124 = vpop.f32.mrf.mxu0
    %v1125 = vadd.f32 0.0, %v1124
    %1126 = vmatmul.bf16.gmra.mxu0 %v995
    %v1127 = vpop.f32.mrf.mxu0
    %v1128 = vadd.f32 0.0, %v1127
    %v1129 = vpop.f32.mrf.mxu0
    %v1130 = vadd.f32 0.0, %v1129
    %1131 = vdwg.mxu0
    %1132 = vmatpush.bf16.msra.mxu0 0
    %1133 = vmatpush.bf16.msra.mxu0 0
    %1134 = vmatpush.bf16.msra.mxu0 0
    %1135 = vmatpush.bf16.msra.mxu0 0
    %1136 = vmatpush.bf16.msra.mxu0 0
    %1137 = vmatpush.bf16.msra.mxu0 0
    %1138 = vmatpush.bf16.msra.mxu0 0
    %1139 = vmatpush.bf16.msra.mxu0 %v1016
    %1140 = vmatmul.bf16.gmra.mxu0 %v992
    %v1141 = vpop.f32.mrf.mxu0
    %v1142 = vadd.f32 0.0, %v1141
    %v1143 = vpop.f32.mrf.mxu0
    %v1144 = vadd.f32 0.0, %v1143
    %1145 = vmatmul.bf16.gmra.mxu0 %v995
    %v1146 = vpop.f32.mrf.mxu0
    %v1147 = vadd.f32 0.0, %v1146
    %v1148 = vpop.f32.mrf.mxu0
    %v1149 = vadd.f32 0.0, %v1148
    %1150 = vdwg.mxu0
    %v1151 = vadd.f32 %v924, %v1028
    %v1152 = vadd.f32 %v925, %v1047
    %v1153 = vadd.f32 %v926, %v1066
    %v1154 = vadd.f32 %v927, %v1085
    %v1155 = vadd.f32 %v928, %v1104
    %v1156 = vadd.f32 %v929, %v1123
    %v1157 = vadd.f32 %v930, %v1142
    %v1158 = vadd.f32 %v931, %v1030
    %v1159 = vadd.f32 %v932, %v1049
    %v1160 = vadd.f32 %v933, %v1068
    %v1161 = vadd.f32 %v934, %v1087
    %v1162 = vadd.f32 %v935, %v1106
    %v1163 = vadd.f32 %v936, %v1125
    %v1164 = vadd.f32 %v937, %v1144
    %v1165 = vadd.f32 %v938, %v1033
    %v1166 = vadd.f32 %v939, %v1052
    %v1167 = vadd.f32 %v940, %v1071
    %v1168 = vadd.f32 %v941, %v1090
    %v1169 = vadd.f32 %v942, %v1109
    %v1170 = vadd.f32 %v943, %v1128
    %v1171 = vadd.f32 %v944, %v1147
    %v1172 = vadd.f32 %v945, %v1035
    %v1173 = vadd.f32 %v946, %v1054
    %v1174 = vadd.f32 %v947, %v1073
    %v1175 = vadd.f32 %v948, %v1092
    %v1176 = vadd.f32 %v949, %v1111
    %v1177 = vadd.f32 %v950, %v1130
    %v1178 = vadd.f32 %v951, %v1149
    %1179 = vst [vmem:[#allocation2] sm:$0xff] %v1151
    %1180 = vst [vmem:[#allocation2 + $0x8] sm:$0xff] %v1152
    %1181 = vst [vmem:[#allocation2 + $0x10] sm:$0xff] %v1153
    %1182 = vst [vmem:[#allocation2 + $0x18] sm:$0xff] %v1154
    %1183 = vst [vmem:[#allocation2 + $0x20] sm:$0xff] %v1155
    %1184 = vst [vmem:[#allocation2 + $0x28] sm:$0xff] %v1156
    %1185 = vst [vmem:[#allocation2 + $0x30] sm:$0xff] %v1157
    %1186 = vst [vmem:[#allocation2 + $0x38] sm:$0xff] %v1158
    %1187 = vst [vmem:[#allocation2 + $0x40] sm:$0xff] %v1159
    %1188 = vst [vmem:[#allocation2 + $0x48] sm:$0xff] %v1160
    %1189 = vst [vmem:[#allocation2 + $0x50] sm:$0xff] %v1161
    %1190 = vst [vmem:[#allocation2 + $0x58] sm:$0xff] %v1162
    %1191 = vst [vmem:[#allocation2 + $0x60] sm:$0xff] %v1163
    %1192 = vst [vmem:[#allocation2 + $0x68] sm:$0xff] %v1164
    %1193 = vst [vmem:[#allocation2 + $0x70] sm:$0xff] %v1165
    %1194 = vst [vmem:[#allocation2 + $0x78] sm:$0xff] %v1166
    %1195 = vst [vmem:[#allocation2 + $0x80] sm:$0xff] %v1167
    %1196 = vst [vmem:[#allocation2 + $0x88] sm:$0xff] %v1168
    %1197 = vst [vmem:[#allocation2 + $0x90] sm:$0xff] %v1169
    %1198 = vst [vmem:[#allocation2 + $0x98] sm:$0xff] %v1170
    %1199 = vst [vmem:[#allocation2 + $0xa0] sm:$0xff] %v1171
    %1200 = vst [vmem:[#allocation2 + $0xa8] sm:$0xff] %v1172
    %1201 = vst [vmem:[#allocation2 + $0xb0] sm:$0xff] %v1173
    %1202 = vst [vmem:[#allocation2 + $0xb8] sm:$0xff] %v1174
    %1203 = vst [vmem:[#allocation2 + $0xc0] sm:$0xff] %v1175
    %1204 = vst [vmem:[#allocation2 + $0xc8] sm:$0xff] %v1176
    %1205 = vst [vmem:[#allocation2 + $0xd0] sm:$0xff] %v1177
    %1206 = vst [vmem:[#allocation2 + $0xd8] sm:$0xff] %v1178
    %v1207 = vld [vmem:[#allocation2] sm:$0xff]
    %v1208 = vld [vmem:[#allocation2 + $0x8] sm:$0xff]
    %v1209 = vld [vmem:[#allocation2 + $0x10] sm:$0xff]
    %v1210 = vld [vmem:[#allocation2 + $0x18] sm:$0xff]
    %v1211 = vld [vmem:[#allocation2 + $0x20] sm:$0xff]
    %v1212 = vld [vmem:[#allocation2 + $0x28] sm:$0xff]
    %v1213 = vld [vmem:[#allocation2 + $0x30] sm:$0xff]
    %v1214 = vld [vmem:[#allocation2 + $0x38] sm:$0xff]
    %v1215 = vld [vmem:[#allocation2 + $0x40] sm:$0xff]
    %v1216 = vld [vmem:[#allocation2 + $0x48] sm:$0xff]
    %v1217 = vld [vmem:[#allocation2 + $0x50] sm:$0xff]
    %v1218 = vld [vmem:[#allocation2 + $0x58] sm:$0xff]
    %v1219 = vld [vmem:[#allocation2 + $0x60] sm:$0xff]
    %v1220 = vld [vmem:[#allocation2 + $0x68] sm:$0xff]
    %v1221 = vld [vmem:[#allocation2 + $0x70] sm:$0xff]
    %v1222 = vld [vmem:[#allocation2 + $0x78] sm:$0xff]
    %v1223 = vld [vmem:[#allocation2 + $0x80] sm:$0xff]
    %v1224 = vld [vmem:[#allocation2 + $0x88] sm:$0xff]
    %v1225 = vld [vmem:[#allocation2 + $0x90] sm:$0xff]
    %v1226 = vld [vmem:[#allocation2 + $0x98] sm:$0xff]
    %v1227 = vld [vmem:[#allocation2 + $0xa0] sm:$0xff]
    %v1228 = vld [vmem:[#allocation2 + $0xa8] sm:$0xff]
    %v1229 = vld [vmem:[#allocation2 + $0xb0] sm:$0xff]
    %v1230 = vld [vmem:[#allocation2 + $0xb8] sm:$0xff]
    %v1231 = vld [vmem:[#allocation2 + $0xc0] sm:$0xff]
    %v1232 = vld [vmem:[#allocation2 + $0xc8] sm:$0xff]
    %v1233 = vld [vmem:[#allocation2 + $0xd0] sm:$0xff]
    %v1234 = vld [vmem:[#allocation2 + $0xd8] sm:$0xff]
    %s1235 = scalar_lea.vmem %s1, 64
    %v1236 = vld [vmem:[%s1235] sm:$0xf]
    %v1237 = vld [vmem:[%s1235 + $0x4] sm:$0xf]
    %v1238 = vld [vmem:[%s1235 + $0x8] sm:$0xf]
    %v1239 = vld [vmem:[%s1235 + $0xc] sm:$0xf]
    %v1244 = vunpack.c.l.b16 %v1236
    %v1245 = vunpack.c.l.b16 %v1237
    %v1246 = vunpack.c.l.b16 %v1238
    %v1247 = vunpack.c.l.b16 %v1239
    %v1248 = vpack.c.b16 %v1245, %v1244
    %v1249 = vpack.c.b16 %v1247, %v1246
    %1250 = vrot.lane.b32.xlu0 %v131, 109
    %v1251 = vpop.permute.xlu0 %1250
    %1252 = vrot.lane.b32.xlu0 %v132, 109
    %v1253 = vpop.permute.xlu0 %1252
    %1254 = vrot.lane.b32.xlu0 %v133, 109
    %v1255 = vpop.permute.xlu0 %1254
    %1256 = vrot.lane.b32.xlu0 %v134, 109
    %v1257 = vpop.permute.xlu0 %1256
    %1258 = vrot.lane.b32.xlu0 %v135, 109
    %v1259 = vpop.permute.xlu0 %1258
    %1260 = vrot.lane.b32.xlu0 %v136, 109
    %v1261 = vpop.permute.xlu0 %1260
    %1262 = vrot.lane.b32.xlu0 %v137, 109
    %v1263 = vpop.permute.xlu0 %1262
    %1264 = vrot.lane.b32.xlu0 %v400, 109
    %v1265 = vpop.permute.xlu0 %1264
    %vm1266 = vcmask 891904
    %v1267 = vsel %vm1266, %v1251, %v1253
    %v1268 = vsel %vm1266, %v1253, %v1255
    %v1269 = vsel %vm1266, %v1255, %v1257
    %v1270 = vsel %vm1266, %v1257, %v1259
    %v1271 = vsel %vm1266, %v1259, %v1261
    %v1272 = vsel %vm1266, %v1261, %v1263
    %v1273 = vsel %vm1266, %v1263, %v1265
    %v1275 = vsel %vm138, %v1248, 0
    %v1278 = vsel %vm138, %v1249, 0
    %v1281 = vsel %vm145, %v1267, 0
    %v1284 = vsel %vm145, %v1268, 0
    %v1287 = vsel %vm145, %v1269, 0
    %v1290 = vsel %vm145, %v1270, 0
    %v1293 = vsel %vm145, %v1271, 0
    %v1296 = vsel %vm145, %v1272, 0
    %v1299 = vsel %vm145, %v1273, 0
    %1301 = vmatpush.bf16.msra.mxu0 0
    %1302 = vmatpush.bf16.msra.mxu0 0
    %1303 = vmatpush.bf16.msra.mxu0 0
    %1304 = vmatpush.bf16.msra.mxu0 0
    %1305 = vmatpush.bf16.msra.mxu0 0
    %1306 = vmatpush.bf16.msra.mxu0 0
    %1307 = vmatpush.bf16.msra.mxu0 0
    %1308 = vmatpush.bf16.msra.mxu0 %v1281
    %1309 = vmatmul.bf16.gmra.mxu0 %v1275
    %v1310 = vpop.f32.mrf.mxu0
    %v1311 = vadd.f32 0.0, %v1310
    %v1312 = vpop.f32.mrf.mxu0
    %v1313 = vadd.f32 0.0, %v1312
    %1314 = vmatmul.bf16.gmra.mxu0 %v1278
    %v1315 = vpop.f32.mrf.mxu0
    %v1316 = vadd.f32 0.0, %v1315
    %v1317 = vpop.f32.mrf.mxu0
    %v1318 = vadd.f32 0.0, %v1317
    %1319 = vdwg.mxu0
    %1320 = vmatpush.bf16.msra.mxu0 0
    %1321 = vmatpush.bf16.msra.mxu0 0
    %1322 = vmatpush.bf16.msra.mxu0 0
    %1323 = vmatpush.bf16.msra.mxu0 0
    %1324 = vmatpush.bf16.msra.mxu0 0
    %1325 = vmatpush.bf16.msra.mxu0 0
    %1326 = vmatpush.bf16.msra.mxu0 0
    %1327 = vmatpush.bf16.msra.mxu0 %v1284
    %1328 = vmatmul.bf16.gmra.mxu0 %v1275
    %v1329 = vpop.f32.mrf.mxu0
    %v1330 = vadd.f32 0.0, %v1329
    %v1331 = vpop.f32.mrf.mxu0
    %v1332 = vadd.f32 0.0, %v1331
    %1333 = vmatmul.bf16.gmra.mxu0 %v1278
    %v1334 = vpop.f32.mrf.mxu0
    %v1335 = vadd.f32 0.0, %v1334
    %v1336 = vpop.f32.mrf.mxu0
    %v1337 = vadd.f32 0.0, %v1336
    %1338 = vdwg.mxu0
    %1339 = vmatpush.bf16.msra.mxu0 0
    %1340 = vmatpush.bf16.msra.mxu0 0
    %1341 = vmatpush.bf16.msra.mxu0 0
    %1342 = vmatpush.bf16.msra.mxu0 0
    %1343 = vmatpush.bf16.msra.mxu0 0
    %1344 = vmatpush.bf16.msra.mxu0 0
    %1345 = vmatpush.bf16.msra.mxu0 0
    %1346 = vmatpush.bf16.msra.mxu0 %v1287
    %1347 = vmatmul.bf16.gmra.mxu0 %v1275
    %v1348 = vpop.f32.mrf.mxu0
    %v1349 = vadd.f32 0.0, %v1348
    %v1350 = vpop.f32.mrf.mxu0
    %v1351 = vadd.f32 0.0, %v1350
    %1352 = vmatmul.bf16.gmra.mxu0 %v1278
    %v1353 = vpop.f32.mrf.mxu0
    %v1354 = vadd.f32 0.0, %v1353
    %v1355 = vpop.f32.mrf.mxu0
    %v1356 = vadd.f32 0.0, %v1355
    %1357 = vdwg.mxu0
    %1358 = vmatpush.bf16.msra.mxu0 0
    %1359 = vmatpush.bf16.msra.mxu0 0
    %1360 = vmatpush.bf16.msra.mxu0 0
    %1361 = vmatpush.bf16.msra.mxu0 0
    %1362 = vmatpush.bf16.msra.mxu0 0
    %1363 = vmatpush.bf16.msra.mxu0 0
    %1364 = vmatpush.bf16.msra.mxu0 0
    %1365 = vmatpush.bf16.msra.mxu0 %v1290
    %1366 = vmatmul.bf16.gmra.mxu0 %v1275
    %v1367 = vpop.f32.mrf.mxu0
    %v1368 = vadd.f32 0.0, %v1367
    %v1369 = vpop.f32.mrf.mxu0
    %v1370 = vadd.f32 0.0, %v1369
    %1371 = vmatmul.bf16.gmra.mxu0 %v1278
    %v1372 = vpop.f32.mrf.mxu0
    %v1373 = vadd.f32 0.0, %v1372
    %v1374 = vpop.f32.mrf.mxu0
    %v1375 = vadd.f32 0.0, %v1374
    %1376 = vdwg.mxu0
    %1377 = vmatpush.bf16.msra.mxu0 0
    %1378 = vmatpush.bf16.msra.mxu0 0
    %1379 = vmatpush.bf16.msra.mxu0 0
    %1380 = vmatpush.bf16.msra.mxu0 0
    %1381 = vmatpush.bf16.msra.mxu0 0
    %1382 = vmatpush.bf16.msra.mxu0 0
    %1383 = vmatpush.bf16.msra.mxu0 0
    %1384 = vmatpush.bf16.msra.mxu0 %v1293
    %1385 = vmatmul.bf16.gmra.mxu0 %v1275
    %v1386 = vpop.f32.mrf.mxu0
    %v1387 = vadd.f32 0.0, %v1386
    %v1388 = vpop.f32.mrf.mxu0
    %v1389 = vadd.f32 0.0, %v1388
    %1390 = vmatmul.bf16.gmra.mxu0 %v1278
    %v1391 = vpop.f32.mrf.mxu0
    %v1392 = vadd.f32 0.0, %v1391
    %v1393 = vpop.f32.mrf.mxu0
    %v1394 = vadd.f32 0.0, %v1393
    %1395 = vdwg.mxu0
    %1396 = vmatpush.bf16.msra.mxu0 0
    %1397 = vmatpush.bf16.msra.mxu0 0
    %1398 = vmatpush.bf16.msra.mxu0 0
    %1399 = vmatpush.bf16.msra.mxu0 0
    %1400 = vmatpush.bf16.msra.mxu0 0
    %1401 = vmatpush.bf16.msra.mxu0 0
    %1402 = vmatpush.bf16.msra.mxu0 0
    %1403 = vmatpush.bf16.msra.mxu0 %v1296
    %1404 = vmatmul.bf16.gmra.mxu0 %v1275
    %v1405 = vpop.f32.mrf.mxu0
    %v1406 = vadd.f32 0.0, %v1405
    %v1407 = vpop.f32.mrf.mxu0
    %v1408 = vadd.f32 0.0, %v1407
    %1409 = vmatmul.bf16.gmra.mxu0 %v1278
    %v1410 = vpop.f32.mrf.mxu0
    %v1411 = vadd.f32 0.0, %v1410
    %v1412 = vpop.f32.mrf.mxu0
    %v1413 = vadd.f32 0.0, %v1412
    %1414 = vdwg.mxu0
    %1415 = vmatpush.bf16.msra.mxu0 0
    %1416 = vmatpush.bf16.msra.mxu0 0
    %1417 = vmatpush.bf16.msra.mxu0 0
    %1418 = vmatpush.bf16.msra.mxu0 0
    %1419 = vmatpush.bf16.msra.mxu0 0
    %1420 = vmatpush.bf16.msra.mxu0 0
    %1421 = vmatpush.bf16.msra.mxu0 0
    %1422 = vmatpush.bf16.msra.mxu0 %v1299
    %1423 = vmatmul.bf16.gmra.mxu0 %v1275
    %v1424 = vpop.f32.mrf.mxu0
    %v1425 = vadd.f32 0.0, %v1424
    %v1426 = vpop.f32.mrf.mxu0
    %v1427 = vadd.f32 0.0, %v1426
    %1428 = vmatmul.bf16.gmra.mxu0 %v1278
    %v1429 = vpop.f32.mrf.mxu0
    %v1430 = vadd.f32 0.0, %v1429
    %v1431 = vpop.f32.mrf.mxu0
    %v1432 = vadd.f32 0.0, %v1431
    %1433 = vdwg.mxu0
    %v1434 = vadd.f32 %v1207, %v1311
    %v1435 = vadd.f32 %v1208, %v1330
    %v1436 = vadd.f32 %v1209, %v1349
    %v1437 = vadd.f32 %v1210, %v1368
    %v1438 = vadd.f32 %v1211, %v1387
    %v1439 = vadd.f32 %v1212, %v1406
    %v1440 = vadd.f32 %v1213, %v1425
    %v1441 = vadd.f32 %v1214, %v1313
    %v1442 = vadd.f32 %v1215, %v1332
    %v1443 = vadd.f32 %v1216, %v1351
    %v1444 = vadd.f32 %v1217, %v1370
    %v1445 = vadd.f32 %v1218, %v1389
    %v1446 = vadd.f32 %v1219, %v1408
    %v1447 = vadd.f32 %v1220, %v1427
    %v1448 = vadd.f32 %v1221, %v1316
    %v1449 = vadd.f32 %v1222, %v1335
    %v1450 = vadd.f32 %v1223, %v1354
    %v1451 = vadd.f32 %v1224, %v1373
    %v1452 = vadd.f32 %v1225, %v1392
    %v1453 = vadd.f32 %v1226, %v1411
    %v1454 = vadd.f32 %v1227, %v1430
    %v1455 = vadd.f32 %v1228, %v1318
    %v1456 = vadd.f32 %v1229, %v1337
    %v1457 = vadd.f32 %v1230, %v1356
    %v1458 = vadd.f32 %v1231, %v1375
    %v1459 = vadd.f32 %v1232, %v1394
    %v1460 = vadd.f32 %v1233, %v1413
    %v1461 = vadd.f32 %v1234, %v1432
    %1462 = vst [vmem:[#allocation2] sm:$0xff] %v1434
    %1463 = vst [vmem:[#allocation2 + $0x8] sm:$0xff] %v1435
    %1464 = vst [vmem:[#allocation2 + $0x10] sm:$0xff] %v1436
    %1465 = vst [vmem:[#allocation2 + $0x18] sm:$0xff] %v1437
    %1466 = vst [vmem:[#allocation2 + $0x20] sm:$0xff] %v1438
    %1467 = vst [vmem:[#allocation2 + $0x28] sm:$0xff] %v1439
    %1468 = vst [vmem:[#allocation2 + $0x30] sm:$0xff] %v1440
    %1469 = vst [vmem:[#allocation2 + $0x38] sm:$0xff] %v1441
    %1470 = vst [vmem:[#allocation2 + $0x40] sm:$0xff] %v1442
    %1471 = vst [vmem:[#allocation2 + $0x48] sm:$0xff] %v1443
    %1472 = vst [vmem:[#allocation2 + $0x50] sm:$0xff] %v1444
    %1473 = vst [vmem:[#allocation2 + $0x58] sm:$0xff] %v1445
    %1474 = vst [vmem:[#allocation2 + $0x60] sm:$0xff] %v1446
    %1475 = vst [vmem:[#allocation2 + $0x68] sm:$0xff] %v1447
    %1476 = vst [vmem:[#allocation2 + $0x70] sm:$0xff] %v1448
    %1477 = vst [vmem:[#allocation2 + $0x78] sm:$0xff] %v1449
    %1478 = vst [vmem:[#allocation2 + $0x80] sm:$0xff] %v1450
    %1479 = vst [vmem:[#allocation2 + $0x88] sm:$0xff] %v1451
    %1480 = vst [vmem:[#allocation2 + $0x90] sm:$0xff] %v1452
    %1481 = vst [vmem:[#allocation2 + $0x98] sm:$0xff] %v1453
    %1482 = vst [vmem:[#allocation2 + $0xa0] sm:$0xff] %v1454
    %1483 = vst [vmem:[#allocation2 + $0xa8] sm:$0xff] %v1455
    %1484 = vst [vmem:[#allocation2 + $0xb0] sm:$0xff] %v1456
    %1485 = vst [vmem:[#allocation2 + $0xb8] sm:$0xff] %v1457
    %1486 = vst [vmem:[#allocation2 + $0xc0] sm:$0xff] %v1458
    %1487 = vst [vmem:[#allocation2 + $0xc8] sm:$0xff] %v1459
    %1488 = vst [vmem:[#allocation2 + $0xd0] sm:$0xff] %v1460
    %1489 = vst [vmem:[#allocation2 + $0xd8] sm:$0xff] %v1461
    %v1490 = vld [vmem:[#allocation2] sm:$0xff]
    %v1491 = vld [vmem:[#allocation2 + $0x8] sm:$0xff]
    %v1492 = vld [vmem:[#allocation2 + $0x10] sm:$0xff]
    %v1493 = vld [vmem:[#allocation2 + $0x18] sm:$0xff]
    %v1494 = vld [vmem:[#allocation2 + $0x20] sm:$0xff]
    %v1495 = vld [vmem:[#allocation2 + $0x28] sm:$0xff]
    %v1496 = vld [vmem:[#allocation2 + $0x30] sm:$0xff]
    %v1497 = vld [vmem:[#allocation2 + $0x38] sm:$0xff]
    %v1498 = vld [vmem:[#allocation2 + $0x40] sm:$0xff]
    %v1499 = vld [vmem:[#allocation2 + $0x48] sm:$0xff]
    %v1500 = vld [vmem:[#allocation2 + $0x50] sm:$0xff]
    %v1501 = vld [vmem:[#allocation2 + $0x58] sm:$0xff]
    %v1502 = vld [vmem:[#allocation2 + $0x60] sm:$0xff]
    %v1503 = vld [vmem:[#allocation2 + $0x68] sm:$0xff]
    %v1504 = vld [vmem:[#allocation2 + $0x70] sm:$0xff]
    %v1505 = vld [vmem:[#allocation2 + $0x78] sm:$0xff]
    %v1506 = vld [vmem:[#allocation2 + $0x80] sm:$0xff]
    %v1507 = vld [vmem:[#allocation2 + $0x88] sm:$0xff]
    %v1508 = vld [vmem:[#allocation2 + $0x90] sm:$0xff]
    %v1509 = vld [vmem:[#allocation2 + $0x98] sm:$0xff]
    %v1510 = vld [vmem:[#allocation2 + $0xa0] sm:$0xff]
    %v1511 = vld [vmem:[#allocation2 + $0xa8] sm:$0xff]
    %v1512 = vld [vmem:[#allocation2 + $0xb0] sm:$0xff]
    %v1513 = vld [vmem:[#allocation2 + $0xb8] sm:$0xff]
    %v1514 = vld [vmem:[#allocation2 + $0xc0] sm:$0xff]
    %v1515 = vld [vmem:[#allocation2 + $0xc8] sm:$0xff]
    %v1516 = vld [vmem:[#allocation2 + $0xd0] sm:$0xff]
    %v1517 = vld [vmem:[#allocation2 + $0xd8] sm:$0xff]
    %s1518 = scalar_lea.vmem %s1, 80
    %v1519 = vld [vmem:[%s1518] sm:$0xf]
    %v1520 = vld [vmem:[%s1518 + $0x4] sm:$0xf]
    %v1521 = vld [vmem:[%s1518 + $0x8] sm:$0xf]
    %v1522 = vld [vmem:[%s1518 + $0xc] sm:$0xf]
    %v1527 = vunpack.c.l.b16 %v1519
    %v1528 = vunpack.c.l.b16 %v1520
    %v1529 = vunpack.c.l.b16 %v1521
    %v1530 = vunpack.c.l.b16 %v1522
    %v1531 = vpack.c.b16 %v1528, %v1527
    %v1532 = vpack.c.b16 %v1530, %v1529
    %1533 = vrot.lane.b32.xlu0 %v131, 108
    %v1534 = vpop.permute.xlu0 %1533
    %1535 = vrot.lane.b32.xlu0 %v132, 108
    %v1536 = vpop.permute.xlu0 %1535
    %1537 = vrot.lane.b32.xlu0 %v133, 108
    %v1538 = vpop.permute.xlu0 %1537
    %1539 = vrot.lane.b32.xlu0 %v134, 108
    %v1540 = vpop.permute.xlu0 %1539
    %1541 = vrot.lane.b32.xlu0 %v135, 108
    %v1542 = vpop.permute.xlu0 %1541
    %1543 = vrot.lane.b32.xlu0 %v136, 108
    %v1544 = vpop.permute.xlu0 %1543
    %1545 = vrot.lane.b32.xlu0 %v137, 108
    %v1546 = vpop.permute.xlu0 %1545
    %1547 = vrot.lane.b32.xlu0 %v400, 108
    %v1548 = vpop.permute.xlu0 %1547
    %vm1549 = vcmask 883712
    %v1550 = vsel %vm1549, %v1534, %v1536
    %v1551 = vsel %vm1549, %v1536, %v1538
    %v1552 = vsel %vm1549, %v1538, %v1540
    %v1553 = vsel %vm1549, %v1540, %v1542
    %v1554 = vsel %vm1549, %v1542, %v1544
    %v1555 = vsel %vm1549, %v1544, %v1546
    %v1556 = vsel %vm1549, %v1546, %v1548
    %v1558 = vsel %vm138, %v1531, 0
    %v1561 = vsel %vm138, %v1532, 0
    %v1564 = vsel %vm145, %v1550, 0
    %v1567 = vsel %vm145, %v1551, 0
    %v1570 = vsel %vm145, %v1552, 0
    %v1573 = vsel %vm145, %v1553, 0
    %v1576 = vsel %vm145, %v1554, 0
    %v1579 = vsel %vm145, %v1555, 0
    %v1582 = vsel %vm145, %v1556, 0
    %1584 = vmatpush.bf16.msra.mxu0 0
    %1585 = vmatpush.bf16.msra.mxu0 0
    %1586 = vmatpush.bf16.msra.mxu0 0
    %1587 = vmatpush.bf16.msra.mxu0 0
    %1588 = vmatpush.bf16.msra.mxu0 0
    %1589 = vmatpush.bf16.msra.mxu0 0
    %1590 = vmatpush.bf16.msra.mxu0 0
    %1591 = vmatpush.bf16.msra.mxu0 %v1564
    %1592 = vmatmul.bf16.gmra.mxu0 %v1558
    %v1593 = vpop.f32.mrf.mxu0
    %v1594 = vadd.f32 0.0, %v1593
    %v1595 = vpop.f32.mrf.mxu0
    %v1596 = vadd.f32 0.0, %v1595
    %1597 = vmatmul.bf16.gmra.mxu0 %v1561
    %v1598 = vpop.f32.mrf.mxu0
    %v1599 = vadd.f32 0.0, %v1598
    %v1600 = vpop.f32.mrf.mxu0
    %v1601 = vadd.f32 0.0, %v1600
    %1602 = vdwg.mxu0
    %1603 = vmatpush.bf16.msra.mxu0 0
    %1604 = vmatpush.bf16.msra.mxu0 0
    %1605 = vmatpush.bf16.msra.mxu0 0
    %1606 = vmatpush.bf16.msra.mxu0 0
    %1607 = vmatpush.bf16.msra.mxu0 0
    %1608 = vmatpush.bf16.msra.mxu0 0
    %1609 = vmatpush.bf16.msra.mxu0 0
    %1610 = vmatpush.bf16.msra.mxu0 %v1567
    %1611 = vmatmul.bf16.gmra.mxu0 %v1558
    %v1612 = vpop.f32.mrf.mxu0
    %v1613 = vadd.f32 0.0, %v1612
    %v1614 = vpop.f32.mrf.mxu0
    %v1615 = vadd.f32 0.0, %v1614
    %1616 = vmatmul.bf16.gmra.mxu0 %v1561
    %v1617 = vpop.f32.mrf.mxu0
    %v1618 = vadd.f32 0.0, %v1617
    %v1619 = vpop.f32.mrf.mxu0
    %v1620 = vadd.f32 0.0, %v1619
    %1621 = vdwg.mxu0
    %1622 = vmatpush.bf16.msra.mxu0 0
    %1623 = vmatpush.bf16.msra.mxu0 0
    %1624 = vmatpush.bf16.msra.mxu0 0
    %1625 = vmatpush.bf16.msra.mxu0 0
    %1626 = vmatpush.bf16.msra.mxu0 0
    %1627 = vmatpush.bf16.msra.mxu0 0
    %1628 = vmatpush.bf16.msra.mxu0 0
    %1629 = vmatpush.bf16.msra.mxu0 %v1570
    %1630 = vmatmul.bf16.gmra.mxu0 %v1558
    %v1631 = vpop.f32.mrf.mxu0
    %v1632 = vadd.f32 0.0, %v1631
    %v1633 = vpop.f32.mrf.mxu0
    %v1634 = vadd.f32 0.0, %v1633
    %1635 = vmatmul.bf16.gmra.mxu0 %v1561
    %v1636 = vpop.f32.mrf.mxu0
    %v1637 = vadd.f32 0.0, %v1636
    %v1638 = vpop.f32.mrf.mxu0
    %v1639 = vadd.f32 0.0, %v1638
    %1640 = vdwg.mxu0
    %1641 = vmatpush.bf16.msra.mxu0 0
    %1642 = vmatpush.bf16.msra.mxu0 0
    %1643 = vmatpush.bf16.msra.mxu0 0
    %1644 = vmatpush.bf16.msra.mxu0 0
    %1645 = vmatpush.bf16.msra.mxu0 0
    %1646 = vmatpush.bf16.msra.mxu0 0
    %1647 = vmatpush.bf16.msra.mxu0 0
    %1648 = vmatpush.bf16.msra.mxu0 %v1573
    %1649 = vmatmul.bf16.gmra.mxu0 %v1558
    %v1650 = vpop.f32.mrf.mxu0
    %v1651 = vadd.f32 0.0, %v1650
    %v1652 = vpop.f32.mrf.mxu0
    %v1653 = vadd.f32 0.0, %v1652
    %1654 = vmatmul.bf16.gmra.mxu0 %v1561
    %v1655 = vpop.f32.mrf.mxu0
    %v1656 = vadd.f32 0.0, %v1655
    %v1657 = vpop.f32.mrf.mxu0
    %v1658 = vadd.f32 0.0, %v1657
    %1659 = vdwg.mxu0
    %1660 = vmatpush.bf16.msra.mxu0 0
    %1661 = vmatpush.bf16.msra.mxu0 0
    %1662 = vmatpush.bf16.msra.mxu0 0
    %1663 = vmatpush.bf16.msra.mxu0 0
    %1664 = vmatpush.bf16.msra.mxu0 0
    %1665 = vmatpush.bf16.msra.mxu0 0
    %1666 = vmatpush.bf16.msra.mxu0 0
    %1667 = vmatpush.bf16.msra.mxu0 %v1576
    %1668 = vmatmul.bf16.gmra.mxu0 %v1558
    %v1669 = vpop.f32.mrf.mxu0
    %v1670 = vadd.f32 0.0, %v1669
    %v1671 = vpop.f32.mrf.mxu0
    %v1672 = vadd.f32 0.0, %v1671
    %1673 = vmatmul.bf16.gmra.mxu0 %v1561
    %v1674 = vpop.f32.mrf.mxu0
    %v1675 = vadd.f32 0.0, %v1674
    %v1676 = vpop.f32.mrf.mxu0
    %v1677 = vadd.f32 0.0, %v1676
    %1678 = vdwg.mxu0
    %1679 = vmatpush.bf16.msra.mxu0 0
    %1680 = vmatpush.bf16.msra.mxu0 0
    %1681 = vmatpush.bf16.msra.mxu0 0
    %1682 = vmatpush.bf16.msra.mxu0 0
    %1683 = vmatpush.bf16.msra.mxu0 0
    %1684 = vmatpush.bf16.msra.mxu0 0
    %1685 = vmatpush.bf16.msra.mxu0 0
    %1686 = vmatpush.bf16.msra.mxu0 %v1579
    %1687 = vmatmul.bf16.gmra.mxu0 %v1558
    %v1688 = vpop.f32.mrf.mxu0
    %v1689 = vadd.f32 0.0, %v1688
    %v1690 = vpop.f32.mrf.mxu0
    %v1691 = vadd.f32 0.0, %v1690
    %1692 = vmatmul.bf16.gmra.mxu0 %v1561
    %v1693 = vpop.f32.mrf.mxu0
    %v1694 = vadd.f32 0.0, %v1693
    %v1695 = vpop.f32.mrf.mxu0
    %v1696 = vadd.f32 0.0, %v1695
    %1697 = vdwg.mxu0
    %1698 = vmatpush.bf16.msra.mxu0 0
    %1699 = vmatpush.bf16.msra.mxu0 0
    %1700 = vmatpush.bf16.msra.mxu0 0
    %1701 = vmatpush.bf16.msra.mxu0 0
    %1702 = vmatpush.bf16.msra.mxu0 0
    %1703 = vmatpush.bf16.msra.mxu0 0
    %1704 = vmatpush.bf16.msra.mxu0 0
    %1705 = vmatpush.bf16.msra.mxu0 %v1582
    %1706 = vmatmul.bf16.gmra.mxu0 %v1558
    %v1707 = vpop.f32.mrf.mxu0
    %v1708 = vadd.f32 0.0, %v1707
    %v1709 = vpop.f32.mrf.mxu0
    %v1710 = vadd.f32 0.0, %v1709
    %1711 = vmatmul.bf16.gmra.mxu0 %v1561
    %v1712 = vpop.f32.mrf.mxu0
    %v1713 = vadd.f32 0.0, %v1712
    %v1714 = vpop.f32.mrf.mxu0
    %v1715 = vadd.f32 0.0, %v1714
    %1716 = vdwg.mxu0
    %v1717 = vadd.f32 %v1490, %v1594
    %v1718 = vadd.f32 %v1491, %v1613
    %v1719 = vadd.f32 %v1492, %v1632
    %v1720 = vadd.f32 %v1493, %v1651
    %v1721 = vadd.f32 %v1494, %v1670
    %v1722 = vadd.f32 %v1495, %v1689
    %v1723 = vadd.f32 %v1496, %v1708
    %v1724 = vadd.f32 %v1497, %v1596
    %v1725 = vadd.f32 %v1498, %v1615
    %v1726 = vadd.f32 %v1499, %v1634
    %v1727 = vadd.f32 %v1500, %v1653
    %v1728 = vadd.f32 %v1501, %v1672
    %v1729 = vadd.f32 %v1502, %v1691
    %v1730 = vadd.f32 %v1503, %v1710
    %v1731 = vadd.f32 %v1504, %v1599
    %v1732 = vadd.f32 %v1505, %v1618
    %v1733 = vadd.f32 %v1506, %v1637
    %v1734 = vadd.f32 %v1507, %v1656
    %v1735 = vadd.f32 %v1508, %v1675
    %v1736 = vadd.f32 %v1509, %v1694
    %v1737 = vadd.f32 %v1510, %v1713
    %v1738 = vadd.f32 %v1511, %v1601
    %v1739 = vadd.f32 %v1512, %v1620
    %v1740 = vadd.f32 %v1513, %v1639
    %v1741 = vadd.f32 %v1514, %v1658
    %v1742 = vadd.f32 %v1515, %v1677
    %v1743 = vadd.f32 %v1516, %v1696
    %v1744 = vadd.f32 %v1517, %v1715
    %1745 = vst [vmem:[#allocation2] sm:$0xff] %v1717
    %1746 = vst [vmem:[#allocation2 + $0x8] sm:$0xff] %v1718
    %1747 = vst [vmem:[#allocation2 + $0x10] sm:$0xff] %v1719
    %1748 = vst [vmem:[#allocation2 + $0x18] sm:$0xff] %v1720
    %1749 = vst [vmem:[#allocation2 + $0x20] sm:$0xff] %v1721
    %1750 = vst [vmem:[#allocation2 + $0x28] sm:$0xff] %v1722
    %1751 = vst [vmem:[#allocation2 + $0x30] sm:$0xff] %v1723
    %1752 = vst [vmem:[#allocation2 + $0x38] sm:$0xff] %v1724
    %1753 = vst [vmem:[#allocation2 + $0x40] sm:$0xff] %v1725
    %1754 = vst [vmem:[#allocation2 + $0x48] sm:$0xff] %v1726
    %1755 = vst [vmem:[#allocation2 + $0x50] sm:$0xff] %v1727
    %1756 = vst [vmem:[#allocation2 + $0x58] sm:$0xff] %v1728
    %1757 = vst [vmem:[#allocation2 + $0x60] sm:$0xff] %v1729
    %1758 = vst [vmem:[#allocation2 + $0x68] sm:$0xff] %v1730
    %1759 = vst [vmem:[#allocation2 + $0x70] sm:$0xff] %v1731
    %1760 = vst [vmem:[#allocation2 + $0x78] sm:$0xff] %v1732
    %1761 = vst [vmem:[#allocation2 + $0x80] sm:$0xff] %v1733
    %1762 = vst [vmem:[#allocation2 + $0x88] sm:$0xff] %v1734
    %1763 = vst [vmem:[#allocation2 + $0x90] sm:$0xff] %v1735
    %1764 = vst [vmem:[#allocation2 + $0x98] sm:$0xff] %v1736
    %1765 = vst [vmem:[#allocation2 + $0xa0] sm:$0xff] %v1737
    %1766 = vst [vmem:[#allocation2 + $0xa8] sm:$0xff] %v1738
    %1767 = vst [vmem:[#allocation2 + $0xb0] sm:$0xff] %v1739
    %1768 = vst [vmem:[#allocation2 + $0xb8] sm:$0xff] %v1740
    %1769 = vst [vmem:[#allocation2 + $0xc0] sm:$0xff] %v1741
    %1770 = vst [vmem:[#allocation2 + $0xc8] sm:$0xff] %v1742
    %1771 = vst [vmem:[#allocation2 + $0xd0] sm:$0xff] %v1743
    %1772 = vst [vmem:[#allocation2 + $0xd8] sm:$0xff] %v1744
    %v1773 = vld [vmem:[#allocation2] sm:$0xff]
    %v1774 = vld [vmem:[#allocation2 + $0x8] sm:$0xff]
    %v1775 = vld [vmem:[#allocation2 + $0x10] sm:$0xff]
    %v1776 = vld [vmem:[#allocation2 + $0x18] sm:$0xff]
    %v1777 = vld [vmem:[#allocation2 + $0x20] sm:$0xff]
    %v1778 = vld [vmem:[#allocation2 + $0x28] sm:$0xff]
    %v1779 = vld [vmem:[#allocation2 + $0x30] sm:$0xff]
    %v1780 = vld [vmem:[#allocation2 + $0x38] sm:$0xff]
    %v1781 = vld [vmem:[#allocation2 + $0x40] sm:$0xff]
    %v1782 = vld [vmem:[#allocation2 + $0x48] sm:$0xff]
    %v1783 = vld [vmem:[#allocation2 + $0x50] sm:$0xff]
    %v1784 = vld [vmem:[#allocation2 + $0x58] sm:$0xff]
    %v1785 = vld [vmem:[#allocation2 + $0x60] sm:$0xff]
    %v1786 = vld [vmem:[#allocation2 + $0x68] sm:$0xff]
    %v1787 = vld [vmem:[#allocation2 + $0x70] sm:$0xff]
    %v1788 = vld [vmem:[#allocation2 + $0x78] sm:$0xff]
    %v1789 = vld [vmem:[#allocation2 + $0x80] sm:$0xff]
    %v1790 = vld [vmem:[#allocation2 + $0x88] sm:$0xff]
    %v1791 = vld [vmem:[#allocation2 + $0x90] sm:$0xff]
    %v1792 = vld [vmem:[#allocation2 + $0x98] sm:$0xff]
    %v1793 = vld [vmem:[#allocation2 + $0xa0] sm:$0xff]
    %v1794 = vld [vmem:[#allocation2 + $0xa8] sm:$0xff]
    %v1795 = vld [vmem:[#allocation2 + $0xb0] sm:$0xff]
    %v1796 = vld [vmem:[#allocation2 + $0xb8] sm:$0xff]
    %v1797 = vld [vmem:[#allocation2 + $0xc0] sm:$0xff]
    %v1798 = vld [vmem:[#allocation2 + $0xc8] sm:$0xff]
    %v1799 = vld [vmem:[#allocation2 + $0xd0] sm:$0xff]
    %v1800 = vld [vmem:[#allocation2 + $0xd8] sm:$0xff]
    %s1801 = scalar_lea.vmem %s1, 96
    %v1802 = vld [vmem:[%s1801] sm:$0xf]
    %v1803 = vld [vmem:[%s1801 + $0x4] sm:$0xf]
    %v1804 = vld [vmem:[%s1801 + $0x8] sm:$0xf]
    %v1805 = vld [vmem:[%s1801 + $0xc] sm:$0xf]
    %v1810 = vunpack.c.l.b16 %v1802
    %v1811 = vunpack.c.l.b16 %v1803
    %v1812 = vunpack.c.l.b16 %v1804
    %v1813 = vunpack.c.l.b16 %v1805
    %v1814 = vpack.c.b16 %v1811, %v1810
    %v1815 = vpack.c.b16 %v1813, %v1812
    %1816 = vrot.lane.b32.xlu0 %v131, 92
    %v1817 = vpop.permute.xlu0 %1816
    %1818 = vrot.lane.b32.xlu0 %v132, 92
    %v1819 = vpop.permute.xlu0 %1818
    %1820 = vrot.lane.b32.xlu0 %v133, 92
    %v1821 = vpop.permute.xlu0 %1820
    %1822 = vrot.lane.b32.xlu0 %v134, 92
    %v1823 = vpop.permute.xlu0 %1822
    %1824 = vrot.lane.b32.xlu0 %v135, 92
    %v1825 = vpop.permute.xlu0 %1824
    %1826 = vrot.lane.b32.xlu0 %v136, 92
    %v1827 = vpop.permute.xlu0 %1826
    %1828 = vrot.lane.b32.xlu0 %v137, 92
    %v1829 = vpop.permute.xlu0 %1828
    %1830 = vrot.lane.b32.xlu0 %v400, 92
    %v1831 = vpop.permute.xlu0 %1830
    %vm1832 = vcmask 752640
    %v1833 = vsel %vm1832, %v1817, %v1819
    %v1834 = vsel %vm1832, %v1819, %v1821
    %v1835 = vsel %vm1832, %v1821, %v1823
    %v1836 = vsel %vm1832, %v1823, %v1825
    %v1837 = vsel %vm1832, %v1825, %v1827
    %v1838 = vsel %vm1832, %v1827, %v1829
    %v1839 = vsel %vm1832, %v1829, %v1831
    %v1841 = vsel %vm138, %v1814, 0
    %v1844 = vsel %vm138, %v1815, 0
    %v1847 = vsel %vm145, %v1833, 0
    %v1850 = vsel %vm145, %v1834, 0
    %v1853 = vsel %vm145, %v1835, 0
    %v1856 = vsel %vm145, %v1836, 0
    %v1859 = vsel %vm145, %v1837, 0
    %v1862 = vsel %vm145, %v1838, 0
    %v1865 = vsel %vm145, %v1839, 0
    %1867 = vmatpush.bf16.msra.mxu0 0
    %1868 = vmatpush.bf16.msra.mxu0 0
    %1869 = vmatpush.bf16.msra.mxu0 0
    %1870 = vmatpush.bf16.msra.mxu0 0
    %1871 = vmatpush.bf16.msra.mxu0 0
    %1872 = vmatpush.bf16.msra.mxu0 0
    %1873 = vmatpush.bf16.msra.mxu0 0
    %1874 = vmatpush.bf16.msra.mxu0 %v1847
    %1875 = vmatmul.bf16.gmra.mxu0 %v1841
    %v1876 = vpop.f32.mrf.mxu0
    %v1877 = vadd.f32 0.0, %v1876
    %v1878 = vpop.f32.mrf.mxu0
    %v1879 = vadd.f32 0.0, %v1878
    %1880 = vmatmul.bf16.gmra.mxu0 %v1844
    %v1881 = vpop.f32.mrf.mxu0
    %v1882 = vadd.f32 0.0, %v1881
    %v1883 = vpop.f32.mrf.mxu0
    %v1884 = vadd.f32 0.0, %v1883
    %1885 = vdwg.mxu0
    %1886 = vmatpush.bf16.msra.mxu0 0
    %1887 = vmatpush.bf16.msra.mxu0 0
    %1888 = vmatpush.bf16.msra.mxu0 0
    %1889 = vmatpush.bf16.msra.mxu0 0
    %1890 = vmatpush.bf16.msra.mxu0 0
    %1891 = vmatpush.bf16.msra.mxu0 0
    %1892 = vmatpush.bf16.msra.mxu0 0
    %1893 = vmatpush.bf16.msra.mxu0 %v1850
    %1894 = vmatmul.bf16.gmra.mxu0 %v1841
    %v1895 = vpop.f32.mrf.mxu0
    %v1896 = vadd.f32 0.0, %v1895
    %v1897 = vpop.f32.mrf.mxu0
    %v1898 = vadd.f32 0.0, %v1897
    %1899 = vmatmul.bf16.gmra.mxu0 %v1844
    %v1900 = vpop.f32.mrf.mxu0
    %v1901 = vadd.f32 0.0, %v1900
    %v1902 = vpop.f32.mrf.mxu0
    %v1903 = vadd.f32 0.0, %v1902
    %1904 = vdwg.mxu0
    %1905 = vmatpush.bf16.msra.mxu0 0
    %1906 = vmatpush.bf16.msra.mxu0 0
    %1907 = vmatpush.bf16.msra.mxu0 0
    %1908 = vmatpush.bf16.msra.mxu0 0
    %1909 = vmatpush.bf16.msra.mxu0 0
    %1910 = vmatpush.bf16.msra.mxu0 0
    %1911 = vmatpush.bf16.msra.mxu0 0
    %1912 = vmatpush.bf16.msra.mxu0 %v1853
    %1913 = vmatmul.bf16.gmra.mxu0 %v1841
    %v1914 = vpop.f32.mrf.mxu0
    %v1915 = vadd.f32 0.0, %v1914
    %v1916 = vpop.f32.mrf.mxu0
    %v1917 = vadd.f32 0.0, %v1916
    %1918 = vmatmul.bf16.gmra.mxu0 %v1844
    %v1919 = vpop.f32.mrf.mxu0
    %v1920 = vadd.f32 0.0, %v1919
    %v1921 = vpop.f32.mrf.mxu0
    %v1922 = vadd.f32 0.0, %v1921
    %1923 = vdwg.mxu0
    %1924 = vmatpush.bf16.msra.mxu0 0
    %1925 = vmatpush.bf16.msra.mxu0 0
    %1926 = vmatpush.bf16.msra.mxu0 0
    %1927 = vmatpush.bf16.msra.mxu0 0
    %1928 = vmatpush.bf16.msra.mxu0 0
    %1929 = vmatpush.bf16.msra.mxu0 0
    %1930 = vmatpush.bf16.msra.mxu0 0
    %1931 = vmatpush.bf16.msra.mxu0 %v1856
    %1932 = vmatmul.bf16.gmra.mxu0 %v1841
    %v1933 = vpop.f32.mrf.mxu0
    %v1934 = vadd.f32 0.0, %v1933
    %v1935 = vpop.f32.mrf.mxu0
    %v1936 = vadd.f32 0.0, %v1935
    %1937 = vmatmul.bf16.gmra.mxu0 %v1844
    %v1938 = vpop.f32.mrf.mxu0
    %v1939 = vadd.f32 0.0, %v1938
    %v1940 = vpop.f32.mrf.mxu0
    %v1941 = vadd.f32 0.0, %v1940
    %1942 = vdwg.mxu0
    %1943 = vmatpush.bf16.msra.mxu0 0
    %1944 = vmatpush.bf16.msra.mxu0 0
    %1945 = vmatpush.bf16.msra.mxu0 0
    %1946 = vmatpush.bf16.msra.mxu0 0
    %1947 = vmatpush.bf16.msra.mxu0 0
    %1948 = vmatpush.bf16.msra.mxu0 0
    %1949 = vmatpush.bf16.msra.mxu0 0
    %1950 = vmatpush.bf16.msra.mxu0 %v1859
    %1951 = vmatmul.bf16.gmra.mxu0 %v1841
    %v1952 = vpop.f32.mrf.mxu0
    %v1953 = vadd.f32 0.0, %v1952
    %v1954 = vpop.f32.mrf.mxu0
    %v1955 = vadd.f32 0.0, %v1954
    %1956 = vmatmul.bf16.gmra.mxu0 %v1844
    %v1957 = vpop.f32.mrf.mxu0
    %v1958 = vadd.f32 0.0, %v1957
    %v1959 = vpop.f32.mrf.mxu0
    %v1960 = vadd.f32 0.0, %v1959
    %1961 = vdwg.mxu0
    %1962 = vmatpush.bf16.msra.mxu0 0
    %1963 = vmatpush.bf16.msra.mxu0 0
    %1964 = vmatpush.bf16.msra.mxu0 0
    %1965 = vmatpush.bf16.msra.mxu0 0
    %1966 = vmatpush.bf16.msra.mxu0 0
    %1967 = vmatpush.bf16.msra.mxu0 0
    %1968 = vmatpush.bf16.msra.mxu0 0
    %1969 = vmatpush.bf16.msra.mxu0 %v1862
    %1970 = vmatmul.bf16.gmra.mxu0 %v1841
    %v1971 = vpop.f32.mrf.mxu0
    %v1972 = vadd.f32 0.0, %v1971
    %v1973 = vpop.f32.mrf.mxu0
    %v1974 = vadd.f32 0.0, %v1973
    %1975 = vmatmul.bf16.gmra.mxu0 %v1844
    %v1976 = vpop.f32.mrf.mxu0
    %v1977 = vadd.f32 0.0, %v1976
    %v1978 = vpop.f32.mrf.mxu0
    %v1979 = vadd.f32 0.0, %v1978
    %1980 = vdwg.mxu0
    %1981 = vmatpush.bf16.msra.mxu0 0
    %1982 = vmatpush.bf16.msra.mxu0 0
    %1983 = vmatpush.bf16.msra.mxu0 0
    %1984 = vmatpush.bf16.msra.mxu0 0
    %1985 = vmatpush.bf16.msra.mxu0 0
    %1986 = vmatpush.bf16.msra.mxu0 0
    %1987 = vmatpush.bf16.msra.mxu0 0
    %1988 = vmatpush.bf16.msra.mxu0 %v1865
    %1989 = vmatmul.bf16.gmra.mxu0 %v1841
    %v1990 = vpop.f32.mrf.mxu0
    %v1991 = vadd.f32 0.0, %v1990
    %v1992 = vpop.f32.mrf.mxu0
    %v1993 = vadd.f32 0.0, %v1992
    %1994 = vmatmul.bf16.gmra.mxu0 %v1844
    %v1995 = vpop.f32.mrf.mxu0
    %v1996 = vadd.f32 0.0, %v1995
    %v1997 = vpop.f32.mrf.mxu0
    %v1998 = vadd.f32 0.0, %v1997
    %1999 = vdwg.mxu0
    %v2000 = vadd.f32 %v1773, %v1877
    %v2001 = vadd.f32 %v1774, %v1896
    %v2002 = vadd.f32 %v1775, %v1915
    %v2003 = vadd.f32 %v1776, %v1934
    %v2004 = vadd.f32 %v1777, %v1953
    %v2005 = vadd.f32 %v1778, %v1972
    %v2006 = vadd.f32 %v1779, %v1991
    %v2007 = vadd.f32 %v1780, %v1879
    %v2008 = vadd.f32 %v1781, %v1898
    %v2009 = vadd.f32 %v1782, %v1917
    %v2010 = vadd.f32 %v1783, %v1936
    %v2011 = vadd.f32 %v1784, %v1955
    %v2012 = vadd.f32 %v1785, %v1974
    %v2013 = vadd.f32 %v1786, %v1993
    %v2014 = vadd.f32 %v1787, %v1882
    %v2015 = vadd.f32 %v1788, %v1901
    %v2016 = vadd.f32 %v1789, %v1920
    %v2017 = vadd.f32 %v1790, %v1939
    %v2018 = vadd.f32 %v1791, %v1958
    %v2019 = vadd.f32 %v1792, %v1977
    %v2020 = vadd.f32 %v1793, %v1996
    %v2021 = vadd.f32 %v1794, %v1884
    %v2022 = vadd.f32 %v1795, %v1903
    %v2023 = vadd.f32 %v1796, %v1922
    %v2024 = vadd.f32 %v1797, %v1941
    %v2025 = vadd.f32 %v1798, %v1960
    %v2026 = vadd.f32 %v1799, %v1979
    %v2027 = vadd.f32 %v1800, %v1998
    %2028 = vst [vmem:[#allocation2] sm:$0xff] %v2000
    %2029 = vst [vmem:[#allocation2 + $0x8] sm:$0xff] %v2001
    %2030 = vst [vmem:[#allocation2 + $0x10] sm:$0xff] %v2002
    %2031 = vst [vmem:[#allocation2 + $0x18] sm:$0xff] %v2003
    %2032 = vst [vmem:[#allocation2 + $0x20] sm:$0xff] %v2004
    %2033 = vst [vmem:[#allocation2 + $0x28] sm:$0xff] %v2005
    %2034 = vst [vmem:[#allocation2 + $0x30] sm:$0xff] %v2006
    %2035 = vst [vmem:[#allocation2 + $0x38] sm:$0xff] %v2007
    %2036 = vst [vmem:[#allocation2 + $0x40] sm:$0xff] %v2008
    %2037 = vst [vmem:[#allocation2 + $0x48] sm:$0xff] %v2009
    %2038 = vst [vmem:[#allocation2 + $0x50] sm:$0xff] %v2010
    %2039 = vst [vmem:[#allocation2 + $0x58] sm:$0xff] %v2011
    %2040 = vst [vmem:[#allocation2 + $0x60] sm:$0xff] %v2012
    %2041 = vst [vmem:[#allocation2 + $0x68] sm:$0xff] %v2013
    %2042 = vst [vmem:[#allocation2 + $0x70] sm:$0xff] %v2014
    %2043 = vst [vmem:[#allocation2 + $0x78] sm:$0xff] %v2015
    %2044 = vst [vmem:[#allocation2 + $0x80] sm:$0xff] %v2016
    %2045 = vst [vmem:[#allocation2 + $0x88] sm:$0xff] %v2017
    %2046 = vst [vmem:[#allocation2 + $0x90] sm:$0xff] %v2018
    %2047 = vst [vmem:[#allocation2 + $0x98] sm:$0xff] %v2019
    %2048 = vst [vmem:[#allocation2 + $0xa0] sm:$0xff] %v2020
    %2049 = vst [vmem:[#allocation2 + $0xa8] sm:$0xff] %v2021
    %2050 = vst [vmem:[#allocation2 + $0xb0] sm:$0xff] %v2022
    %2051 = vst [vmem:[#allocation2 + $0xb8] sm:$0xff] %v2023
    %2052 = vst [vmem:[#allocation2 + $0xc0] sm:$0xff] %v2024
    %2053 = vst [vmem:[#allocation2 + $0xc8] sm:$0xff] %v2025
    %2054 = vst [vmem:[#allocation2 + $0xd0] sm:$0xff] %v2026
    %2055 = vst [vmem:[#allocation2 + $0xd8] sm:$0xff] %v2027
    %v2056 = vld [vmem:[#allocation2] sm:$0xff]
    %v2057 = vld [vmem:[#allocation2 + $0x8] sm:$0xff]
    %v2058 = vld [vmem:[#allocation2 + $0x10] sm:$0xff]
    %v2059 = vld [vmem:[#allocation2 + $0x18] sm:$0xff]
    %v2060 = vld [vmem:[#allocation2 + $0x20] sm:$0xff]
    %v2061 = vld [vmem:[#allocation2 + $0x28] sm:$0xff]
    %v2062 = vld [vmem:[#allocation2 + $0x30] sm:$0xff]
    %v2063 = vld [vmem:[#allocation2 + $0x38] sm:$0xff]
    %v2064 = vld [vmem:[#allocation2 + $0x40] sm:$0xff]
    %v2065 = vld [vmem:[#allocation2 + $0x48] sm:$0xff]
    %v2066 = vld [vmem:[#allocation2 + $0x50] sm:$0xff]
    %v2067 = vld [vmem:[#allocation2 + $0x58] sm:$0xff]
    %v2068 = vld [vmem:[#allocation2 + $0x60] sm:$0xff]
    %v2069 = vld [vmem:[#allocation2 + $0x68] sm:$0xff]
    %v2070 = vld [vmem:[#allocation2 + $0x70] sm:$0xff]
    %v2071 = vld [vmem:[#allocation2 + $0x78] sm:$0xff]
    %v2072 = vld [vmem:[#allocation2 + $0x80] sm:$0xff]
    %v2073 = vld [vmem:[#allocation2 + $0x88] sm:$0xff]
    %v2074 = vld [vmem:[#allocation2 + $0x90] sm:$0xff]
    %v2075 = vld [vmem:[#allocation2 + $0x98] sm:$0xff]
    %v2076 = vld [vmem:[#allocation2 + $0xa0] sm:$0xff]
    %v2077 = vld [vmem:[#allocation2 + $0xa8] sm:$0xff]
    %v2078 = vld [vmem:[#allocation2 + $0xb0] sm:$0xff]
    %v2079 = vld [vmem:[#allocation2 + $0xb8] sm:$0xff]
    %v2080 = vld [vmem:[#allocation2 + $0xc0] sm:$0xff]
    %v2081 = vld [vmem:[#allocation2 + $0xc8] sm:$0xff]
    %v2082 = vld [vmem:[#allocation2 + $0xd0] sm:$0xff]
    %v2083 = vld [vmem:[#allocation2 + $0xd8] sm:$0xff]
    %s2084 = scalar_lea.vmem %s1, 112
    %v2085 = vld [vmem:[%s2084] sm:$0xf]
    %v2086 = vld [vmem:[%s2084 + $0x4] sm:$0xf]
    %v2087 = vld [vmem:[%s2084 + $0x8] sm:$0xf]
    %v2088 = vld [vmem:[%s2084 + $0xc] sm:$0xf]
    %v2093 = vunpack.c.l.b16 %v2085
    %v2094 = vunpack.c.l.b16 %v2086
    %v2095 = vunpack.c.l.b16 %v2087
    %v2096 = vunpack.c.l.b16 %v2088
    %v2097 = vpack.c.b16 %v2094, %v2093
    %v2098 = vpack.c.b16 %v2096, %v2095
    %2099 = vrot.lane.b32.xlu0 %v131, 91
    %v2100 = vpop.permute.xlu0 %2099
    %2101 = vrot.lane.b32.xlu0 %v132, 91
    %v2102 = vpop.permute.xlu0 %2101
    %2103 = vrot.lane.b32.xlu0 %v133, 91
    %v2104 = vpop.permute.xlu0 %2103
    %2105 = vrot.lane.b32.xlu0 %v134, 91
    %v2106 = vpop.permute.xlu0 %2105
    %2107 = vrot.lane.b32.xlu0 %v135, 91
    %v2108 = vpop.permute.xlu0 %2107
    %2109 = vrot.lane.b32.xlu0 %v136, 91
    %v2110 = vpop.permute.xlu0 %2109
    %2111 = vrot.lane.b32.xlu0 %v137, 91
    %v2112 = vpop.permute.xlu0 %2111
    %2113 = vrot.lane.b32.xlu0 %v400, 91
    %v2114 = vpop.permute.xlu0 %2113
    %vm2115 = vcmask 744448
    %v2116 = vsel %vm2115, %v2100, %v2102
    %v2117 = vsel %vm2115, %v2102, %v2104
    %v2118 = vsel %vm2115, %v2104, %v2106
    %v2119 = vsel %vm2115, %v2106, %v2108
    %v2120 = vsel %vm2115, %v2108, %v2110
    %v2121 = vsel %vm2115, %v2110, %v2112
    %v2122 = vsel %vm2115, %v2112, %v2114
    %v2124 = vsel %vm138, %v2097, 0
    %v2127 = vsel %vm138, %v2098, 0
    %v2130 = vsel %vm145, %v2116, 0
    %v2133 = vsel %vm145, %v2117, 0
    %v2136 = vsel %vm145, %v2118, 0
    %v2139 = vsel %vm145, %v2119, 0
    %v2142 = vsel %vm145, %v2120, 0
    %v2145 = vsel %vm145, %v2121, 0
    %v2148 = vsel %vm145, %v2122, 0
    %2150 = vmatpush.bf16.msra.mxu0 0
    %2151 = vmatpush.bf16.msra.mxu0 0
    %2152 = vmatpush.bf16.msra.mxu0 0
    %2153 = vmatpush.bf16.msra.mxu0 0
    %2154 = vmatpush.bf16.msra.mxu0 0
    %2155 = vmatpush.bf16.msra.mxu0 0
    %2156 = vmatpush.bf16.msra.mxu0 0
    %2157 = vmatpush.bf16.msra.mxu0 %v2130
    %2158 = vmatmul.bf16.gmra.mxu0 %v2124
    %v2159 = vpop.f32.mrf.mxu0
    %v2160 = vadd.f32 0.0, %v2159
    %v2161 = vpop.f32.mrf.mxu0
    %v2162 = vadd.f32 0.0, %v2161
    %2163 = vmatmul.bf16.gmra.mxu0 %v2127
    %v2164 = vpop.f32.mrf.mxu0
    %v2165 = vadd.f32 0.0, %v2164
    %v2166 = vpop.f32.mrf.mxu0
    %v2167 = vadd.f32 0.0, %v2166
    %2168 = vdwg.mxu0
    %2169 = vmatpush.bf16.msra.mxu0 0
    %2170 = vmatpush.bf16.msra.mxu0 0
    %2171 = vmatpush.bf16.msra.mxu0 0
    %2172 = vmatpush.bf16.msra.mxu0 0
    %2173 = vmatpush.bf16.msra.mxu0 0
    %2174 = vmatpush.bf16.msra.mxu0 0
    %2175 = vmatpush.bf16.msra.mxu0 0
    %2176 = vmatpush.bf16.msra.mxu0 %v2133
    %2177 = vmatmul.bf16.gmra.mxu0 %v2124
    %v2178 = vpop.f32.mrf.mxu0
    %v2179 = vadd.f32 0.0, %v2178
    %v2180 = vpop.f32.mrf.mxu0
    %v2181 = vadd.f32 0.0, %v2180
    %2182 = vmatmul.bf16.gmra.mxu0 %v2127
    %v2183 = vpop.f32.mrf.mxu0
    %v2184 = vadd.f32 0.0, %v2183
    %v2185 = vpop.f32.mrf.mxu0
    %v2186 = vadd.f32 0.0, %v2185
    %2187 = vdwg.mxu0
    %2188 = vmatpush.bf16.msra.mxu0 0
    %2189 = vmatpush.bf16.msra.mxu0 0
    %2190 = vmatpush.bf16.msra.mxu0 0
    %2191 = vmatpush.bf16.msra.mxu0 0
    %2192 = vmatpush.bf16.msra.mxu0 0
    %2193 = vmatpush.bf16.msra.mxu0 0
    %2194 = vmatpush.bf16.msra.mxu0 0
    %2195 = vmatpush.bf16.msra.mxu0 %v2136
    %2196 = vmatmul.bf16.gmra.mxu0 %v2124
    %v2197 = vpop.f32.mrf.mxu0
    %v2198 = vadd.f32 0.0, %v2197
    %v2199 = vpop.f32.mrf.mxu0
    %v2200 = vadd.f32 0.0, %v2199
    %2201 = vmatmul.bf16.gmra.mxu0 %v2127
    %v2202 = vpop.f32.mrf.mxu0
    %v2203 = vadd.f32 0.0, %v2202
    %v2204 = vpop.f32.mrf.mxu0
    %v2205 = vadd.f32 0.0, %v2204
    %2206 = vdwg.mxu0
    %2207 = vmatpush.bf16.msra.mxu0 0
    %2208 = vmatpush.bf16.msra.mxu0 0
    %2209 = vmatpush.bf16.msra.mxu0 0
    %2210 = vmatpush.bf16.msra.mxu0 0
    %2211 = vmatpush.bf16.msra.mxu0 0
    %2212 = vmatpush.bf16.msra.mxu0 0
    %2213 = vmatpush.bf16.msra.mxu0 0
    %2214 = vmatpush.bf16.msra.mxu0 %v2139
    %2215 = vmatmul.bf16.gmra.mxu0 %v2124
    %v2216 = vpop.f32.mrf.mxu0
    %v2217 = vadd.f32 0.0, %v2216
    %v2218 = vpop.f32.mrf.mxu0
    %v2219 = vadd.f32 0.0, %v2218
    %2220 = vmatmul.bf16.gmra.mxu0 %v2127
    %v2221 = vpop.f32.mrf.mxu0
    %v2222 = vadd.f32 0.0, %v2221
    %v2223 = vpop.f32.mrf.mxu0
    %v2224 = vadd.f32 0.0, %v2223
    %2225 = vdwg.mxu0
    %2226 = vmatpush.bf16.msra.mxu0 0
    %2227 = vmatpush.bf16.msra.mxu0 0
    %2228 = vmatpush.bf16.msra.mxu0 0
    %2229 = vmatpush.bf16.msra.mxu0 0
    %2230 = vmatpush.bf16.msra.mxu0 0
    %2231 = vmatpush.bf16.msra.mxu0 0
    %2232 = vmatpush.bf16.msra.mxu0 0
    %2233 = vmatpush.bf16.msra.mxu0 %v2142
    %2234 = vmatmul.bf16.gmra.mxu0 %v2124
    %v2235 = vpop.f32.mrf.mxu0
    %v2236 = vadd.f32 0.0, %v2235
    %v2237 = vpop.f32.mrf.mxu0
    %v2238 = vadd.f32 0.0, %v2237
    %2239 = vmatmul.bf16.gmra.mxu0 %v2127
    %v2240 = vpop.f32.mrf.mxu0
    %v2241 = vadd.f32 0.0, %v2240
    %v2242 = vpop.f32.mrf.mxu0
    %v2243 = vadd.f32 0.0, %v2242
    %2244 = vdwg.mxu0
    %2245 = vmatpush.bf16.msra.mxu0 0
    %2246 = vmatpush.bf16.msra.mxu0 0
    %2247 = vmatpush.bf16.msra.mxu0 0
    %2248 = vmatpush.bf16.msra.mxu0 0
    %2249 = vmatpush.bf16.msra.mxu0 0
    %2250 = vmatpush.bf16.msra.mxu0 0
    %2251 = vmatpush.bf16.msra.mxu0 0
    %2252 = vmatpush.bf16.msra.mxu0 %v2145
    %2253 = vmatmul.bf16.gmra.mxu0 %v2124
    %v2254 = vpop.f32.mrf.mxu0
    %v2255 = vadd.f32 0.0, %v2254
    %v2256 = vpop.f32.mrf.mxu0
    %v2257 = vadd.f32 0.0, %v2256
    %2258 = vmatmul.bf16.gmra.mxu0 %v2127
    %v2259 = vpop.f32.mrf.mxu0
    %v2260 = vadd.f32 0.0, %v2259
    %v2261 = vpop.f32.mrf.mxu0
    %v2262 = vadd.f32 0.0, %v2261
    %2263 = vdwg.mxu0
    %2264 = vmatpush.bf16.msra.mxu0 0
    %2265 = vmatpush.bf16.msra.mxu0 0
    %2266 = vmatpush.bf16.msra.mxu0 0
    %2267 = vmatpush.bf16.msra.mxu0 0
    %2268 = vmatpush.bf16.msra.mxu0 0
    %2269 = vmatpush.bf16.msra.mxu0 0
    %2270 = vmatpush.bf16.msra.mxu0 0
    %2271 = vmatpush.bf16.msra.mxu0 %v2148
    %2272 = vmatmul.bf16.gmra.mxu0 %v2124
    %v2273 = vpop.f32.mrf.mxu0
    %v2274 = vadd.f32 0.0, %v2273
    %v2275 = vpop.f32.mrf.mxu0
    %v2276 = vadd.f32 0.0, %v2275
    %2277 = vmatmul.bf16.gmra.mxu0 %v2127
    %v2278 = vpop.f32.mrf.mxu0
    %v2279 = vadd.f32 0.0, %v2278
    %v2280 = vpop.f32.mrf.mxu0
    %v2281 = vadd.f32 0.0, %v2280
    %2282 = vdwg.mxu0
    %v2283 = vadd.f32 %v2056, %v2160
    %v2284 = vadd.f32 %v2057, %v2179
    %v2285 = vadd.f32 %v2058, %v2198
    %v2286 = vadd.f32 %v2059, %v2217
    %v2287 = vadd.f32 %v2060, %v2236
    %v2288 = vadd.f32 %v2061, %v2255
    %v2289 = vadd.f32 %v2062, %v2274
    %v2290 = vadd.f32 %v2063, %v2162
    %v2291 = vadd.f32 %v2064, %v2181
    %v2292 = vadd.f32 %v2065, %v2200
    %v2293 = vadd.f32 %v2066, %v2219
    %v2294 = vadd.f32 %v2067, %v2238
    %v2295 = vadd.f32 %v2068, %v2257
    %v2296 = vadd.f32 %v2069, %v2276
    %v2297 = vadd.f32 %v2070, %v2165
    %v2298 = vadd.f32 %v2071, %v2184
    %v2299 = vadd.f32 %v2072, %v2203
    %v2300 = vadd.f32 %v2073, %v2222
    %v2301 = vadd.f32 %v2074, %v2241
    %v2302 = vadd.f32 %v2075, %v2260
    %v2303 = vadd.f32 %v2076, %v2279
    %v2304 = vadd.f32 %v2077, %v2167
    %v2305 = vadd.f32 %v2078, %v2186
    %v2306 = vadd.f32 %v2079, %v2205
    %v2307 = vadd.f32 %v2080, %v2224
    %v2308 = vadd.f32 %v2081, %v2243
    %v2309 = vadd.f32 %v2082, %v2262
    %v2310 = vadd.f32 %v2083, %v2281
    %2311 = vst [vmem:[#allocation2] sm:$0xff] %v2283
    %2312 = vst [vmem:[#allocation2 + $0x8] sm:$0xff] %v2284
    %2313 = vst [vmem:[#allocation2 + $0x10] sm:$0xff] %v2285
    %2314 = vst [vmem:[#allocation2 + $0x18] sm:$0xff] %v2286
    %2315 = vst [vmem:[#allocation2 + $0x20] sm:$0xff] %v2287
    %2316 = vst [vmem:[#allocation2 + $0x28] sm:$0xff] %v2288
    %2317 = vst [vmem:[#allocation2 + $0x30] sm:$0xff] %v2289
    %2318 = vst [vmem:[#allocation2 + $0x38] sm:$0xff] %v2290
    %2319 = vst [vmem:[#allocation2 + $0x40] sm:$0xff] %v2291
    %2320 = vst [vmem:[#allocation2 + $0x48] sm:$0xff] %v2292
    %2321 = vst [vmem:[#allocation2 + $0x50] sm:$0xff] %v2293
    %2322 = vst [vmem:[#allocation2 + $0x58] sm:$0xff] %v2294
    %2323 = vst [vmem:[#allocation2 + $0x60] sm:$0xff] %v2295
    %2324 = vst [vmem:[#allocation2 + $0x68] sm:$0xff] %v2296
    %2325 = vst [vmem:[#allocation2 + $0x70] sm:$0xff] %v2297
    %2326 = vst [vmem:[#allocation2 + $0x78] sm:$0xff] %v2298
    %2327 = vst [vmem:[#allocation2 + $0x80] sm:$0xff] %v2299
    %2328 = vst [vmem:[#allocation2 + $0x88] sm:$0xff] %v2300
    %2329 = vst [vmem:[#allocation2 + $0x90] sm:$0xff] %v2301
    %2330 = vst [vmem:[#allocation2 + $0x98] sm:$0xff] %v2302
    %2331 = vst [vmem:[#allocation2 + $0xa0] sm:$0xff] %v2303
    %2332 = vst [vmem:[#allocation2 + $0xa8] sm:$0xff] %v2304
    %2333 = vst [vmem:[#allocation2 + $0xb0] sm:$0xff] %v2305
    %2334 = vst [vmem:[#allocation2 + $0xb8] sm:$0xff] %v2306
    %2335 = vst [vmem:[#allocation2 + $0xc0] sm:$0xff] %v2307
    %2336 = vst [vmem:[#allocation2 + $0xc8] sm:$0xff] %v2308
    %2337 = vst [vmem:[#allocation2 + $0xd0] sm:$0xff] %v2309
    %2338 = vst [vmem:[#allocation2 + $0xd8] sm:$0xff] %v2310
    %v2339 = vld [vmem:[#allocation2] sm:$0xff]
    %v2340 = vld [vmem:[#allocation2 + $0x8] sm:$0xff]
    %v2341 = vld [vmem:[#allocation2 + $0x10] sm:$0xff]
    %v2342 = vld [vmem:[#allocation2 + $0x18] sm:$0xff]
    %v2343 = vld [vmem:[#allocation2 + $0x20] sm:$0xff]
    %v2344 = vld [vmem:[#allocation2 + $0x28] sm:$0xff]
    %v2345 = vld [vmem:[#allocation2 + $0x30] sm:$0xff]
    %v2346 = vld [vmem:[#allocation2 + $0x38] sm:$0xff]
    %v2347 = vld [vmem:[#allocation2 + $0x40] sm:$0xff]
    %v2348 = vld [vmem:[#allocation2 + $0x48] sm:$0xff]
    %v2349 = vld [vmem:[#allocation2 + $0x50] sm:$0xff]
    %v2350 = vld [vmem:[#allocation2 + $0x58] sm:$0xff]
    %v2351 = vld [vmem:[#allocation2 + $0x60] sm:$0xff]
    %v2352 = vld [vmem:[#allocation2 + $0x68] sm:$0xff]
    %v2353 = vld [vmem:[#allocation2 + $0x70] sm:$0xff]
    %v2354 = vld [vmem:[#allocation2 + $0x78] sm:$0xff]
    %v2355 = vld [vmem:[#allocation2 + $0x80] sm:$0xff]
    %v2356 = vld [vmem:[#allocation2 + $0x88] sm:$0xff]
    %v2357 = vld [vmem:[#allocation2 + $0x90] sm:$0xff]
    %v2358 = vld [vmem:[#allocation2 + $0x98] sm:$0xff]
    %v2359 = vld [vmem:[#allocation2 + $0xa0] sm:$0xff]
    %v2360 = vld [vmem:[#allocation2 + $0xa8] sm:$0xff]
    %v2361 = vld [vmem:[#allocation2 + $0xb0] sm:$0xff]
    %v2362 = vld [vmem:[#allocation2 + $0xb8] sm:$0xff]
    %v2363 = vld [vmem:[#allocation2 + $0xc0] sm:$0xff]
    %v2364 = vld [vmem:[#allocation2 + $0xc8] sm:$0xff]
    %v2365 = vld [vmem:[#allocation2 + $0xd0] sm:$0xff]
    %v2366 = vld [vmem:[#allocation2 + $0xd8] sm:$0xff]
    %s2367 = scalar_lea.vmem %s1, 128
    %v2368 = vld [vmem:[%s2367] sm:$0xf]
    %v2369 = vld [vmem:[%s2367 + $0x4] sm:$0xf]
    %v2370 = vld [vmem:[%s2367 + $0x8] sm:$0xf]
    %v2371 = vld [vmem:[%s2367 + $0xc] sm:$0xf]
    %v2376 = vunpack.c.l.b16 %v2368
    %v2377 = vunpack.c.l.b16 %v2369
    %v2378 = vunpack.c.l.b16 %v2370
    %v2379 = vunpack.c.l.b16 %v2371
    %v2380 = vpack.c.b16 %v2377, %v2376
    %v2381 = vpack.c.b16 %v2379, %v2378
    %2382 = vrot.lane.b32.xlu0 %v131, 90
    %v2383 = vpop.permute.xlu0 %2382
    %2384 = vrot.lane.b32.xlu0 %v132, 90
    %v2385 = vpop.permute.xlu0 %2384
    %2386 = vrot.lane.b32.xlu0 %v133, 90
    %v2387 = vpop.permute.xlu0 %2386
    %2388 = vrot.lane.b32.xlu0 %v134, 90
    %v2389 = vpop.permute.xlu0 %2388
    %2390 = vrot.lane.b32.xlu0 %v135, 90
    %v2391 = vpop.permute.xlu0 %2390
    %2392 = vrot.lane.b32.xlu0 %v136, 90
    %v2393 = vpop.permute.xlu0 %2392
    %2394 = vrot.lane.b32.xlu0 %v137, 90
    %v2395 = vpop.permute.xlu0 %2394
    %2396 = vrot.lane.b32.xlu0 %v400, 90
    %v2397 = vpop.permute.xlu0 %2396
    %vm2398 = vcmask 736256
    %v2399 = vsel %vm2398, %v2383, %v2385
    %v2400 = vsel %vm2398, %v2385, %v2387
    %v2401 = vsel %vm2398, %v2387, %v2389
    %v2402 = vsel %vm2398, %v2389, %v2391
    %v2403 = vsel %vm2398, %v2391, %v2393
    %v2404 = vsel %vm2398, %v2393, %v2395
    %v2405 = vsel %vm2398, %v2395, %v2397
    %v2407 = vsel %vm138, %v2380, 0
    %v2410 = vsel %vm138, %v2381, 0
    %v2413 = vsel %vm145, %v2399, 0
    %v2416 = vsel %vm145, %v2400, 0
    %v2419 = vsel %vm145, %v2401, 0
    %v2422 = vsel %vm145, %v2402, 0
    %v2425 = vsel %vm145, %v2403, 0
    %v2428 = vsel %vm145, %v2404, 0
    %v2431 = vsel %vm145, %v2405, 0
    %2433 = vmatpush.bf16.msra.mxu0 0
    %2434 = vmatpush.bf16.msra.mxu0 0
    %2435 = vmatpush.bf16.msra.mxu0 0
    %2436 = vmatpush.bf16.msra.mxu0 0
    %2437 = vmatpush.bf16.msra.mxu0 0
    %2438 = vmatpush.bf16.msra.mxu0 0
    %2439 = vmatpush.bf16.msra.mxu0 0
    %2440 = vmatpush.bf16.msra.mxu0 %v2413
    %2441 = vmatmul.bf16.gmra.mxu0 %v2407
    %v2442 = vpop.f32.mrf.mxu0
    %v2443 = vadd.f32 0.0, %v2442
    %v2444 = vpop.f32.mrf.mxu0
    %v2445 = vadd.f32 0.0, %v2444
    %2446 = vmatmul.bf16.gmra.mxu0 %v2410
    %v2447 = vpop.f32.mrf.mxu0
    %v2448 = vadd.f32 0.0, %v2447
    %v2449 = vpop.f32.mrf.mxu0
    %v2450 = vadd.f32 0.0, %v2449
    %2451 = vdwg.mxu0
    %2452 = vmatpush.bf16.msra.mxu0 0
    %2453 = vmatpush.bf16.msra.mxu0 0
    %2454 = vmatpush.bf16.msra.mxu0 0
    %2455 = vmatpush.bf16.msra.mxu0 0
    %2456 = vmatpush.bf16.msra.mxu0 0
    %2457 = vmatpush.bf16.msra.mxu0 0
    %2458 = vmatpush.bf16.msra.mxu0 0
    %2459 = vmatpush.bf16.msra.mxu0 %v2416
    %2460 = vmatmul.bf16.gmra.mxu0 %v2407
    %v2461 = vpop.f32.mrf.mxu0
    %v2462 = vadd.f32 0.0, %v2461
    %v2463 = vpop.f32.mrf.mxu0
    %v2464 = vadd.f32 0.0, %v2463
    %2465 = vmatmul.bf16.gmra.mxu0 %v2410
    %v2466 = vpop.f32.mrf.mxu0
    %v2467 = vadd.f32 0.0, %v2466
    %v2468 = vpop.f32.mrf.mxu0
    %v2469 = vadd.f32 0.0, %v2468
    %2470 = vdwg.mxu0
    %2471 = vmatpush.bf16.msra.mxu0 0
    %2472 = vmatpush.bf16.msra.mxu0 0
    %2473 = vmatpush.bf16.msra.mxu0 0
    %2474 = vmatpush.bf16.msra.mxu0 0
    %2475 = vmatpush.bf16.msra.mxu0 0
    %2476 = vmatpush.bf16.msra.mxu0 0
    %2477 = vmatpush.bf16.msra.mxu0 0
    %2478 = vmatpush.bf16.msra.mxu0 %v2419
    %2479 = vmatmul.bf16.gmra.mxu0 %v2407
    %v2480 = vpop.f32.mrf.mxu0
    %v2481 = vadd.f32 0.0, %v2480
    %v2482 = vpop.f32.mrf.mxu0
    %v2483 = vadd.f32 0.0, %v2482
    %2484 = vmatmul.bf16.gmra.mxu0 %v2410
    %v2485 = vpop.f32.mrf.mxu0
    %v2486 = vadd.f32 0.0, %v2485
    %v2487 = vpop.f32.mrf.mxu0
    %v2488 = vadd.f32 0.0, %v2487
    %2489 = vdwg.mxu0
    %2490 = vmatpush.bf16.msra.mxu0 0
    %2491 = vmatpush.bf16.msra.mxu0 0
    %2492 = vmatpush.bf16.msra.mxu0 0
    %2493 = vmatpush.bf16.msra.mxu0 0
    %2494 = vmatpush.bf16.msra.mxu0 0
    %2495 = vmatpush.bf16.msra.mxu0 0
    %2496 = vmatpush.bf16.msra.mxu0 0
    %2497 = vmatpush.bf16.msra.mxu0 %v2422
    %2498 = vmatmul.bf16.gmra.mxu0 %v2407
    %v2499 = vpop.f32.mrf.mxu0
    %v2500 = vadd.f32 0.0, %v2499
    %v2501 = vpop.f32.mrf.mxu0
    %v2502 = vadd.f32 0.0, %v2501
    %2503 = vmatmul.bf16.gmra.mxu0 %v2410
    %v2504 = vpop.f32.mrf.mxu0
    %v2505 = vadd.f32 0.0, %v2504
    %v2506 = vpop.f32.mrf.mxu0
    %v2507 = vadd.f32 0.0, %v2506
    %2508 = vdwg.mxu0
    %2509 = vmatpush.bf16.msra.mxu0 0
    %2510 = vmatpush.bf16.msra.mxu0 0
    %2511 = vmatpush.bf16.msra.mxu0 0
    %2512 = vmatpush.bf16.msra.mxu0 0
    %2513 = vmatpush.bf16.msra.mxu0 0
    %2514 = vmatpush.bf16.msra.mxu0 0
    %2515 = vmatpush.bf16.msra.mxu0 0
    %2516 = vmatpush.bf16.msra.mxu0 %v2425
    %2517 = vmatmul.bf16.gmra.mxu0 %v2407
    %v2518 = vpop.f32.mrf.mxu0
    %v2519 = vadd.f32 0.0, %v2518
    %v2520 = vpop.f32.mrf.mxu0
    %v2521 = vadd.f32 0.0, %v2520
    %2522 = vmatmul.bf16.gmra.mxu0 %v2410
    %v2523 = vpop.f32.mrf.mxu0
    %v2524 = vadd.f32 0.0, %v2523
    %v2525 = vpop.f32.mrf.mxu0
    %v2526 = vadd.f32 0.0, %v2525
    %2527 = vdwg.mxu0
    %2528 = vmatpush.bf16.msra.mxu0 0
    %2529 = vmatpush.bf16.msra.mxu0 0
    %2530 = vmatpush.bf16.msra.mxu0 0
    %2531 = vmatpush.bf16.msra.mxu0 0
    %2532 = vmatpush.bf16.msra.mxu0 0
    %2533 = vmatpush.bf16.msra.mxu0 0
    %2534 = vmatpush.bf16.msra.mxu0 0
    %2535 = vmatpush.bf16.msra.mxu0 %v2428
    %2536 = vmatmul.bf16.gmra.mxu0 %v2407
    %v2537 = vpop.f32.mrf.mxu0
    %v2538 = vadd.f32 0.0, %v2537
    %v2539 = vpop.f32.mrf.mxu0
    %v2540 = vadd.f32 0.0, %v2539
    %2541 = vmatmul.bf16.gmra.mxu0 %v2410
    %v2542 = vpop.f32.mrf.mxu0
    %v2543 = vadd.f32 0.0, %v2542
    %v2544 = vpop.f32.mrf.mxu0
    %v2545 = vadd.f32 0.0, %v2544
    %2546 = vdwg.mxu0
    %2547 = vmatpush.bf16.msra.mxu0 0
    %2548 = vmatpush.bf16.msra.mxu0 0
    %2549 = vmatpush.bf16.msra.mxu0 0
    %2550 = vmatpush.bf16.msra.mxu0 0
    %2551 = vmatpush.bf16.msra.mxu0 0
    %2552 = vmatpush.bf16.msra.mxu0 0
    %2553 = vmatpush.bf16.msra.mxu0 0
    %2554 = vmatpush.bf16.msra.mxu0 %v2431
    %2555 = vmatmul.bf16.gmra.mxu0 %v2407
    %v2556 = vpop.f32.mrf.mxu0
    %v2557 = vadd.f32 0.0, %v2556
    %v2558 = vpop.f32.mrf.mxu0
    %v2559 = vadd.f32 0.0, %v2558
    %2560 = vmatmul.bf16.gmra.mxu0 %v2410
    %v2561 = vpop.f32.mrf.mxu0
    %v2562 = vadd.f32 0.0, %v2561
    %v2563 = vpop.f32.mrf.mxu0
    %v2564 = vadd.f32 0.0, %v2563
    %2565 = vdwg.mxu0
    %v2566 = vadd.f32 %v2339, %v2443
    %v2567 = vadd.f32 %v2340, %v2462
    %v2568 = vadd.f32 %v2341, %v2481
    %v2569 = vadd.f32 %v2342, %v2500
    %v2570 = vadd.f32 %v2343, %v2519
    %v2571 = vadd.f32 %v2344, %v2538
    %v2572 = vadd.f32 %v2345, %v2557
    %v2573 = vadd.f32 %v2346, %v2445
    %v2574 = vadd.f32 %v2347, %v2464
    %v2575 = vadd.f32 %v2348, %v2483
    %v2576 = vadd.f32 %v2349, %v2502
    %v2577 = vadd.f32 %v2350, %v2521
    %v2578 = vadd.f32 %v2351, %v2540
    %v2579 = vadd.f32 %v2352, %v2559
    %v2580 = vadd.f32 %v2353, %v2448
    %v2581 = vadd.f32 %v2354, %v2467
    %v2582 = vadd.f32 %v2355, %v2486
    %v2583 = vadd.f32 %v2356, %v2505
    %v2584 = vadd.f32 %v2357, %v2524
    %v2585 = vadd.f32 %v2358, %v2543
    %v2586 = vadd.f32 %v2359, %v2562
    %v2587 = vadd.f32 %v2360, %v2450
    %v2588 = vadd.f32 %v2361, %v2469
    %v2589 = vadd.f32 %v2362, %v2488
    %v2590 = vadd.f32 %v2363, %v2507
    %v2591 = vadd.f32 %v2364, %v2526
    %v2592 = vadd.f32 %v2365, %v2545
    %v2593 = vadd.f32 %v2366, %v2564
    %2594 = vst [vmem:[#allocation2] sm:$0xff] %v2566
    %2595 = vst [vmem:[#allocation2 + $0x8] sm:$0xff] %v2567
    %2596 = vst [vmem:[#allocation2 + $0x10] sm:$0xff] %v2568
    %2597 = vst [vmem:[#allocation2 + $0x18] sm:$0xff] %v2569
    %2598 = vst [vmem:[#allocation2 + $0x20] sm:$0xff] %v2570
    %2599 = vst [vmem:[#allocation2 + $0x28] sm:$0xff] %v2571
    %2600 = vst [vmem:[#allocation2 + $0x30] sm:$0xff] %v2572
    %2601 = vst [vmem:[#allocation2 + $0x38] sm:$0xff] %v2573
    %2602 = vst [vmem:[#allocation2 + $0x40] sm:$0xff] %v2574
    %2603 = vst [vmem:[#allocation2 + $0x48] sm:$0xff] %v2575
    %2604 = vst [vmem:[#allocation2 + $0x50] sm:$0xff] %v2576
    %2605 = vst [vmem:[#allocation2 + $0x58] sm:$0xff] %v2577
    %2606 = vst [vmem:[#allocation2 + $0x60] sm:$0xff] %v2578
    %2607 = vst [vmem:[#allocation2 + $0x68] sm:$0xff] %v2579
    %2608 = vst [vmem:[#allocation2 + $0x70] sm:$0xff] %v2580
    %2609 = vst [vmem:[#allocation2 + $0x78] sm:$0xff] %v2581
    %2610 = vst [vmem:[#allocation2 + $0x80] sm:$0xff] %v2582
    %2611 = vst [vmem:[#allocation2 + $0x88] sm:$0xff] %v2583
    %2612 = vst [vmem:[#allocation2 + $0x90] sm:$0xff] %v2584
    %2613 = vst [vmem:[#allocation2 + $0x98] sm:$0xff] %v2585
    %2614 = vst [vmem:[#allocation2 + $0xa0] sm:$0xff] %v2586
    %2615 = vst [vmem:[#allocation2 + $0xa8] sm:$0xff] %v2587
    %2616 = vst [vmem:[#allocation2 + $0xb0] sm:$0xff] %v2588
    %2617 = vst [vmem:[#allocation2 + $0xb8] sm:$0xff] %v2589
    %2618 = vst [vmem:[#allocation2 + $0xc0] sm:$0xff] %v2590
    %2619 = vst [vmem:[#allocation2 + $0xc8] sm:$0xff] %v2591
    %2620 = vst [vmem:[#allocation2 + $0xd0] sm:$0xff] %v2592
    %2621 = vst [vmem:[#allocation2 + $0xd8] sm:$0xff] %v2593
    %v2622 = vld [vmem:[#allocation2] sm:$0xff]
    %v2623 = vld [vmem:[#allocation2 + $0x8] sm:$0xff]
    %v2624 = vld [vmem:[#allocation2 + $0x10] sm:$0xff]
    %v2625 = vld [vmem:[#allocation2 + $0x18] sm:$0xff]
    %v2626 = vld [vmem:[#allocation2 + $0x20] sm:$0xff]
    %v2627 = vld [vmem:[#allocation2 + $0x28] sm:$0xff]
    %v2628 = vld [vmem:[#allocation2 + $0x30] sm:$0xff]
    %v2629 = vld [vmem:[#allocation2 + $0x38] sm:$0xff]
    %v2630 = vld [vmem:[#allocation2 + $0x40] sm:$0xff]
    %v2631 = vld [vmem:[#allocation2 + $0x48] sm:$0xff]
    %v2632 = vld [vmem:[#allocation2 + $0x50] sm:$0xff]
    %v2633 = vld [vmem:[#allocation2 + $0x58] sm:$0xff]
    %v2634 = vld [vmem:[#allocation2 + $0x60] sm:$0xff]
    %v2635 = vld [vmem:[#allocation2 + $0x68] sm:$0xff]
    %v2636 = vld [vmem:[#allocation2 + $0x70] sm:$0xff]
    %v2637 = vld [vmem:[#allocation2 + $0x78] sm:$0xff]
    %v2638 = vld [vmem:[#allocation2 + $0x80] sm:$0xff]
    %v2639 = vld [vmem:[#allocation2 + $0x88] sm:$0xff]
    %v2640 = vld [vmem:[#allocation2 + $0x90] sm:$0xff]
    %v2641 = vld [vmem:[#allocation2 + $0x98] sm:$0xff]
    %v2642 = vld [vmem:[#allocation2 + $0xa0] sm:$0xff]
    %v2643 = vld [vmem:[#allocation2 + $0xa8] sm:$0xff]
    %v2644 = vld [vmem:[#allocation2 + $0xb0] sm:$0xff]
    %v2645 = vld [vmem:[#allocation2 + $0xb8] sm:$0xff]
    %v2646 = vld [vmem:[#allocation2 + $0xc0] sm:$0xff]
    %v2647 = vld [vmem:[#allocation2 + $0xc8] sm:$0xff]
    %v2648 = vld [vmem:[#allocation2 + $0xd0] sm:$0xff]
    %v2649 = vld [vmem:[#allocation2 + $0xd8] sm:$0xff]
    %vm2650 = vcmp.gt.f32.partialorder %v2622, 0.0
    %vm2651 = vcmp.gt.f32.partialorder %v2623, 0.0
    %vm2652 = vcmp.gt.f32.partialorder %v2624, 0.0
    %vm2653 = vcmp.gt.f32.partialorder %v2625, 0.0
    %vm2654 = vcmp.gt.f32.partialorder %v2626, 0.0
    %vm2655 = vcmp.gt.f32.partialorder %v2627, 0.0
    %vm2656 = vcmp.gt.f32.partialorder %v2628, 0.0
    %vm2657 = vcmp.gt.f32.partialorder %v2629, 0.0
    %vm2658 = vcmp.gt.f32.partialorder %v2630, 0.0
    %vm2659 = vcmp.gt.f32.partialorder %v2631, 0.0
    %vm2660 = vcmp.gt.f32.partialorder %v2632, 0.0
    %vm2661 = vcmp.gt.f32.partialorder %v2633, 0.0
    %vm2662 = vcmp.gt.f32.partialorder %v2634, 0.0
    %vm2663 = vcmp.gt.f32.partialorder %v2635, 0.0
    %vm2664 = vcmp.gt.f32.partialorder %v2636, 0.0
    %vm2665 = vcmp.gt.f32.partialorder %v2637, 0.0
    %vm2666 = vcmp.gt.f32.partialorder %v2638, 0.0
    %vm2667 = vcmp.gt.f32.partialorder %v2639, 0.0
    %vm2668 = vcmp.gt.f32.partialorder %v2640, 0.0
    %vm2669 = vcmp.gt.f32.partialorder %v2641, 0.0
    %vm2670 = vcmp.gt.f32.partialorder %v2642, 0.0
    %vm2671 = vcmp.gt.f32.partialorder %v2643, 0.0
    %vm2672 = vcmp.gt.f32.partialorder %v2644, 0.0
    %vm2673 = vcmp.gt.f32.partialorder %v2645, 0.0
    %vm2674 = vcmp.gt.f32.partialorder %v2646, 0.0
    %vm2675 = vcmp.gt.f32.partialorder %v2647, 0.0
    %vm2676 = vcmp.gt.f32.partialorder %v2648, 0.0
    %vm2677 = vcmp.gt.f32.partialorder %v2649, 0.0
    %v2678 = vmul.f32 %v2622, 0.01
    %v2679 = vmul.f32 %v2623, 0.01
    %v2680 = vmul.f32 %v2624, 0.01
    %v2681 = vmul.f32 %v2625, 0.01
    %v2682 = vmul.f32 %v2626, 0.01
    %v2683 = vmul.f32 %v2627, 0.01
    %v2684 = vmul.f32 %v2628, 0.01
    %v2685 = vmul.f32 %v2629, 0.01
    %v2686 = vmul.f32 %v2630, 0.01
    %v2687 = vmul.f32 %v2631, 0.01
    %v2688 = vmul.f32 %v2632, 0.01
    %v2689 = vmul.f32 %v2633, 0.01
    %v2690 = vmul.f32 %v2634, 0.01
    %v2691 = vmul.f32 %v2635, 0.01
    %v2692 = vmul.f32 %v2636, 0.01
    %v2693 = vmul.f32 %v2637, 0.01
    %v2694 = vmul.f32 %v2638, 0.01
    %v2695 = vmul.f32 %v2639, 0.01
    %v2696 = vmul.f32 %v2640, 0.01
    %v2697 = vmul.f32 %v2641, 0.01
    %v2698 = vmul.f32 %v2642, 0.01
    %v2699 = vmul.f32 %v2643, 0.01
    %v2700 = vmul.f32 %v2644, 0.01
    %v2701 = vmul.f32 %v2645, 0.01
    %v2702 = vmul.f32 %v2646, 0.01
    %v2703 = vmul.f32 %v2647, 0.01
    %v2704 = vmul.f32 %v2648, 0.01
    %v2705 = vmul.f32 %v2649, 0.01
    %v2706 = vsel %vm2650, %v2622, %v2678
    %v2707 = vsel %vm2651, %v2623, %v2679
    %v2708 = vsel %vm2652, %v2624, %v2680
    %v2709 = vsel %vm2653, %v2625, %v2681
    %v2710 = vsel %vm2654, %v2626, %v2682
    %v2711 = vsel %vm2655, %v2627, %v2683
    %v2712 = vsel %vm2656, %v2628, %v2684
    %v2713 = vsel %vm2657, %v2629, %v2685
    %v2714 = vsel %vm2658, %v2630, %v2686
    %v2715 = vsel %vm2659, %v2631, %v2687
    %v2716 = vsel %vm2660, %v2632, %v2688
    %v2717 = vsel %vm2661, %v2633, %v2689
    %v2718 = vsel %vm2662, %v2634, %v2690
    %v2719 = vsel %vm2663, %v2635, %v2691
    %v2720 = vsel %vm2664, %v2636, %v2692
    %v2721 = vsel %vm2665, %v2637, %v2693
    %v2722 = vsel %vm2666, %v2638, %v2694
    %v2723 = vsel %vm2667, %v2639, %v2695
    %v2724 = vsel %vm2668, %v2640, %v2696
    %v2725 = vsel %vm2669, %v2641, %v2697
    %v2726 = vsel %vm2670, %v2642, %v2698
    %v2727 = vsel %vm2671, %v2643, %v2699
    %v2728 = vsel %vm2672, %v2644, %v2700
    %v2729 = vsel %vm2673, %v2645, %v2701
    %v2730 = vsel %vm2674, %v2646, %v2702
    %v2731 = vsel %vm2675, %v2647, %v2703
    %v2732 = vsel %vm2676, %v2648, %v2704
    %v2733 = vsel %vm2677, %v2649, %v2705
    %v2734 = vpack.c.bf16 %v2707, %v2706
    %v2735 = vpack.c.bf16 %v2709, %v2708
    %v2736 = vpack.c.bf16 %v2711, %v2710
    %v2737 = vpack.c.bf16 %v2712, %v2712
    %v2738 = vpack.c.bf16 %v2714, %v2713
    %v2739 = vpack.c.bf16 %v2716, %v2715
    %v2740 = vpack.c.bf16 %v2718, %v2717
    %v2741 = vpack.c.bf16 %v2719, %v2719
    %v2742 = vpack.c.bf16 %v2721, %v2720
    %v2743 = vpack.c.bf16 %v2723, %v2722
    %v2744 = vpack.c.bf16 %v2725, %v2724
    %v2745 = vpack.c.bf16 %v2726, %v2726
    %v2746 = vpack.c.bf16 %v2728, %v2727
    %v2747 = vpack.c.bf16 %v2730, %v2729
    %v2748 = vpack.c.bf16 %v2732, %v2731
    %v2749 = vpack.c.bf16 %v2733, %v2733
    %2750 = vst [vmem:[#allocation3] sm:$0xff] %v2734
    %2751 = vst [vmem:[#allocation3 + $0x8] sm:$0xff] %v2735
    %2752 = vst [vmem:[#allocation3 + $0x10] sm:$0xff] %v2736
    %2753 = vst [vmem:[#allocation3 + $0x18] sm:$0xf] %v2737
    %2754 = vst [vmem:[#allocation3 + $0x1c] sm:$0xff] %v2738
    %2755 = vst [vmem:[#allocation3 + $0x24] sm:$0xff] %v2739
    %2756 = vst [vmem:[#allocation3 + $0x2c] sm:$0xff] %v2740
    %2757 = vst [vmem:[#allocation3 + $0x34] sm:$0xf] %v2741
    %2758 = vst [vmem:[#allocation3 + $0x38] sm:$0xff] %v2742
    %2759 = vst [vmem:[#allocation3 + $0x40] sm:$0xff] %v2743
    %2760 = vst [vmem:[#allocation3 + $0x48] sm:$0xff] %v2744
    %2761 = vst [vmem:[#allocation3 + $0x50] sm:$0xf] %v2745
    %2762 = vst [vmem:[#allocation3 + $0x54] sm:$0xff] %v2746
    %2763 = vst [vmem:[#allocation3 + $0x5c] sm:$0xff] %v2747
    %2764 = vst [vmem:[#allocation3 + $0x64] sm:$0xff] %v2748
    %2765 = vst [vmem:[#allocation3 + $0x6c] sm:$0xf] %v2749
    %v2766 = vld [vmem:[%s4] sm:$0xff]
    %2768 = vset.pattern.permute.xlu0 0
    %2769 = vperm.xlu0 %2768, %v2766
    %v2770 = vpop.permute.xlu0 %2769
    %v2772 = vld [vmem:[%s3] sm:$0xf]
    %v2773 = vld [vmem:[#allocation3] sm:$0xff]
    %v2774 = vld [vmem:[#allocation3 + $0x8] sm:$0xff]
    %v2775 = vld [vmem:[#allocation3 + $0x10] sm:$0xff]
    %v2776 = vld [vmem:[#allocation3 + $0x1c] sm:$0xff]
    %v2777 = vld [vmem:[#allocation3 + $0x24] sm:$0xff]
    %v2778 = vld [vmem:[#allocation3 + $0x2c] sm:$0xff]
    %v2779 = vld [vmem:[#allocation3 + $0x38] sm:$0xff]
    %v2780 = vld [vmem:[#allocation3 + $0x40] sm:$0xff]
    %v2781 = vld [vmem:[#allocation3 + $0x48] sm:$0xff]
    %v2782 = vld [vmem:[#allocation3 + $0x54] sm:$0xff]
    %v2783 = vld [vmem:[#allocation3 + $0x5c] sm:$0xff]
    %v2784 = vld [vmem:[#allocation3 + $0x64] sm:$0xff]
    %v2797 = vunpack.c.l.b16 %v2773
    %v2798 = vunpack.c.h.b16 %v2773
    %v2799 = vunpack.c.l.b16 %v2774
    %v2800 = vunpack.c.h.b16 %v2774
    %v2801 = vunpack.c.l.b16 %v2775
    %v2802 = vunpack.c.h.b16 %v2775
    %v2803 = vunpack.c.l.b16 %v2776
    %v2804 = vunpack.c.h.b16 %v2776
    %v2805 = vunpack.c.l.b16 %v2777
    %v2806 = vunpack.c.h.b16 %v2777
    %v2807 = vunpack.c.l.b16 %v2778
    %v2808 = vunpack.c.h.b16 %v2778
    %v2809 = vunpack.c.l.b16 %v2779
    %v2810 = vunpack.c.h.b16 %v2779
    %v2811 = vunpack.c.l.b16 %v2780
    %v2812 = vunpack.c.h.b16 %v2780
    %v2813 = vunpack.c.l.b16 %v2781
    %v2814 = vunpack.c.h.b16 %v2781
    %v2815 = vunpack.c.l.b16 %v2782
    %v2816 = vunpack.c.h.b16 %v2782
    %v2817 = vunpack.c.l.b16 %v2783
    %v2818 = vunpack.c.h.b16 %v2783
    %v2819 = vunpack.c.l.b16 %v2784
    %v2820 = vunpack.c.h.b16 %v2784
    %v2821 = vpack.c.b16 %v2803, %v2797
    %v2822 = vpack.c.b16 %v2804, %v2798
    %v2823 = vpack.c.b16 %v2805, %v2799
    %v2824 = vpack.c.b16 %v2806, %v2800
    %v2825 = vpack.c.b16 %v2807, %v2801
    %v2826 = vpack.c.b16 %v2808, %v2802
    %v2827 = vpack.c.b16 %v2815, %v2809
    %v2828 = vpack.c.b16 %v2816, %v2810
    %v2829 = vpack.c.b16 %v2817, %v2811
    %v2830 = vpack.c.b16 %v2818, %v2812
    %v2831 = vpack.c.b16 %v2819, %v2813
    %v2832 = vpack.c.b16 %v2820, %v2814
    %vm2845 = vcmask 261120
    %v2847 = vsel %vm2845, %v2772, 0
    %2849 = vmatpush.bf16.msra.mxu0 0
    %2850 = vmatpush.bf16.msra.mxu0 0
    %2851 = vmatpush.bf16.msra.mxu0 0
    %2852 = vmatpush.bf16.msra.mxu0 0
    %2853 = vmatpush.bf16.msra.mxu0 0
    %2854 = vmatpush.bf16.msra.mxu0 0
    %2855 = vmatpush.bf16.msra.mxu0 %v2827
    %2856 = vmatpush.bf16.msra.mxu0 %v2821
    %2857 = vmatmul.bf16.gmra.mxu0 %v2847
    %v2858 = vpop.f32.mrf.mxu0
    %v2859 = vadd.f32 0.0, %v2858
    %v2860 = vpop.f32.mrf.mxu0
    %2861 = vdwg.mxu0
    %2862 = vmatpush.bf16.msra.mxu0 0
    %2863 = vmatpush.bf16.msra.mxu0 0
    %2864 = vmatpush.bf16.msra.mxu0 0
    %2865 = vmatpush.bf16.msra.mxu0 0
    %2866 = vmatpush.bf16.msra.mxu0 0
    %2867 = vmatpush.bf16.msra.mxu0 0
    %2868 = vmatpush.bf16.msra.mxu0 %v2828
    %2869 = vmatpush.bf16.msra.mxu0 %v2822
    %2870 = vmatmul.bf16.gmra.mxu0 %v2847
    %v2871 = vpop.f32.mrf.mxu0
    %v2872 = vadd.f32 0.0, %v2871
    %v2873 = vpop.f32.mrf.mxu0
    %2874 = vdwg.mxu0
    %2875 = vmatpush.bf16.msra.mxu0 0
    %2876 = vmatpush.bf16.msra.mxu0 0
    %2877 = vmatpush.bf16.msra.mxu0 0
    %2878 = vmatpush.bf16.msra.mxu0 0
    %2879 = vmatpush.bf16.msra.mxu0 0
    %2880 = vmatpush.bf16.msra.mxu0 0
    %2881 = vmatpush.bf16.msra.mxu0 %v2829
    %2882 = vmatpush.bf16.msra.mxu0 %v2823
    %2883 = vmatmul.bf16.gmra.mxu0 %v2847
    %v2884 = vpop.f32.mrf.mxu0
    %v2885 = vadd.f32 0.0, %v2884
    %v2886 = vpop.f32.mrf.mxu0
    %2887 = vdwg.mxu0
    %2888 = vmatpush.bf16.msra.mxu0 0
    %2889 = vmatpush.bf16.msra.mxu0 0
    %2890 = vmatpush.bf16.msra.mxu0 0
    %2891 = vmatpush.bf16.msra.mxu0 0
    %2892 = vmatpush.bf16.msra.mxu0 0
    %2893 = vmatpush.bf16.msra.mxu0 0
    %2894 = vmatpush.bf16.msra.mxu0 %v2830
    %2895 = vmatpush.bf16.msra.mxu0 %v2824
    %2896 = vmatmul.bf16.gmra.mxu0 %v2847
    %v2897 = vpop.f32.mrf.mxu0
    %v2898 = vadd.f32 0.0, %v2897
    %v2899 = vpop.f32.mrf.mxu0
    %2900 = vdwg.mxu0
    %2901 = vmatpush.bf16.msra.mxu0 0
    %2902 = vmatpush.bf16.msra.mxu0 0
    %2903 = vmatpush.bf16.msra.mxu0 0
    %2904 = vmatpush.bf16.msra.mxu0 0
    %2905 = vmatpush.bf16.msra.mxu0 0
    %2906 = vmatpush.bf16.msra.mxu0 0
    %2907 = vmatpush.bf16.msra.mxu0 %v2831
    %2908 = vmatpush.bf16.msra.mxu0 %v2825
    %2909 = vmatmul.bf16.gmra.mxu0 %v2847
    %v2910 = vpop.f32.mrf.mxu0
    %v2911 = vadd.f32 0.0, %v2910
    %v2912 = vpop.f32.mrf.mxu0
    %2913 = vdwg.mxu0
    %2914 = vmatpush.bf16.msra.mxu0 0
    %2915 = vmatpush.bf16.msra.mxu0 0
    %2916 = vmatpush.bf16.msra.mxu0 0
    %2917 = vmatpush.bf16.msra.mxu0 0
    %2918 = vmatpush.bf16.msra.mxu0 0
    %2919 = vmatpush.bf16.msra.mxu0 0
    %2920 = vmatpush.bf16.msra.mxu0 %v2832
    %2921 = vmatpush.bf16.msra.mxu0 %v2826
    %2922 = vmatmul.bf16.gmra.mxu0 %v2847
    %v2923 = vpop.f32.mrf.mxu0
    %v2924 = vadd.f32 0.0, %v2923
    %v2925 = vpop.f32.mrf.mxu0
    %2926 = vdwg.mxu0
    %v2927 = vadd.f32 %v2770, %v2859
    %v2928 = vadd.f32 %v2770, %v2872
    %v2929 = vadd.f32 %v2770, %v2885
    %v2930 = vadd.f32 %v2770, %v2898
    %v2931 = vadd.f32 %v2770, %v2911
    %v2932 = vadd.f32 %v2770, %v2924
    %s2933 = scalar_lea.vmem %s3, 4
    %v2934 = vld [vmem:[%s2933] sm:$0xf]
    %v2935 = vld [vmem:[#allocation3] sm:$0xff]
    %v2936 = vld [vmem:[#allocation3 + $0x8] sm:$0xff]
    %v2937 = vld [vmem:[#allocation3 + $0x10] sm:$0xff]
    %v2938 = vld [vmem:[#allocation3 + $0x18] sm:$0xf]
    %v2939 = vld [vmem:[#allocation3 + $0x1c] sm:$0xff]
    %v2940 = vld [vmem:[#allocation3 + $0x24] sm:$0xff]
    %v2941 = vld [vmem:[#allocation3 + $0x2c] sm:$0xff]
    %v2942 = vld [vmem:[#allocation3 + $0x34] sm:$0xf]
    %v2943 = vld [vmem:[#allocation3 + $0x38] sm:$0xff]
    %v2944 = vld [vmem:[#allocation3 + $0x40] sm:$0xff]
    %v2945 = vld [vmem:[#allocation3 + $0x48] sm:$0xff]
    %v2946 = vld [vmem:[#allocation3 + $0x50] sm:$0xf]
    %v2947 = vld [vmem:[#allocation3 + $0x54] sm:$0xff]
    %v2948 = vld [vmem:[#allocation3 + $0x5c] sm:$0xff]
    %v2949 = vld [vmem:[#allocation3 + $0x64] sm:$0xff]
    %v2950 = vld [vmem:[#allocation3 + $0x6c] sm:$0xf]
    %v2967 = vunpack.c.l.b16 %v2935
    %v2968 = vunpack.c.h.b16 %v2935
    %v2969 = vunpack.c.l.b16 %v2936
    %v2970 = vunpack.c.h.b16 %v2936
    %v2971 = vunpack.c.l.b16 %v2937
    %v2972 = vunpack.c.h.b16 %v2937
    %v2973 = vunpack.c.l.b16 %v2938
    %v2974 = vunpack.c.l.b16 %v2939
    %v2975 = vunpack.c.h.b16 %v2939
    %v2976 = vunpack.c.l.b16 %v2940
    %v2977 = vunpack.c.h.b16 %v2940
    %v2978 = vunpack.c.l.b16 %v2941
    %v2979 = vunpack.c.h.b16 %v2941
    %v2980 = vunpack.c.l.b16 %v2942
    %v2981 = vunpack.c.l.b16 %v2943
    %v2982 = vunpack.c.h.b16 %v2943
    %v2983 = vunpack.c.l.b16 %v2944
    %v2984 = vunpack.c.h.b16 %v2944
    %v2985 = vunpack.c.l.b16 %v2945
    %v2986 = vunpack.c.h.b16 %v2945
    %v2987 = vunpack.c.l.b16 %v2946
    %v2988 = vunpack.c.l.b16 %v2947
    %v2989 = vunpack.c.h.b16 %v2947
    %v2990 = vunpack.c.l.b16 %v2948
    %v2991 = vunpack.c.h.b16 %v2948
    %v2992 = vunpack.c.l.b16 %v2949
    %v2993 = vunpack.c.h.b16 %v2949
    %v2994 = vunpack.c.l.b16 %v2950
    %v2995 = vpack.c.b16 %v2974, %v2967
    %v2996 = vpack.c.b16 %v2975, %v2968
    %v2997 = vpack.c.b16 %v2976, %v2969
    %v2998 = vpack.c.b16 %v2977, %v2970
    %v2999 = vpack.c.b16 %v2978, %v2971
    %v3000 = vpack.c.b16 %v2979, %v2972
    %v3001 = vpack.c.b16 %v2980, %v2973
    %v3002 = vpack.c.b16 %v2988, %v2981
    %v3003 = vpack.c.b16 %v2989, %v2982
    %v3004 = vpack.c.b16 %v2990, %v2983
    %v3005 = vpack.c.b16 %v2991, %v2984
    %v3006 = vpack.c.b16 %v2992, %v2985
    %v3007 = vpack.c.b16 %v2993, %v2986
    %v3008 = vpack.c.b16 %v2994, %v2987
    %3009 = vrot.lane.b32.xlu0 %v2995, 127
    %v3010 = vpop.permute.xlu0 %3009
    %3011 = vrot.lane.b32.xlu0 %v2996, 127
    %v3012 = vpop.permute.xlu0 %3011
    %3013 = vrot.lane.b32.xlu0 %v2997, 127
    %v3014 = vpop.permute.xlu0 %3013
    %3015 = vrot.lane.b32.xlu0 %v2998, 127
    %v3016 = vpop.permute.xlu0 %3015
    %3017 = vrot.lane.b32.xlu0 %v2999, 127
    %v3018 = vpop.permute.xlu0 %3017
    %3019 = vrot.lane.b32.xlu0 %v3000, 127
    %v3020 = vpop.permute.xlu0 %3019
    %3021 = vrot.lane.b32.xlu0 %v3001, 127
    %v3022 = vpop.permute.xlu0 %3021
    %3023 = vrot.lane.b32.xlu0 %v3002, 127
    %v3024 = vpop.permute.xlu0 %3023
    %3025 = vrot.lane.b32.xlu0 %v3003, 127
    %v3026 = vpop.permute.xlu0 %3025
    %3027 = vrot.lane.b32.xlu0 %v3004, 127
    %v3028 = vpop.permute.xlu0 %3027
    %3029 = vrot.lane.b32.xlu0 %v3005, 127
    %v3030 = vpop.permute.xlu0 %3029
    %3031 = vrot.lane.b32.xlu0 %v3006, 127
    %v3032 = vpop.permute.xlu0 %3031
    %3033 = vrot.lane.b32.xlu0 %v3007, 127
    %v3034 = vpop.permute.xlu0 %3033
    %3035 = vrot.lane.b32.xlu0 %v3008, 127
    %v3036 = vpop.permute.xlu0 %3035
    %v3037 = vsel %vm417, %v3010, %v3012
    %v3038 = vsel %vm417, %v3012, %v3014
    %v3039 = vsel %vm417, %v3014, %v3016
    %v3040 = vsel %vm417, %v3016, %v3018
    %v3041 = vsel %vm417, %v3018, %v3020
    %v3042 = vsel %vm417, %v3020, %v3022
    %v3043 = vsel %vm417, %v3024, %v3026
    %v3044 = vsel %vm417, %v3026, %v3028
    %v3045 = vsel %vm417, %v3028, %v3030
    %v3046 = vsel %vm417, %v3030, %v3032
    %v3047 = vsel %vm417, %v3032, %v3034
    %v3048 = vsel %vm417, %v3034, %v3036
    %v3062 = vsel %vm2845, %v2934, 0
    %3064 = vmatpush.bf16.msra.mxu0 0
    %3065 = vmatpush.bf16.msra.mxu0 0
    %3066 = vmatpush.bf16.msra.mxu0 0
    %3067 = vmatpush.bf16.msra.mxu0 0
    %3068 = vmatpush.bf16.msra.mxu0 0
    %3069 = vmatpush.bf16.msra.mxu0 0
    %3070 = vmatpush.bf16.msra.mxu0 %v3043
    %3071 = vmatpush.bf16.msra.mxu0 %v3037
    %3072 = vmatmul.bf16.gmra.mxu0 %v3062
    %v3073 = vpop.f32.mrf.mxu0
    %v3074 = vadd.f32 0.0, %v3073
    %v3075 = vpop.f32.mrf.mxu0
    %3076 = vdwg.mxu0
    %3077 = vmatpush.bf16.msra.mxu0 0
    %3078 = vmatpush.bf16.msra.mxu0 0
    %3079 = vmatpush.bf16.msra.mxu0 0
    %3080 = vmatpush.bf16.msra.mxu0 0
    %3081 = vmatpush.bf16.msra.mxu0 0
    %3082 = vmatpush.bf16.msra.mxu0 0
    %3083 = vmatpush.bf16.msra.mxu0 %v3044
    %3084 = vmatpush.bf16.msra.mxu0 %v3038
    %3085 = vmatmul.bf16.gmra.mxu0 %v3062
    %v3086 = vpop.f32.mrf.mxu0
    %v3087 = vadd.f32 0.0, %v3086
    %v3088 = vpop.f32.mrf.mxu0
    %3089 = vdwg.mxu0
    %3090 = vmatpush.bf16.msra.mxu0 0
    %3091 = vmatpush.bf16.msra.mxu0 0
    %3092 = vmatpush.bf16.msra.mxu0 0
    %3093 = vmatpush.bf16.msra.mxu0 0
    %3094 = vmatpush.bf16.msra.mxu0 0
    %3095 = vmatpush.bf16.msra.mxu0 0
    %3096 = vmatpush.bf16.msra.mxu0 %v3045
    %3097 = vmatpush.bf16.msra.mxu0 %v3039
    %3098 = vmatmul.bf16.gmra.mxu0 %v3062
    %v3099 = vpop.f32.mrf.mxu0
    %v3100 = vadd.f32 0.0, %v3099
    %v3101 = vpop.f32.mrf.mxu0
    %3102 = vdwg.mxu0
    %3103 = vmatpush.bf16.msra.mxu0 0
    %3104 = vmatpush.bf16.msra.mxu0 0
    %3105 = vmatpush.bf16.msra.mxu0 0
    %3106 = vmatpush.bf16.msra.mxu0 0
    %3107 = vmatpush.bf16.msra.mxu0 0
    %3108 = vmatpush.bf16.msra.mxu0 0
    %3109 = vmatpush.bf16.msra.mxu0 %v3046
    %3110 = vmatpush.bf16.msra.mxu0 %v3040
    %3111 = vmatmul.bf16.gmra.mxu0 %v3062
    %v3112 = vpop.f32.mrf.mxu0
    %v3113 = vadd.f32 0.0, %v3112
    %v3114 = vpop.f32.mrf.mxu0
    %3115 = vdwg.mxu0
    %3116 = vmatpush.bf16.msra.mxu0 0
    %3117 = vmatpush.bf16.msra.mxu0 0
    %3118 = vmatpush.bf16.msra.mxu0 0
    %3119 = vmatpush.bf16.msra.mxu0 0
    %3120 = vmatpush.bf16.msra.mxu0 0
    %3121 = vmatpush.bf16.msra.mxu0 0
    %3122 = vmatpush.bf16.msra.mxu0 %v3047
    %3123 = vmatpush.bf16.msra.mxu0 %v3041
    %3124 = vmatmul.bf16.gmra.mxu0 %v3062
    %v3125 = vpop.f32.mrf.mxu0
    %v3126 = vadd.f32 0.0, %v3125
    %v3127 = vpop.f32.mrf.mxu0
    %3128 = vdwg.mxu0
    %3129 = vmatpush.bf16.msra.mxu0 0
    %3130 = vmatpush.bf16.msra.mxu0 0
    %3131 = vmatpush.bf16.msra.mxu0 0
    %3132 = vmatpush.bf16.msra.mxu0 0
    %3133 = vmatpush.bf16.msra.mxu0 0
    %3134 = vmatpush.bf16.msra.mxu0 0
    %3135 = vmatpush.bf16.msra.mxu0 %v3048
    %3136 = vmatpush.bf16.msra.mxu0 %v3042
    %3137 = vmatmul.bf16.gmra.mxu0 %v3062
    %v3138 = vpop.f32.mrf.mxu0
    %v3139 = vadd.f32 0.0, %v3138
    %v3140 = vpop.f32.mrf.mxu0
    %3141 = vdwg.mxu0
    %v3142 = vadd.f32 %v2927, %v3074
    %v3143 = vadd.f32 %v2928, %v3087
    %v3144 = vadd.f32 %v2929, %v3100
    %v3145 = vadd.f32 %v2930, %v3113
    %v3146 = vadd.f32 %v2931, %v3126
    %v3147 = vadd.f32 %v2932, %v3139
    %s3148 = scalar_lea.vmem %s3, 8
    %v3149 = vld [vmem:[%s3148] sm:$0xf]
    %3150 = vrot.lane.b32.xlu0 %v2995, 126
    %v3151 = vpop.permute.xlu0 %3150
    %3152 = vrot.lane.b32.xlu0 %v2996, 126
    %v3153 = vpop.permute.xlu0 %3152
    %3154 = vrot.lane.b32.xlu0 %v2997, 126
    %v3155 = vpop.permute.xlu0 %3154
    %3156 = vrot.lane.b32.xlu0 %v2998, 126
    %v3157 = vpop.permute.xlu0 %3156
    %3158 = vrot.lane.b32.xlu0 %v2999, 126
    %v3159 = vpop.permute.xlu0 %3158
    %3160 = vrot.lane.b32.xlu0 %v3000, 126
    %v3161 = vpop.permute.xlu0 %3160
    %3162 = vrot.lane.b32.xlu0 %v3001, 126
    %v3163 = vpop.permute.xlu0 %3162
    %3164 = vrot.lane.b32.xlu0 %v3002, 126
    %v3165 = vpop.permute.xlu0 %3164
    %3166 = vrot.lane.b32.xlu0 %v3003, 126
    %v3167 = vpop.permute.xlu0 %3166
    %3168 = vrot.lane.b32.xlu0 %v3004, 126
    %v3169 = vpop.permute.xlu0 %3168
    %3170 = vrot.lane.b32.xlu0 %v3005, 126
    %v3171 = vpop.permute.xlu0 %3170
    %3172 = vrot.lane.b32.xlu0 %v3006, 126
    %v3173 = vpop.permute.xlu0 %3172
    %3174 = vrot.lane.b32.xlu0 %v3007, 126
    %v3175 = vpop.permute.xlu0 %3174
    %3176 = vrot.lane.b32.xlu0 %v3008, 126
    %v3177 = vpop.permute.xlu0 %3176
    %v3178 = vsel %vm700, %v3151, %v3153
    %v3179 = vsel %vm700, %v3153, %v3155
    %v3180 = vsel %vm700, %v3155, %v3157
    %v3181 = vsel %vm700, %v3157, %v3159
    %v3182 = vsel %vm700, %v3159, %v3161
    %v3183 = vsel %vm700, %v3161, %v3163
    %v3184 = vsel %vm700, %v3165, %v3167
    %v3185 = vsel %vm700, %v3167, %v3169
    %v3186 = vsel %vm700, %v3169, %v3171
    %v3187 = vsel %vm700, %v3171, %v3173
    %v3188 = vsel %vm700, %v3173, %v3175
    %v3189 = vsel %vm700, %v3175, %v3177
    %v3203 = vsel %vm2845, %v3149, 0
    %3205 = vmatpush.bf16.msra.mxu0 0
    %3206 = vmatpush.bf16.msra.mxu0 0
    %3207 = vmatpush.bf16.msra.mxu0 0
    %3208 = vmatpush.bf16.msra.mxu0 0
    %3209 = vmatpush.bf16.msra.mxu0 0
    %3210 = vmatpush.bf16.msra.mxu0 0
    %3211 = vmatpush.bf16.msra.mxu0 %v3184
    %3212 = vmatpush.bf16.msra.mxu0 %v3178
    %3213 = vmatmul.bf16.gmra.mxu0 %v3203
    %v3214 = vpop.f32.mrf.mxu0
    %v3215 = vadd.f32 0.0, %v3214
    %v3216 = vpop.f32.mrf.mxu0
    %3217 = vdwg.mxu0
    %3218 = vmatpush.bf16.msra.mxu0 0
    %3219 = vmatpush.bf16.msra.mxu0 0
    %3220 = vmatpush.bf16.msra.mxu0 0
    %3221 = vmatpush.bf16.msra.mxu0 0
    %3222 = vmatpush.bf16.msra.mxu0 0
    %3223 = vmatpush.bf16.msra.mxu0 0
    %3224 = vmatpush.bf16.msra.mxu0 %v3185
    %3225 = vmatpush.bf16.msra.mxu0 %v3179
    %3226 = vmatmul.bf16.gmra.mxu0 %v3203
    %v3227 = vpop.f32.mrf.mxu0
    %v3228 = vadd.f32 0.0, %v3227
    %v3229 = vpop.f32.mrf.mxu0
    %3230 = vdwg.mxu0
    %3231 = vmatpush.bf16.msra.mxu0 0
    %3232 = vmatpush.bf16.msra.mxu0 0
    %3233 = vmatpush.bf16.msra.mxu0 0
    %3234 = vmatpush.bf16.msra.mxu0 0
    %3235 = vmatpush.bf16.msra.mxu0 0
    %3236 = vmatpush.bf16.msra.mxu0 0
    %3237 = vmatpush.bf16.msra.mxu0 %v3186
    %3238 = vmatpush.bf16.msra.mxu0 %v3180
    %3239 = vmatmul.bf16.gmra.mxu0 %v3203
    %v3240 = vpop.f32.mrf.mxu0
    %v3241 = vadd.f32 0.0, %v3240
    %v3242 = vpop.f32.mrf.mxu0
    %3243 = vdwg.mxu0
    %3244 = vmatpush.bf16.msra.mxu0 0
    %3245 = vmatpush.bf16.msra.mxu0 0
    %3246 = vmatpush.bf16.msra.mxu0 0
    %3247 = vmatpush.bf16.msra.mxu0 0
    %3248 = vmatpush.bf16.msra.mxu0 0
    %3249 = vmatpush.bf16.msra.mxu0 0
    %3250 = vmatpush.bf16.msra.mxu0 %v3187
    %3251 = vmatpush.bf16.msra.mxu0 %v3181
    %3252 = vmatmul.bf16.gmra.mxu0 %v3203
    %v3253 = vpop.f32.mrf.mxu0
    %v3254 = vadd.f32 0.0, %v3253
    %v3255 = vpop.f32.mrf.mxu0
    %3256 = vdwg.mxu0
    %3257 = vmatpush.bf16.msra.mxu0 0
    %3258 = vmatpush.bf16.msra.mxu0 0
    %3259 = vmatpush.bf16.msra.mxu0 0
    %3260 = vmatpush.bf16.msra.mxu0 0
    %3261 = vmatpush.bf16.msra.mxu0 0
    %3262 = vmatpush.bf16.msra.mxu0 0
    %3263 = vmatpush.bf16.msra.mxu0 %v3188
    %3264 = vmatpush.bf16.msra.mxu0 %v3182
    %3265 = vmatmul.bf16.gmra.mxu0 %v3203
    %v3266 = vpop.f32.mrf.mxu0
    %v3267 = vadd.f32 0.0, %v3266
    %v3268 = vpop.f32.mrf.mxu0
    %3269 = vdwg.mxu0
    %3270 = vmatpush.bf16.msra.mxu0 0
    %3271 = vmatpush.bf16.msra.mxu0 0
    %3272 = vmatpush.bf16.msra.mxu0 0
    %3273 = vmatpush.bf16.msra.mxu0 0
    %3274 = vmatpush.bf16.msra.mxu0 0
    %3275 = vmatpush.bf16.msra.mxu0 0
    %3276 = vmatpush.bf16.msra.mxu0 %v3189
    %3277 = vmatpush.bf16.msra.mxu0 %v3183
    %3278 = vmatmul.bf16.gmra.mxu0 %v3203
    %v3279 = vpop.f32.mrf.mxu0
    %v3280 = vadd.f32 0.0, %v3279
    %v3281 = vpop.f32.mrf.mxu0
    %3282 = vdwg.mxu0
    %v3283 = vadd.f32 %v3142, %v3215
    %v3284 = vadd.f32 %v3143, %v3228
    %v3285 = vadd.f32 %v3144, %v3241
    %v3286 = vadd.f32 %v3145, %v3254
    %v3287 = vadd.f32 %v3146, %v3267
    %v3288 = vadd.f32 %v3147, %v3280
    %s3289 = scalar_lea.vmem %s3, 12
    %v3290 = vld [vmem:[%s3289] sm:$0xf]
    %3291 = vrot.lane.b32.xlu0 %v2995, 110
    %v3292 = vpop.permute.xlu0 %3291
    %3293 = vrot.lane.b32.xlu0 %v2996, 110
    %v3294 = vpop.permute.xlu0 %3293
    %3295 = vrot.lane.b32.xlu0 %v2997, 110
    %v3296 = vpop.permute.xlu0 %3295
    %3297 = vrot.lane.b32.xlu0 %v2998, 110
    %v3298 = vpop.permute.xlu0 %3297
    %3299 = vrot.lane.b32.xlu0 %v2999, 110
    %v3300 = vpop.permute.xlu0 %3299
    %3301 = vrot.lane.b32.xlu0 %v3000, 110
    %v3302 = vpop.permute.xlu0 %3301
    %3303 = vrot.lane.b32.xlu0 %v3001, 110
    %v3304 = vpop.permute.xlu0 %3303
    %3305 = vrot.lane.b32.xlu0 %v3002, 110
    %v3306 = vpop.permute.xlu0 %3305
    %3307 = vrot.lane.b32.xlu0 %v3003, 110
    %v3308 = vpop.permute.xlu0 %3307
    %3309 = vrot.lane.b32.xlu0 %v3004, 110
    %v3310 = vpop.permute.xlu0 %3309
    %3311 = vrot.lane.b32.xlu0 %v3005, 110
    %v3312 = vpop.permute.xlu0 %3311
    %3313 = vrot.lane.b32.xlu0 %v3006, 110
    %v3314 = vpop.permute.xlu0 %3313
    %3315 = vrot.lane.b32.xlu0 %v3007, 110
    %v3316 = vpop.permute.xlu0 %3315
    %3317 = vrot.lane.b32.xlu0 %v3008, 110
    %v3318 = vpop.permute.xlu0 %3317
    %v3319 = vsel %vm983, %v3292, %v3294
    %v3320 = vsel %vm983, %v3294, %v3296
    %v3321 = vsel %vm983, %v3296, %v3298
    %v3322 = vsel %vm983, %v3298, %v3300
    %v3323 = vsel %vm983, %v3300, %v3302
    %v3324 = vsel %vm983, %v3302, %v3304
    %v3325 = vsel %vm983, %v3306, %v3308
    %v3326 = vsel %vm983, %v3308, %v3310
    %v3327 = vsel %vm983, %v3310, %v3312
    %v3328 = vsel %vm983, %v3312, %v3314
    %v3329 = vsel %vm983, %v3314, %v3316
    %v3330 = vsel %vm983, %v3316, %v3318
    %v3344 = vsel %vm2845, %v3290, 0
    %3346 = vmatpush.bf16.msra.mxu0 0
    %3347 = vmatpush.bf16.msra.mxu0 0
    %3348 = vmatpush.bf16.msra.mxu0 0
    %3349 = vmatpush.bf16.msra.mxu0 0
    %3350 = vmatpush.bf16.msra.mxu0 0
    %3351 = vmatpush.bf16.msra.mxu0 0
    %3352 = vmatpush.bf16.msra.mxu0 %v3325
    %3353 = vmatpush.bf16.msra.mxu0 %v3319
    %3354 = vmatmul.bf16.gmra.mxu0 %v3344
    %v3355 = vpop.f32.mrf.mxu0
    %v3356 = vadd.f32 0.0, %v3355
    %v3357 = vpop.f32.mrf.mxu0
    %3358 = vdwg.mxu0
    %3359 = vmatpush.bf16.msra.mxu0 0
    %3360 = vmatpush.bf16.msra.mxu0 0
    %3361 = vmatpush.bf16.msra.mxu0 0
    %3362 = vmatpush.bf16.msra.mxu0 0
    %3363 = vmatpush.bf16.msra.mxu0 0
    %3364 = vmatpush.bf16.msra.mxu0 0
    %3365 = vmatpush.bf16.msra.mxu0 %v3326
    %3366 = vmatpush.bf16.msra.mxu0 %v3320
    %3367 = vmatmul.bf16.gmra.mxu0 %v3344
    %v3368 = vpop.f32.mrf.mxu0
    %v3369 = vadd.f32 0.0, %v3368
    %v3370 = vpop.f32.mrf.mxu0
    %3371 = vdwg.mxu0
    %3372 = vmatpush.bf16.msra.mxu0 0
    %3373 = vmatpush.bf16.msra.mxu0 0
    %3374 = vmatpush.bf16.msra.mxu0 0
    %3375 = vmatpush.bf16.msra.mxu0 0
    %3376 = vmatpush.bf16.msra.mxu0 0
    %3377 = vmatpush.bf16.msra.mxu0 0
    %3378 = vmatpush.bf16.msra.mxu0 %v3327
    %3379 = vmatpush.bf16.msra.mxu0 %v3321
    %3380 = vmatmul.bf16.gmra.mxu0 %v3344
    %v3381 = vpop.f32.mrf.mxu0
    %v3382 = vadd.f32 0.0, %v3381
    %v3383 = vpop.f32.mrf.mxu0
    %3384 = vdwg.mxu0
    %3385 = vmatpush.bf16.msra.mxu0 0
    %3386 = vmatpush.bf16.msra.mxu0 0
    %3387 = vmatpush.bf16.msra.mxu0 0
    %3388 = vmatpush.bf16.msra.mxu0 0
    %3389 = vmatpush.bf16.msra.mxu0 0
    %3390 = vmatpush.bf16.msra.mxu0 0
    %3391 = vmatpush.bf16.msra.mxu0 %v3328
    %3392 = vmatpush.bf16.msra.mxu0 %v3322
    %3393 = vmatmul.bf16.gmra.mxu0 %v3344
    %v3394 = vpop.f32.mrf.mxu0
    %v3395 = vadd.f32 0.0, %v3394
    %v3396 = vpop.f32.mrf.mxu0
    %3397 = vdwg.mxu0
    %3398 = vmatpush.bf16.msra.mxu0 0
    %3399 = vmatpush.bf16.msra.mxu0 0
    %3400 = vmatpush.bf16.msra.mxu0 0
    %3401 = vmatpush.bf16.msra.mxu0 0
    %3402 = vmatpush.bf16.msra.mxu0 0
    %3403 = vmatpush.bf16.msra.mxu0 0
    %3404 = vmatpush.bf16.msra.mxu0 %v3329
    %3405 = vmatpush.bf16.msra.mxu0 %v3323
    %3406 = vmatmul.bf16.gmra.mxu0 %v3344
    %v3407 = vpop.f32.mrf.mxu0
    %v3408 = vadd.f32 0.0, %v3407
    %v3409 = vpop.f32.mrf.mxu0
    %3410 = vdwg.mxu0
    %3411 = vmatpush.bf16.msra.mxu0 0
    %3412 = vmatpush.bf16.msra.mxu0 0
    %3413 = vmatpush.bf16.msra.mxu0 0
    %3414 = vmatpush.bf16.msra.mxu0 0
    %3415 = vmatpush.bf16.msra.mxu0 0
    %3416 = vmatpush.bf16.msra.mxu0 0
    %3417 = vmatpush.bf16.msra.mxu0 %v3330
    %3418 = vmatpush.bf16.msra.mxu0 %v3324
    %3419 = vmatmul.bf16.gmra.mxu0 %v3344
    %v3420 = vpop.f32.mrf.mxu0
    %v3421 = vadd.f32 0.0, %v3420
    %v3422 = vpop.f32.mrf.mxu0
    %3423 = vdwg.mxu0
    %v3424 = vadd.f32 %v3283, %v3356
    %v3425 = vadd.f32 %v3284, %v3369
    %v3426 = vadd.f32 %v3285, %v3382
    %v3427 = vadd.f32 %v3286, %v3395
    %v3428 = vadd.f32 %v3287, %v3408
    %v3429 = vadd.f32 %v3288, %v3421
    %s3430 = scalar_lea.vmem %s3, 16
    %v3431 = vld [vmem:[%s3430] sm:$0xf]
    %3432 = vrot.lane.b32.xlu0 %v2995, 109
    %v3433 = vpop.permute.xlu0 %3432
    %3434 = vrot.lane.b32.xlu0 %v2996, 109
    %v3435 = vpop.permute.xlu0 %3434
    %3436 = vrot.lane.b32.xlu0 %v2997, 109
    %v3437 = vpop.permute.xlu0 %3436
    %3438 = vrot.lane.b32.xlu0 %v2998, 109
    %v3439 = vpop.permute.xlu0 %3438
    %3440 = vrot.lane.b32.xlu0 %v2999, 109
    %v3441 = vpop.permute.xlu0 %3440
    %3442 = vrot.lane.b32.xlu0 %v3000, 109
    %v3443 = vpop.permute.xlu0 %3442
    %3444 = vrot.lane.b32.xlu0 %v3001, 109
    %v3445 = vpop.permute.xlu0 %3444
    %3446 = vrot.lane.b32.xlu0 %v3002, 109
    %v3447 = vpop.permute.xlu0 %3446
    %3448 = vrot.lane.b32.xlu0 %v3003, 109
    %v3449 = vpop.permute.xlu0 %3448
    %3450 = vrot.lane.b32.xlu0 %v3004, 109
    %v3451 = vpop.permute.xlu0 %3450
    %3452 = vrot.lane.b32.xlu0 %v3005, 109
    %v3453 = vpop.permute.xlu0 %3452
    %3454 = vrot.lane.b32.xlu0 %v3006, 109
    %v3455 = vpop.permute.xlu0 %3454
    %3456 = vrot.lane.b32.xlu0 %v3007, 109
    %v3457 = vpop.permute.xlu0 %3456
    %3458 = vrot.lane.b32.xlu0 %v3008, 109
    %v3459 = vpop.permute.xlu0 %3458
    %v3460 = vsel %vm1266, %v3433, %v3435
    %v3461 = vsel %vm1266, %v3435, %v3437
    %v3462 = vsel %vm1266, %v3437, %v3439
    %v3463 = vsel %vm1266, %v3439, %v3441
    %v3464 = vsel %vm1266, %v3441, %v3443
    %v3465 = vsel %vm1266, %v3443, %v3445
    %v3466 = vsel %vm1266, %v3447, %v3449
    %v3467 = vsel %vm1266, %v3449, %v3451
    %v3468 = vsel %vm1266, %v3451, %v3453
    %v3469 = vsel %vm1266, %v3453, %v3455
    %v3470 = vsel %vm1266, %v3455, %v3457
    %v3471 = vsel %vm1266, %v3457, %v3459
    %v3485 = vsel %vm2845, %v3431, 0
    %3487 = vmatpush.bf16.msra.mxu0 0
    %3488 = vmatpush.bf16.msra.mxu0 0
    %3489 = vmatpush.bf16.msra.mxu0 0
    %3490 = vmatpush.bf16.msra.mxu0 0
    %3491 = vmatpush.bf16.msra.mxu0 0
    %3492 = vmatpush.bf16.msra.mxu0 0
    %3493 = vmatpush.bf16.msra.mxu0 %v3466
    %3494 = vmatpush.bf16.msra.mxu0 %v3460
    %3495 = vmatmul.bf16.gmra.mxu0 %v3485
    %v3496 = vpop.f32.mrf.mxu0
    %v3497 = vadd.f32 0.0, %v3496
    %v3498 = vpop.f32.mrf.mxu0
    %3499 = vdwg.mxu0
    %3500 = vmatpush.bf16.msra.mxu0 0
    %3501 = vmatpush.bf16.msra.mxu0 0
    %3502 = vmatpush.bf16.msra.mxu0 0
    %3503 = vmatpush.bf16.msra.mxu0 0
    %3504 = vmatpush.bf16.msra.mxu0 0
    %3505 = vmatpush.bf16.msra.mxu0 0
    %3506 = vmatpush.bf16.msra.mxu0 %v3467
    %3507 = vmatpush.bf16.msra.mxu0 %v3461
    %3508 = vmatmul.bf16.gmra.mxu0 %v3485
    %v3509 = vpop.f32.mrf.mxu0
    %v3510 = vadd.f32 0.0, %v3509
    %v3511 = vpop.f32.mrf.mxu0
    %3512 = vdwg.mxu0
    %3513 = vmatpush.bf16.msra.mxu0 0
    %3514 = vmatpush.bf16.msra.mxu0 0
    %3515 = vmatpush.bf16.msra.mxu0 0
    %3516 = vmatpush.bf16.msra.mxu0 0
    %3517 = vmatpush.bf16.msra.mxu0 0
    %3518 = vmatpush.bf16.msra.mxu0 0
    %3519 = vmatpush.bf16.msra.mxu0 %v3468
    %3520 = vmatpush.bf16.msra.mxu0 %v3462
    %3521 = vmatmul.bf16.gmra.mxu0 %v3485
    %v3522 = vpop.f32.mrf.mxu0
    %v3523 = vadd.f32 0.0, %v3522
    %v3524 = vpop.f32.mrf.mxu0
    %3525 = vdwg.mxu0
    %3526 = vmatpush.bf16.msra.mxu0 0
    %3527 = vmatpush.bf16.msra.mxu0 0
    %3528 = vmatpush.bf16.msra.mxu0 0
    %3529 = vmatpush.bf16.msra.mxu0 0
    %3530 = vmatpush.bf16.msra.mxu0 0
    %3531 = vmatpush.bf16.msra.mxu0 0
    %3532 = vmatpush.bf16.msra.mxu0 %v3469
    %3533 = vmatpush.bf16.msra.mxu0 %v3463
    %3534 = vmatmul.bf16.gmra.mxu0 %v3485
    %v3535 = vpop.f32.mrf.mxu0
    %v3536 = vadd.f32 0.0, %v3535
    %v3537 = vpop.f32.mrf.mxu0
    %3538 = vdwg.mxu0
    %3539 = vmatpush.bf16.msra.mxu0 0
    %3540 = vmatpush.bf16.msra.mxu0 0
    %3541 = vmatpush.bf16.msra.mxu0 0
    %3542 = vmatpush.bf16.msra.mxu0 0
    %3543 = vmatpush.bf16.msra.mxu0 0
    %3544 = vmatpush.bf16.msra.mxu0 0
    %3545 = vmatpush.bf16.msra.mxu0 %v3470
    %3546 = vmatpush.bf16.msra.mxu0 %v3464
    %3547 = vmatmul.bf16.gmra.mxu0 %v3485
    %v3548 = vpop.f32.mrf.mxu0
    %v3549 = vadd.f32 0.0, %v3548
    %v3550 = vpop.f32.mrf.mxu0
    %3551 = vdwg.mxu0
    %3552 = vmatpush.bf16.msra.mxu0 0
    %3553 = vmatpush.bf16.msra.mxu0 0
    %3554 = vmatpush.bf16.msra.mxu0 0
    %3555 = vmatpush.bf16.msra.mxu0 0
    %3556 = vmatpush.bf16.msra.mxu0 0
    %3557 = vmatpush.bf16.msra.mxu0 0
    %3558 = vmatpush.bf16.msra.mxu0 %v3471
    %3559 = vmatpush.bf16.msra.mxu0 %v3465
    %3560 = vmatmul.bf16.gmra.mxu0 %v3485
    %v3561 = vpop.f32.mrf.mxu0
    %v3562 = vadd.f32 0.0, %v3561
    %v3563 = vpop.f32.mrf.mxu0
    %3564 = vdwg.mxu0
    %v3565 = vadd.f32 %v3424, %v3497
    %v3566 = vadd.f32 %v3425, %v3510
    %v3567 = vadd.f32 %v3426, %v3523
    %v3568 = vadd.f32 %v3427, %v3536
    %v3569 = vadd.f32 %v3428, %v3549
    %v3570 = vadd.f32 %v3429, %v3562
    %s3571 = scalar_lea.vmem %s3, 20
    %v3572 = vld [vmem:[%s3571] sm:$0xf]
    %3573 = vrot.lane.b32.xlu0 %v2995, 108
    %v3574 = vpop.permute.xlu0 %3573
    %3575 = vrot.lane.b32.xlu0 %v2996, 108
    %v3576 = vpop.permute.xlu0 %3575
    %3577 = vrot.lane.b32.xlu0 %v2997, 108
    %v3578 = vpop.permute.xlu0 %3577
    %3579 = vrot.lane.b32.xlu0 %v2998, 108
    %v3580 = vpop.permute.xlu0 %3579
    %3581 = vrot.lane.b32.xlu0 %v2999, 108
    %v3582 = vpop.permute.xlu0 %3581
    %3583 = vrot.lane.b32.xlu0 %v3000, 108
    %v3584 = vpop.permute.xlu0 %3583
    %3585 = vrot.lane.b32.xlu0 %v3001, 108
    %v3586 = vpop.permute.xlu0 %3585
    %3587 = vrot.lane.b32.xlu0 %v3002, 108
    %v3588 = vpop.permute.xlu0 %3587
    %3589 = vrot.lane.b32.xlu0 %v3003, 108
    %v3590 = vpop.permute.xlu0 %3589
    %3591 = vrot.lane.b32.xlu0 %v3004, 108
    %v3592 = vpop.permute.xlu0 %3591
    %3593 = vrot.lane.b32.xlu0 %v3005, 108
    %v3594 = vpop.permute.xlu0 %3593
    %3595 = vrot.lane.b32.xlu0 %v3006, 108
    %v3596 = vpop.permute.xlu0 %3595
    %3597 = vrot.lane.b32.xlu0 %v3007, 108
    %v3598 = vpop.permute.xlu0 %3597
    %3599 = vrot.lane.b32.xlu0 %v3008, 108
    %v3600 = vpop.permute.xlu0 %3599
    %v3601 = vsel %vm1549, %v3574, %v3576
    %v3602 = vsel %vm1549, %v3576, %v3578
    %v3603 = vsel %vm1549, %v3578, %v3580
    %v3604 = vsel %vm1549, %v3580, %v3582
    %v3605 = vsel %vm1549, %v3582, %v3584
    %v3606 = vsel %vm1549, %v3584, %v3586
    %v3607 = vsel %vm1549, %v3588, %v3590
    %v3608 = vsel %vm1549, %v3590, %v3592
    %v3609 = vsel %vm1549, %v3592, %v3594
    %v3610 = vsel %vm1549, %v3594, %v3596
    %v3611 = vsel %vm1549, %v3596, %v3598
    %v3612 = vsel %vm1549, %v3598, %v3600
    %v3626 = vsel %vm2845, %v3572, 0
    %3628 = vmatpush.bf16.msra.mxu0 0
    %3629 = vmatpush.bf16.msra.mxu0 0
    %3630 = vmatpush.bf16.msra.mxu0 0
    %3631 = vmatpush.bf16.msra.mxu0 0
    %3632 = vmatpush.bf16.msra.mxu0 0
    %3633 = vmatpush.bf16.msra.mxu0 0
    %3634 = vmatpush.bf16.msra.mxu0 %v3607
    %3635 = vmatpush.bf16.msra.mxu0 %v3601
    %3636 = vmatmul.bf16.gmra.mxu0 %v3626
    %v3637 = vpop.f32.mrf.mxu0
    %v3638 = vadd.f32 0.0, %v3637
    %v3639 = vpop.f32.mrf.mxu0
    %3640 = vdwg.mxu0
    %3641 = vmatpush.bf16.msra.mxu0 0
    %3642 = vmatpush.bf16.msra.mxu0 0
    %3643 = vmatpush.bf16.msra.mxu0 0
    %3644 = vmatpush.bf16.msra.mxu0 0
    %3645 = vmatpush.bf16.msra.mxu0 0
    %3646 = vmatpush.bf16.msra.mxu0 0
    %3647 = vmatpush.bf16.msra.mxu0 %v3608
    %3648 = vmatpush.bf16.msra.mxu0 %v3602
    %3649 = vmatmul.bf16.gmra.mxu0 %v3626
    %v3650 = vpop.f32.mrf.mxu0
    %v3651 = vadd.f32 0.0, %v3650
    %v3652 = vpop.f32.mrf.mxu0
    %3653 = vdwg.mxu0
    %3654 = vmatpush.bf16.msra.mxu0 0
    %3655 = vmatpush.bf16.msra.mxu0 0
    %3656 = vmatpush.bf16.msra.mxu0 0
    %3657 = vmatpush.bf16.msra.mxu0 0
    %3658 = vmatpush.bf16.msra.mxu0 0
    %3659 = vmatpush.bf16.msra.mxu0 0
    %3660 = vmatpush.bf16.msra.mxu0 %v3609
    %3661 = vmatpush.bf16.msra.mxu0 %v3603
    %3662 = vmatmul.bf16.gmra.mxu0 %v3626
    %v3663 = vpop.f32.mrf.mxu0
    %v3664 = vadd.f32 0.0, %v3663
    %v3665 = vpop.f32.mrf.mxu0
    %3666 = vdwg.mxu0
    %3667 = vmatpush.bf16.msra.mxu0 0
    %3668 = vmatpush.bf16.msra.mxu0 0
    %3669 = vmatpush.bf16.msra.mxu0 0
    %3670 = vmatpush.bf16.msra.mxu0 0
    %3671 = vmatpush.bf16.msra.mxu0 0
    %3672 = vmatpush.bf16.msra.mxu0 0
    %3673 = vmatpush.bf16.msra.mxu0 %v3610
    %3674 = vmatpush.bf16.msra.mxu0 %v3604
    %3675 = vmatmul.bf16.gmra.mxu0 %v3626
    %v3676 = vpop.f32.mrf.mxu0
    %v3677 = vadd.f32 0.0, %v3676
    %v3678 = vpop.f32.mrf.mxu0
    %3679 = vdwg.mxu0
    %3680 = vmatpush.bf16.msra.mxu0 0
    %3681 = vmatpush.bf16.msra.mxu0 0
    %3682 = vmatpush.bf16.msra.mxu0 0
    %3683 = vmatpush.bf16.msra.mxu0 0
    %3684 = vmatpush.bf16.msra.mxu0 0
    %3685 = vmatpush.bf16.msra.mxu0 0
    %3686 = vmatpush.bf16.msra.mxu0 %v3611
    %3687 = vmatpush.bf16.msra.mxu0 %v3605
    %3688 = vmatmul.bf16.gmra.mxu0 %v3626
    %v3689 = vpop.f32.mrf.mxu0
    %v3690 = vadd.f32 0.0, %v3689
    %v3691 = vpop.f32.mrf.mxu0
    %3692 = vdwg.mxu0
    %3693 = vmatpush.bf16.msra.mxu0 0
    %3694 = vmatpush.bf16.msra.mxu0 0
    %3695 = vmatpush.bf16.msra.mxu0 0
    %3696 = vmatpush.bf16.msra.mxu0 0
    %3697 = vmatpush.bf16.msra.mxu0 0
    %3698 = vmatpush.bf16.msra.mxu0 0
    %3699 = vmatpush.bf16.msra.mxu0 %v3612
    %3700 = vmatpush.bf16.msra.mxu0 %v3606
    %3701 = vmatmul.bf16.gmra.mxu0 %v3626
    %v3702 = vpop.f32.mrf.mxu0
    %v3703 = vadd.f32 0.0, %v3702
    %v3704 = vpop.f32.mrf.mxu0
    %3705 = vdwg.mxu0
    %v3706 = vadd.f32 %v3565, %v3638
    %v3707 = vadd.f32 %v3566, %v3651
    %v3708 = vadd.f32 %v3567, %v3664
    %v3709 = vadd.f32 %v3568, %v3677
    %v3710 = vadd.f32 %v3569, %v3690
    %v3711 = vadd.f32 %v3570, %v3703
    %s3712 = scalar_lea.vmem %s3, 24
    %v3713 = vld [vmem:[%s3712] sm:$0xf]
    %3714 = vrot.lane.b32.xlu0 %v2995, 92
    %v3715 = vpop.permute.xlu0 %3714
    %3716 = vrot.lane.b32.xlu0 %v2996, 92
    %v3717 = vpop.permute.xlu0 %3716
    %3718 = vrot.lane.b32.xlu0 %v2997, 92
    %v3719 = vpop.permute.xlu0 %3718
    %3720 = vrot.lane.b32.xlu0 %v2998, 92
    %v3721 = vpop.permute.xlu0 %3720
    %3722 = vrot.lane.b32.xlu0 %v2999, 92
    %v3723 = vpop.permute.xlu0 %3722
    %3724 = vrot.lane.b32.xlu0 %v3000, 92
    %v3725 = vpop.permute.xlu0 %3724
    %3726 = vrot.lane.b32.xlu0 %v3001, 92
    %v3727 = vpop.permute.xlu0 %3726
    %3728 = vrot.lane.b32.xlu0 %v3002, 92
    %v3729 = vpop.permute.xlu0 %3728
    %3730 = vrot.lane.b32.xlu0 %v3003, 92
    %v3731 = vpop.permute.xlu0 %3730
    %3732 = vrot.lane.b32.xlu0 %v3004, 92
    %v3733 = vpop.permute.xlu0 %3732
    %3734 = vrot.lane.b32.xlu0 %v3005, 92
    %v3735 = vpop.permute.xlu0 %3734
    %3736 = vrot.lane.b32.xlu0 %v3006, 92
    %v3737 = vpop.permute.xlu0 %3736
    %3738 = vrot.lane.b32.xlu0 %v3007, 92
    %v3739 = vpop.permute.xlu0 %3738
    %3740 = vrot.lane.b32.xlu0 %v3008, 92
    %v3741 = vpop.permute.xlu0 %3740
    %v3742 = vsel %vm1832, %v3715, %v3717
    %v3743 = vsel %vm1832, %v3717, %v3719
    %v3744 = vsel %vm1832, %v3719, %v3721
    %v3745 = vsel %vm1832, %v3721, %v3723
    %v3746 = vsel %vm1832, %v3723, %v3725
    %v3747 = vsel %vm1832, %v3725, %v3727
    %v3748 = vsel %vm1832, %v3729, %v3731
    %v3749 = vsel %vm1832, %v3731, %v3733
    %v3750 = vsel %vm1832, %v3733, %v3735
    %v3751 = vsel %vm1832, %v3735, %v3737
    %v3752 = vsel %vm1832, %v3737, %v3739
    %v3753 = vsel %vm1832, %v3739, %v3741
    %v3767 = vsel %vm2845, %v3713, 0
    %3769 = vmatpush.bf16.msra.mxu0 0
    %3770 = vmatpush.bf16.msra.mxu0 0
    %3771 = vmatpush.bf16.msra.mxu0 0
    %3772 = vmatpush.bf16.msra.mxu0 0
    %3773 = vmatpush.bf16.msra.mxu0 0
    %3774 = vmatpush.bf16.msra.mxu0 0
    %3775 = vmatpush.bf16.msra.mxu0 %v3748
    %3776 = vmatpush.bf16.msra.mxu0 %v3742
    %3777 = vmatmul.bf16.gmra.mxu0 %v3767
    %v3778 = vpop.f32.mrf.mxu0
    %v3779 = vadd.f32 0.0, %v3778
    %v3780 = vpop.f32.mrf.mxu0
    %3781 = vdwg.mxu0
    %3782 = vmatpush.bf16.msra.mxu0 0
    %3783 = vmatpush.bf16.msra.mxu0 0
    %3784 = vmatpush.bf16.msra.mxu0 0
    %3785 = vmatpush.bf16.msra.mxu0 0
    %3786 = vmatpush.bf16.msra.mxu0 0
    %3787 = vmatpush.bf16.msra.mxu0 0
    %3788 = vmatpush.bf16.msra.mxu0 %v3749
    %3789 = vmatpush.bf16.msra.mxu0 %v3743
    %3790 = vmatmul.bf16.gmra.mxu0 %v3767
    %v3791 = vpop.f32.mrf.mxu0
    %v3792 = vadd.f32 0.0, %v3791
    %v3793 = vpop.f32.mrf.mxu0
    %3794 = vdwg.mxu0
    %3795 = vmatpush.bf16.msra.mxu0 0
    %3796 = vmatpush.bf16.msra.mxu0 0
    %3797 = vmatpush.bf16.msra.mxu0 0
    %3798 = vmatpush.bf16.msra.mxu0 0
    %3799 = vmatpush.bf16.msra.mxu0 0
    %3800 = vmatpush.bf16.msra.mxu0 0
    %3801 = vmatpush.bf16.msra.mxu0 %v3750
    %3802 = vmatpush.bf16.msra.mxu0 %v3744
    %3803 = vmatmul.bf16.gmra.mxu0 %v3767
    %v3804 = vpop.f32.mrf.mxu0
    %v3805 = vadd.f32 0.0, %v3804
    %v3806 = vpop.f32.mrf.mxu0
    %3807 = vdwg.mxu0
    %3808 = vmatpush.bf16.msra.mxu0 0
    %3809 = vmatpush.bf16.msra.mxu0 0
    %3810 = vmatpush.bf16.msra.mxu0 0
    %3811 = vmatpush.bf16.msra.mxu0 0
    %3812 = vmatpush.bf16.msra.mxu0 0
    %3813 = vmatpush.bf16.msra.mxu0 0
    %3814 = vmatpush.bf16.msra.mxu0 %v3751
    %3815 = vmatpush.bf16.msra.mxu0 %v3745
    %3816 = vmatmul.bf16.gmra.mxu0 %v3767
    %v3817 = vpop.f32.mrf.mxu0
    %v3818 = vadd.f32 0.0, %v3817
    %v3819 = vpop.f32.mrf.mxu0
    %3820 = vdwg.mxu0
    %3821 = vmatpush.bf16.msra.mxu0 0
    %3822 = vmatpush.bf16.msra.mxu0 0
    %3823 = vmatpush.bf16.msra.mxu0 0
    %3824 = vmatpush.bf16.msra.mxu0 0
    %3825 = vmatpush.bf16.msra.mxu0 0
    %3826 = vmatpush.bf16.msra.mxu0 0
    %3827 = vmatpush.bf16.msra.mxu0 %v3752
    %3828 = vmatpush.bf16.msra.mxu0 %v3746
    %3829 = vmatmul.bf16.gmra.mxu0 %v3767
    %v3830 = vpop.f32.mrf.mxu0
    %v3831 = vadd.f32 0.0, %v3830
    %v3832 = vpop.f32.mrf.mxu0
    %3833 = vdwg.mxu0
    %3834 = vmatpush.bf16.msra.mxu0 0
    %3835 = vmatpush.bf16.msra.mxu0 0
    %3836 = vmatpush.bf16.msra.mxu0 0
    %3837 = vmatpush.bf16.msra.mxu0 0
    %3838 = vmatpush.bf16.msra.mxu0 0
    %3839 = vmatpush.bf16.msra.mxu0 0
    %3840 = vmatpush.bf16.msra.mxu0 %v3753
    %3841 = vmatpush.bf16.msra.mxu0 %v3747
    %3842 = vmatmul.bf16.gmra.mxu0 %v3767
    %v3843 = vpop.f32.mrf.mxu0
    %v3844 = vadd.f32 0.0, %v3843
    %v3845 = vpop.f32.mrf.mxu0
    %3846 = vdwg.mxu0
    %v3847 = vadd.f32 %v3706, %v3779
    %v3848 = vadd.f32 %v3707, %v3792
    %v3849 = vadd.f32 %v3708, %v3805
    %v3850 = vadd.f32 %v3709, %v3818
    %v3851 = vadd.f32 %v3710, %v3831
    %v3852 = vadd.f32 %v3711, %v3844
    %s3853 = scalar_lea.vmem %s3, 28
    %v3854 = vld [vmem:[%s3853] sm:$0xf]
    %3855 = vrot.lane.b32.xlu0 %v2995, 91
    %v3856 = vpop.permute.xlu0 %3855
    %3857 = vrot.lane.b32.xlu0 %v2996, 91
    %v3858 = vpop.permute.xlu0 %3857
    %3859 = vrot.lane.b32.xlu0 %v2997, 91
    %v3860 = vpop.permute.xlu0 %3859
    %3861 = vrot.lane.b32.xlu0 %v2998, 91
    %v3862 = vpop.permute.xlu0 %3861
    %3863 = vrot.lane.b32.xlu0 %v2999, 91
    %v3864 = vpop.permute.xlu0 %3863
    %3865 = vrot.lane.b32.xlu0 %v3000, 91
    %v3866 = vpop.permute.xlu0 %3865
    %3867 = vrot.lane.b32.xlu0 %v3001, 91
    %v3868 = vpop.permute.xlu0 %3867
    %3869 = vrot.lane.b32.xlu0 %v3002, 91
    %v3870 = vpop.permute.xlu0 %3869
    %3871 = vrot.lane.b32.xlu0 %v3003, 91
    %v3872 = vpop.permute.xlu0 %3871
    %3873 = vrot.lane.b32.xlu0 %v3004, 91
    %v3874 = vpop.permute.xlu0 %3873
    %3875 = vrot.lane.b32.xlu0 %v3005, 91
    %v3876 = vpop.permute.xlu0 %3875
    %3877 = vrot.lane.b32.xlu0 %v3006, 91
    %v3878 = vpop.permute.xlu0 %3877
    %3879 = vrot.lane.b32.xlu0 %v3007, 91
    %v3880 = vpop.permute.xlu0 %3879
    %3881 = vrot.lane.b32.xlu0 %v3008, 91
    %v3882 = vpop.permute.xlu0 %3881
    %v3883 = vsel %vm2115, %v3856, %v3858
    %v3884 = vsel %vm2115, %v3858, %v3860
    %v3885 = vsel %vm2115, %v3860, %v3862
    %v3886 = vsel %vm2115, %v3862, %v3864
    %v3887 = vsel %vm2115, %v3864, %v3866
    %v3888 = vsel %vm2115, %v3866, %v3868
    %v3889 = vsel %vm2115, %v3870, %v3872
    %v3890 = vsel %vm2115, %v3872, %v3874
    %v3891 = vsel %vm2115, %v3874, %v3876
    %v3892 = vsel %vm2115, %v3876, %v3878
    %v3893 = vsel %vm2115, %v3878, %v3880
    %v3894 = vsel %vm2115, %v3880, %v3882
    %v3908 = vsel %vm2845, %v3854, 0
    %3910 = vmatpush.bf16.msra.mxu0 0
    %3911 = vmatpush.bf16.msra.mxu0 0
    %3912 = vmatpush.bf16.msra.mxu0 0
    %3913 = vmatpush.bf16.msra.mxu0 0
    %3914 = vmatpush.bf16.msra.mxu0 0
    %3915 = vmatpush.bf16.msra.mxu0 0
    %3916 = vmatpush.bf16.msra.mxu0 %v3889
    %3917 = vmatpush.bf16.msra.mxu0 %v3883
    %3918 = vmatmul.bf16.gmra.mxu0 %v3908
    %v3919 = vpop.f32.mrf.mxu0
    %v3920 = vadd.f32 0.0, %v3919
    %v3921 = vpop.f32.mrf.mxu0
    %3922 = vdwg.mxu0
    %3923 = vmatpush.bf16.msra.mxu0 0
    %3924 = vmatpush.bf16.msra.mxu0 0
    %3925 = vmatpush.bf16.msra.mxu0 0
    %3926 = vmatpush.bf16.msra.mxu0 0
    %3927 = vmatpush.bf16.msra.mxu0 0
    %3928 = vmatpush.bf16.msra.mxu0 0
    %3929 = vmatpush.bf16.msra.mxu0 %v3890
    %3930 = vmatpush.bf16.msra.mxu0 %v3884
    %3931 = vmatmul.bf16.gmra.mxu0 %v3908
    %v3932 = vpop.f32.mrf.mxu0
    %v3933 = vadd.f32 0.0, %v3932
    %v3934 = vpop.f32.mrf.mxu0
    %3935 = vdwg.mxu0
    %3936 = vmatpush.bf16.msra.mxu0 0
    %3937 = vmatpush.bf16.msra.mxu0 0
    %3938 = vmatpush.bf16.msra.mxu0 0
    %3939 = vmatpush.bf16.msra.mxu0 0
    %3940 = vmatpush.bf16.msra.mxu0 0
    %3941 = vmatpush.bf16.msra.mxu0 0
    %3942 = vmatpush.bf16.msra.mxu0 %v3891
    %3943 = vmatpush.bf16.msra.mxu0 %v3885
    %3944 = vmatmul.bf16.gmra.mxu0 %v3908
    %v3945 = vpop.f32.mrf.mxu0
    %v3946 = vadd.f32 0.0, %v3945
    %v3947 = vpop.f32.mrf.mxu0
    %3948 = vdwg.mxu0
    %3949 = vmatpush.bf16.msra.mxu0 0
    %3950 = vmatpush.bf16.msra.mxu0 0
    %3951 = vmatpush.bf16.msra.mxu0 0
    %3952 = vmatpush.bf16.msra.mxu0 0
    %3953 = vmatpush.bf16.msra.mxu0 0
    %3954 = vmatpush.bf16.msra.mxu0 0
    %3955 = vmatpush.bf16.msra.mxu0 %v3892
    %3956 = vmatpush.bf16.msra.mxu0 %v3886
    %3957 = vmatmul.bf16.gmra.mxu0 %v3908
    %v3958 = vpop.f32.mrf.mxu0
    %v3959 = vadd.f32 0.0, %v3958
    %v3960 = vpop.f32.mrf.mxu0
    %3961 = vdwg.mxu0
    %3962 = vmatpush.bf16.msra.mxu0 0
    %3963 = vmatpush.bf16.msra.mxu0 0
    %3964 = vmatpush.bf16.msra.mxu0 0
    %3965 = vmatpush.bf16.msra.mxu0 0
    %3966 = vmatpush.bf16.msra.mxu0 0
    %3967 = vmatpush.bf16.msra.mxu0 0
    %3968 = vmatpush.bf16.msra.mxu0 %v3893
    %3969 = vmatpush.bf16.msra.mxu0 %v3887
    %3970 = vmatmul.bf16.gmra.mxu0 %v3908
    %v3971 = vpop.f32.mrf.mxu0
    %v3972 = vadd.f32 0.0, %v3971
    %v3973 = vpop.f32.mrf.mxu0
    %3974 = vdwg.mxu0
    %3975 = vmatpush.bf16.msra.mxu0 0
    %3976 = vmatpush.bf16.msra.mxu0 0
    %3977 = vmatpush.bf16.msra.mxu0 0
    %3978 = vmatpush.bf16.msra.mxu0 0
    %3979 = vmatpush.bf16.msra.mxu0 0
    %3980 = vmatpush.bf16.msra.mxu0 0
    %3981 = vmatpush.bf16.msra.mxu0 %v3894
    %3982 = vmatpush.bf16.msra.mxu0 %v3888
    %3983 = vmatmul.bf16.gmra.mxu0 %v3908
    %v3984 = vpop.f32.mrf.mxu0
    %v3985 = vadd.f32 0.0, %v3984
    %v3986 = vpop.f32.mrf.mxu0
    %3987 = vdwg.mxu0
    %v3988 = vadd.f32 %v3847, %v3920
    %v3989 = vadd.f32 %v3848, %v3933
    %v3990 = vadd.f32 %v3849, %v3946
    %v3991 = vadd.f32 %v3850, %v3959
    %v3992 = vadd.f32 %v3851, %v3972
    %v3993 = vadd.f32 %v3852, %v3985
    %s3994 = scalar_lea.vmem %s3, 32
    %v3995 = vld [vmem:[%s3994] sm:$0xf]
    %3996 = vrot.lane.b32.xlu0 %v2995, 90
    %v3997 = vpop.permute.xlu0 %3996
    %3998 = vrot.lane.b32.xlu0 %v2996, 90
    %v3999 = vpop.permute.xlu0 %3998
    %4000 = vrot.lane.b32.xlu0 %v2997, 90
    %v4001 = vpop.permute.xlu0 %4000
    %4002 = vrot.lane.b32.xlu0 %v2998, 90
    %v4003 = vpop.permute.xlu0 %4002
    %4004 = vrot.lane.b32.xlu0 %v2999, 90
    %v4005 = vpop.permute.xlu0 %4004
    %4006 = vrot.lane.b32.xlu0 %v3000, 90
    %v4007 = vpop.permute.xlu0 %4006
    %4008 = vrot.lane.b32.xlu0 %v3001, 90
    %v4009 = vpop.permute.xlu0 %4008
    %4010 = vrot.lane.b32.xlu0 %v3002, 90
    %v4011 = vpop.permute.xlu0 %4010
    %4012 = vrot.lane.b32.xlu0 %v3003, 90
    %v4013 = vpop.permute.xlu0 %4012
    %4014 = vrot.lane.b32.xlu0 %v3004, 90
    %v4015 = vpop.permute.xlu0 %4014
    %4016 = vrot.lane.b32.xlu0 %v3005, 90
    %v4017 = vpop.permute.xlu0 %4016
    %4018 = vrot.lane.b32.xlu0 %v3006, 90
    %v4019 = vpop.permute.xlu0 %4018
    %4020 = vrot.lane.b32.xlu0 %v3007, 90
    %v4021 = vpop.permute.xlu0 %4020
    %4022 = vrot.lane.b32.xlu0 %v3008, 90
    %v4023 = vpop.permute.xlu0 %4022
    %v4024 = vsel %vm2398, %v3997, %v3999
    %v4025 = vsel %vm2398, %v3999, %v4001
    %v4026 = vsel %vm2398, %v4001, %v4003
    %v4027 = vsel %vm2398, %v4003, %v4005
    %v4028 = vsel %vm2398, %v4005, %v4007
    %v4029 = vsel %vm2398, %v4007, %v4009
    %v4030 = vsel %vm2398, %v4011, %v4013
    %v4031 = vsel %vm2398, %v4013, %v4015
    %v4032 = vsel %vm2398, %v4015, %v4017
    %v4033 = vsel %vm2398, %v4017, %v4019
    %v4034 = vsel %vm2398, %v4019, %v4021
    %v4035 = vsel %vm2398, %v4021, %v4023
    %v4049 = vsel %vm2845, %v3995, 0
    %4051 = vmatpush.bf16.msra.mxu0 0
    %4052 = vmatpush.bf16.msra.mxu0 0
    %4053 = vmatpush.bf16.msra.mxu0 0
    %4054 = vmatpush.bf16.msra.mxu0 0
    %4055 = vmatpush.bf16.msra.mxu0 0
    %4056 = vmatpush.bf16.msra.mxu0 0
    %4057 = vmatpush.bf16.msra.mxu0 %v4030
    %4058 = vmatpush.bf16.msra.mxu0 %v4024
    %4059 = vmatmul.bf16.gmra.mxu0 %v4049
    %v4060 = vpop.f32.mrf.mxu0
    %v4061 = vadd.f32 0.0, %v4060
    %v4062 = vpop.f32.mrf.mxu0
    %4063 = vdwg.mxu0
    %4064 = vmatpush.bf16.msra.mxu0 0
    %4065 = vmatpush.bf16.msra.mxu0 0
    %4066 = vmatpush.bf16.msra.mxu0 0
    %4067 = vmatpush.bf16.msra.mxu0 0
    %4068 = vmatpush.bf16.msra.mxu0 0
    %4069 = vmatpush.bf16.msra.mxu0 0
    %4070 = vmatpush.bf16.msra.mxu0 %v4031
    %4071 = vmatpush.bf16.msra.mxu0 %v4025
    %4072 = vmatmul.bf16.gmra.mxu0 %v4049
    %v4073 = vpop.f32.mrf.mxu0
    %v4074 = vadd.f32 0.0, %v4073
    %v4075 = vpop.f32.mrf.mxu0
    %4076 = vdwg.mxu0
    %4077 = vmatpush.bf16.msra.mxu0 0
    %4078 = vmatpush.bf16.msra.mxu0 0
    %4079 = vmatpush.bf16.msra.mxu0 0
    %4080 = vmatpush.bf16.msra.mxu0 0
    %4081 = vmatpush.bf16.msra.mxu0 0
    %4082 = vmatpush.bf16.msra.mxu0 0
    %4083 = vmatpush.bf16.msra.mxu0 %v4032
    %4084 = vmatpush.bf16.msra.mxu0 %v4026
    %4085 = vmatmul.bf16.gmra.mxu0 %v4049
    %v4086 = vpop.f32.mrf.mxu0
    %v4087 = vadd.f32 0.0, %v4086
    %v4088 = vpop.f32.mrf.mxu0
    %4089 = vdwg.mxu0
    %4090 = vmatpush.bf16.msra.mxu0 0
    %4091 = vmatpush.bf16.msra.mxu0 0
    %4092 = vmatpush.bf16.msra.mxu0 0
    %4093 = vmatpush.bf16.msra.mxu0 0
    %4094 = vmatpush.bf16.msra.mxu0 0
    %4095 = vmatpush.bf16.msra.mxu0 0
    %4096 = vmatpush.bf16.msra.mxu0 %v4033
    %4097 = vmatpush.bf16.msra.mxu0 %v4027
    %4098 = vmatmul.bf16.gmra.mxu0 %v4049
    %v4099 = vpop.f32.mrf.mxu0
    %v4100 = vadd.f32 0.0, %v4099
    %v4101 = vpop.f32.mrf.mxu0
    %4102 = vdwg.mxu0
    %4103 = vmatpush.bf16.msra.mxu0 0
    %4104 = vmatpush.bf16.msra.mxu0 0
    %4105 = vmatpush.bf16.msra.mxu0 0
    %4106 = vmatpush.bf16.msra.mxu0 0
    %4107 = vmatpush.bf16.msra.mxu0 0
    %4108 = vmatpush.bf16.msra.mxu0 0
    %4109 = vmatpush.bf16.msra.mxu0 %v4034
    %4110 = vmatpush.bf16.msra.mxu0 %v4028
    %4111 = vmatmul.bf16.gmra.mxu0 %v4049
    %v4112 = vpop.f32.mrf.mxu0
    %v4113 = vadd.f32 0.0, %v4112
    %v4114 = vpop.f32.mrf.mxu0
    %4115 = vdwg.mxu0
    %4116 = vmatpush.bf16.msra.mxu0 0
    %4117 = vmatpush.bf16.msra.mxu0 0
    %4118 = vmatpush.bf16.msra.mxu0 0
    %4119 = vmatpush.bf16.msra.mxu0 0
    %4120 = vmatpush.bf16.msra.mxu0 0
    %4121 = vmatpush.bf16.msra.mxu0 0
    %4122 = vmatpush.bf16.msra.mxu0 %v4035
    %4123 = vmatpush.bf16.msra.mxu0 %v4029
    %4124 = vmatmul.bf16.gmra.mxu0 %v4049
    %v4125 = vpop.f32.mrf.mxu0
    %v4126 = vadd.f32 0.0, %v4125
    %v4127 = vpop.f32.mrf.mxu0
    %4128 = vdwg.mxu0
    %v4129 = vadd.f32 %v3988, %v4061
    %v4130 = vadd.f32 %v3989, %v4074
    %v4131 = vadd.f32 %v3990, %v4087
    %v4132 = vadd.f32 %v3991, %v4100
    %v4133 = vadd.f32 %v3992, %v4113
    %v4134 = vadd.f32 %v3993, %v4126
    %v4135 = vxor.u32 %v4129, 2147483648
    %v4136 = vxor.u32 %v4130, 2147483648
    %v4137 = vxor.u32 %v4131, 2147483648
    %v4138 = vxor.u32 %v4132, 2147483648
    %v4139 = vxor.u32 %v4133, 2147483648
    %v4140 = vxor.u32 %v4134, 2147483648
    %v4141 = vmul.f32 %v4135, 1.442695
    %v4142 = vpow.pop %v4141
    %v4143 = vmul.f32 %v4136, 1.442695
    %v4144 = vpow.pop %v4143
    %v4145 = vmul.f32 %v4137, 1.442695
    %v4146 = vpow.pop %v4145
    %v4147 = vmul.f32 %v4138, 1.442695
    %v4148 = vpow.pop %v4147
    %v4149 = vmul.f32 %v4139, 1.442695
    %v4150 = vpow.pop %v4149
    %v4151 = vmul.f32 %v4140, 1.442695
    %v4152 = vpow.pop %v4151
    %v4153 = vadd.f32 %v4142, 1.0
    %v4154 = vadd.f32 %v4144, 1.0
    %v4155 = vadd.f32 %v4146, 1.0
    %v4156 = vadd.f32 %v4148, 1.0
    %v4157 = vadd.f32 %v4150, 1.0
    %v4158 = vadd.f32 %v4152, 1.0
    %v4159 = vrcp.pop %v4153
    %v4160 = vmul.f32 %v4153, %v4159
    %v4161 = vsub.f32 1.0, %v4160
    %v4162 = vmul.f32 %v4159, %v4161
    %v4163 = vadd.f32 %v4159, %v4162
    %vm4164 = vweird.f32 %v4153
    %vm4165 = vweird.f32 %v4159
    %vm4166 = vmor %vm4164, %vm4165
    %v4167 = vsel %vm4166, %v4159, %v4163
    %v4168 = vand.u32 2147483647, %v4153
    %vm4169 = vcmp.eq.f32.partialorder %v4168, 8.507059e+37
    %v4170 = vand.u32 %v4153, 2147483648
    %v4171 = vor.u32 1.1754944e-38, %v4170
    %v4172 = vsel %vm4169, %v4171, %v4167
    %v4173 = vmul.f32 1.0, %v4172
    %v4174 = vrcp.pop %v4154
    %v4175 = vmul.f32 %v4154, %v4174
    %v4176 = vsub.f32 1.0, %v4175
    %v4177 = vmul.f32 %v4174, %v4176
    %v4178 = vadd.f32 %v4174, %v4177
    %vm4179 = vweird.f32 %v4154
    %vm4180 = vweird.f32 %v4174
    %vm4181 = vmor %vm4179, %vm4180
    %v4182 = vsel %vm4181, %v4174, %v4178
    %v4183 = vand.u32 2147483647, %v4154
    %vm4184 = vcmp.eq.f32.partialorder %v4183, 8.507059e+37
    %v4185 = vand.u32 %v4154, 2147483648
    %v4186 = vor.u32 1.1754944e-38, %v4185
    %v4187 = vsel %vm4184, %v4186, %v4182
    %v4188 = vmul.f32 1.0, %v4187
    %v4189 = vrcp.pop %v4155
    %v4190 = vmul.f32 %v4155, %v4189
    %v4191 = vsub.f32 1.0, %v4190
    %v4192 = vmul.f32 %v4189, %v4191
    %v4193 = vadd.f32 %v4189, %v4192
    %vm4194 = vweird.f32 %v4155
    %vm4195 = vweird.f32 %v4189
    %vm4196 = vmor %vm4194, %vm4195
    %v4197 = vsel %vm4196, %v4189, %v4193
    %v4198 = vand.u32 2147483647, %v4155
    %vm4199 = vcmp.eq.f32.partialorder %v4198, 8.507059e+37
    %v4200 = vand.u32 %v4155, 2147483648
    %v4201 = vor.u32 1.1754944e-38, %v4200
    %v4202 = vsel %vm4199, %v4201, %v4197
    %v4203 = vmul.f32 1.0, %v4202
    %v4204 = vrcp.pop %v4156
    %v4205 = vmul.f32 %v4156, %v4204
    %v4206 = vsub.f32 1.0, %v4205
    %v4207 = vmul.f32 %v4204, %v4206
    %v4208 = vadd.f32 %v4204, %v4207
    %vm4209 = vweird.f32 %v4156
    %vm4210 = vweird.f32 %v4204
    %vm4211 = vmor %vm4209, %vm4210
    %v4212 = vsel %vm4211, %v4204, %v4208
    %v4213 = vand.u32 2147483647, %v4156
    %vm4214 = vcmp.eq.f32.partialorder %v4213, 8.507059e+37
    %v4215 = vand.u32 %v4156, 2147483648
    %v4216 = vor.u32 1.1754944e-38, %v4215
    %v4217 = vsel %vm4214, %v4216, %v4212
    %v4218 = vmul.f32 1.0, %v4217
    %v4219 = vrcp.pop %v4157
    %v4220 = vmul.f32 %v4157, %v4219
    %v4221 = vsub.f32 1.0, %v4220
    %v4222 = vmul.f32 %v4219, %v4221
    %v4223 = vadd.f32 %v4219, %v4222
    %vm4224 = vweird.f32 %v4157
    %vm4225 = vweird.f32 %v4219
    %vm4226 = vmor %vm4224, %vm4225
    %v4227 = vsel %vm4226, %v4219, %v4223
    %v4228 = vand.u32 2147483647, %v4157
    %vm4229 = vcmp.eq.f32.partialorder %v4228, 8.507059e+37
    %v4230 = vand.u32 %v4157, 2147483648
    %v4231 = vor.u32 1.1754944e-38, %v4230
    %v4232 = vsel %vm4229, %v4231, %v4227
    %v4233 = vmul.f32 1.0, %v4232
    %v4234 = vrcp.pop %v4158
    %v4235 = vmul.f32 %v4158, %v4234
    %v4236 = vsub.f32 1.0, %v4235
    %v4237 = vmul.f32 %v4234, %v4236
    %v4238 = vadd.f32 %v4234, %v4237
    %vm4239 = vweird.f32 %v4158
    %vm4240 = vweird.f32 %v4234
    %vm4241 = vmor %vm4239, %vm4240
    %v4242 = vsel %vm4241, %v4234, %v4238
    %v4243 = vand.u32 2147483647, %v4158
    %vm4244 = vcmp.eq.f32.partialorder %v4243, 8.507059e+37
    %v4245 = vand.u32 %v4158, 2147483648
    %v4246 = vor.u32 1.1754944e-38, %v4245
    %v4247 = vsel %vm4244, %v4246, %v4242
    %v4248 = vmul.f32 1.0, %v4247
    %4249 = vst [vmem:[#allocation4] sm:$0xff] %v4173
    %4250 = vst [vmem:[#allocation4 + $0x8] sm:$0xff] %v4188
    %4251 = vst [vmem:[#allocation4 + $0x10] sm:$0xff] %v4203
    %4252 = vst [vmem:[#allocation4 + $0x18] sm:$0xff] %v4218
    %4253 = vst [vmem:[#allocation4 + $0x20] sm:$0xff] %v4233
    %4254 = vst [vmem:[#allocation4 + $0x28] sm:$0xff] %v4248
    // Predicated region
    $region22: #{tpu_custom_call.1} parent=1 // pred_check
      _
    $region23: #{tpu_custom_call.1} parent=1 // pred_check_branch
      %4256 = sbr.rel (0) target = $region25
    $region24: #{tpu_custom_call.1} parent=1 // pred_region
      %4258 = vsyncadd [#allocation5], 0
      %s4260 = sshll.u32 [#allocation4], 4
      %s4261 = int_to_ptr.vmem [resolvable:$true] %s4260
      %s4262 = sshll.u32 %s5, 4
      %s4263 = int_to_ptr.hbm [resolvable:$true] %s4262
      %4265 = dma.vmem_to_hbm [thread:$0]  %s4261, 768, %s4263, [#allocation5]
    $region25: #{tpu_custom_call.1} parent=1 // pred_fallthru
      _
    // Predicated region
    $region26: #{tpu_custom_call.1} parent=1 // pred_check
      _
    $region27: #{tpu_custom_call.1} parent=1 // pred_check_branch
      %4267 = sbr.rel (0) target = $region29
    $region28: #{tpu_custom_call.1} parent=1 // pred_region
      %4269 = dma.done [#allocation5], 768
    $region29: #{tpu_custom_call.1} parent=1 // pred_fallthru
      _
    %4270 = vsyncpa [#allocation5], 1

</llo_original>
